<compile_context>
chip_gen: v6e
topology: v6e:2x2x1
jax: 0.10.0
libtpu: 0.0.40
codegen_flags: <defaults>
</compile_context>

<pallas_src>
import jax
import jax.numpy as jnp
from jax.experimental import pallas as pl
from jax.experimental.pallas import tpu as pltpu

# ---- small demo sizes consistent with the module's forward ----
BATCH = 2
SEQ_LEN = 8          # sequence_length (module uses 28; small shape for the demo)
INPUT_SIZE = 28      # input_size
HIDDEN = 128         # hidden_size (module uses 256; small, lane-aligned)
NUM_CLASSES = 10     # num_classes
NUM_LAYERS = 2       # hard-wired 2-layer recurrence below
LANE = 128           # lane-dense padding for the FC output / logits


def rnn_fc_kernel(x_ref, wih0_ref, whh0_ref, b0_ref,
                  wih1_ref, whh1_ref, b1_ref,
                  wfc_ref, bfc_ref, out_ref):
    """Single invocation (no grid): hoisted layer-0 input projection, all T timesteps
    of the 2-layer tanh RNN, and the final Linear accumulated per step, all in VMEM.

      xproj   = x(T*B, D) @ W_ih0 + b0                      (one matmul, off the chain)
      layer 0: h1 = tanh(h1 @ W_hh0 + xproj[t])
      layer 1: h2 = tanh(h2 @ W_hh1 + h1 @ W_ih1 + b1)
      logits += h2 @ W_fc[t]                                 (interleaved FC accumulate)
    """
    TB, _ = x_ref.shape
    T, H, L = wfc_ref.shape
    B = TB // T

    # Hoisted layer-0 input projection for ALL timesteps (bias folded in).
    xproj = jnp.dot(x_ref[...], wih0_ref[...],
                    preferred_element_type=jnp.float32) + b0_ref[...]      # (T*B, H)

    # Hoisted broadcasts (JAX does not CSE broadcast_in_dim inside the unrolled loop).
    b1b = jnp.broadcast_to(b1_ref[...], (B, H))
    logits = jnp.broadcast_to(bfc_ref[...], (B, L))                        # FC bias seed

    h1 = jnp.zeros((B, H), jnp.float32)
    h2 = jnp.zeros((B, H), jnp.float32)

    # Fully-unrolled static loop over time; the recurrence is serial anyway.
    # Weight refs are indexed directly per use (no vreg-resident weight hoists).
    for t in range(T):
        h1 = jnp.tanh(
            jnp.dot(h1, whh0_ref[...], preferred_element_type=jnp.float32)
            + xproj[t * B:(t + 1) * B, :])
        h2 = jnp.tanh(
            jnp.dot(h2, whh1_ref[...], preferred_element_type=jnp.float32)
            + jnp.dot(h1, wih1_ref[...], preferred_element_type=jnp.float32)
            + b1b)
        # FC slice for timestep t, accumulated while the MXU is otherwise idle.
        logits = logits + jnp.dot(h2, wfc_ref[t],
                                  preferred_element_type=jnp.float32)

    out_ref[...] = logits.astype(out_ref.dtype)                # single lane-dense store


def prepare_params(params):
    """One-time parameter prep (run once, NOT per forward call):
    pad the FC weight/bias to 128 lanes and reshape W_fc to (T, H, 128) so the kernel
    can index the per-timestep slice directly."""
    wih0, whh0, b0, wih1, whh1, b1, wfc, bfc = params
    H = whh0.shape[0]
    C = wfc.shape[-1]
    T = wfc.shape[0] // H
    wfc_pad = jnp.zeros((T, H, LANE), jnp.float32).at[:, :, :C].set(
        wfc.reshape(T, H, C))                                   # rows are (t, h) ordered
    bfc_pad = jnp.zeros((1, LANE), jnp.float32).at[:, :C].set(bfc)
    return (wih0, whh0, b0, wih1, whh1, b1, wfc_pad, bfc_pad)


def rnn_forward(x_btd, prepared):
    """x_btd: (B, T, D) float32 (PyTorch batch_first layout). Returns (B, num_classes)."""
    wih0, whh0, b0, wih1, whh1, b1, wfc_pad, bfc_pad = prepared
    B, T, D = x_btd.shape

    # time-major, flattened (t-major, b-minor) so xproj[t*B:(t+1)*B] is timestep t.
    x_flat = jnp.transpose(x_btd, (1, 0, 2)).reshape(T * B, D)

    # Everything (< 1 MiB) whole-array resident in VMEM; no grid, no tiling needed on
    # any generation (v7x 64 MiB VMEM included). For batches >> 8, add a leading
    # "parallel" batch grid axis instead.
    vmem = pl.BlockSpec(memory_space=pltpu.MemorySpace.VMEM)
    out_pad = pl.pallas_call(
        rnn_fc_kernel,
        out_shape=jax.ShapeDtypeStruct((B, LANE), jnp.float32),
        in_specs=[vmem] * 9,
        out_specs=vmem,
    )(x_flat, wih0, whh0, b0, wih1, whh1, b1, wfc_pad, bfc_pad)
    return out_pad[:, :NUM_CLASSES]


def make_params(key):
    """Deterministic init mimicking nn.RNN / nn.Linear uniform(-1/sqrt(fan_in), ...).
    Weights stored transposed (in_features, out_features) for right-multiplication."""
    H, D, T, C = HIDDEN, INPUT_SIZE, SEQ_LEN, NUM_CLASSES
    k = 1.0 / jnp.sqrt(jnp.float32(H))
    keys = jax.random.split(key, 10)
    u = lambda kk, shape: jax.random.uniform(kk, shape, jnp.float32, -k, k)

    wih0 = u(keys[0], (D, H))
    whh0 = u(keys[1], (H, H))
    b0 = u(keys[2], (1, H)) + u(keys[3], (1, H))    # b_ih0 + b_hh0 combined
    wih1 = u(keys[4], (H, H))
    whh1 = u(keys[5], (H, H))
    b1 = u(keys[6], (1, H)) + u(keys[7], (1, H))    # b_ih1 + b_hh1 combined
    kf = 1.0 / jnp.sqrt(jnp.float32(H * T))
    wfc = jax.random.uniform(keys[8], (T * H, C), jnp.float32, -kf, kf)  # rows = (t, h)
    bfc = jax.random.uniform(keys[9], (1, C), jnp.float32, -kf, kf)
    return (wih0, whh0, b0, wih1, whh1, b1, wfc, bfc)


def rnn_reference(x_btd, params):
    """Pure-JAX reference matching nn.RNN(num_layers=2, batch_first=True) + fc."""
    wih0, whh0, b0, wih1, whh1, b1, wfc, bfc = params
    B, T, D = x_btd.shape
    H = wih0.shape[1]
    h1 = jnp.zeros((B, H), jnp.float32)
    h2 = jnp.zeros((B, H), jnp.float32)
    outs = []
    for t in range(T):
        h1 = jnp.tanh(x_btd[:, t] @ wih0 + h1 @ whh0 + b0)
        h2 = jnp.tanh(h1 @ wih1 + h2 @ whh1 + b1)
        outs.append(h2)
    out = jnp.stack(outs, axis=1).reshape(B, -1)            # (B, T*H)
    return out @ wfc + bfc                                  # (B, C)


if __name__ == "__main__":
    key = jax.random.PRNGKey(0)
    kx, kp = jax.random.split(key)
    x = jax.random.normal(kx, (BATCH, SEQ_LEN, INPUT_SIZE), jnp.float32)
    params = make_params(kp)
    prepared = prepare_params(params)   # one-time weight prep (not on the forward path)

    logits = rnn_forward(x, prepared)
    jax.block_until_ready(logits)

    ref = rnn_reference(x, params)
    assert logits.shape == (BATCH, NUM_CLASSES)
    assert jnp.allclose(logits, ref, rtol=1e-4, atol=1e-4), (
        f"mismatch: max abs err {jnp.max(jnp.abs(logits - ref))}"
    )
    print("KERNEL_OK")
</pallas_src>

<mosaic_0001>
module attributes {stable_mosaic.version = 11 : i64} {
  func.func @rnn_fc_kernel(%arg0: memref<16x28xf32, #tpu.memory_space<vmem>>, %arg1: memref<28x128xf32, #tpu.memory_space<vmem>>, %arg2: memref<128x128xf32, #tpu.memory_space<vmem>>, %arg3: memref<1x128xf32, #tpu.memory_space<vmem>>, %arg4: memref<128x128xf32, #tpu.memory_space<vmem>>, %arg5: memref<128x128xf32, #tpu.memory_space<vmem>>, %arg6: memref<1x128xf32, #tpu.memory_space<vmem>>, %arg7: memref<8x128x128xf32, #tpu.memory_space<vmem>>, %arg8: memref<1x128xf32, #tpu.memory_space<vmem>>, %arg9: memref<2x128xf32, #tpu.memory_space<vmem>>) attributes {dimension_semantics = [], scalar_prefetch = 0 : i64, scratch_operands = 0 : i64, tpu.core_type = #tpu.core_type<tc>} {
    %c0 = arith.constant 0 : index
    %c0_0 = arith.constant 0 : index
    %0 = vector.load %arg0[%c0, %c0_0] : memref<16x28xf32, #tpu.memory_space<vmem>>, vector<16x28xf32>
    %c0_1 = arith.constant 0 : index
    %c0_2 = arith.constant 0 : index
    %1 = vector.load %arg1[%c0_1, %c0_2] : memref<28x128xf32, #tpu.memory_space<vmem>>, vector<28x128xf32>
    %cst = arith.constant dense<0.000000e+00> : vector<16x128xf32>
    %2 = tpu.matmul %0, %1, %cst {dimension_numbers = #tpu.dot_dimension_numbers<[1], [0], [0], [1], [0, 0, 1, 1], [], []>} : vector<16x28xf32>, vector<28x128xf32>, vector<16x128xf32> -> vector<16x128xf32>
    %c0_3 = arith.constant 0 : index
    %c0_4 = arith.constant 0 : index
    %3 = vector.load %arg3[%c0_3, %c0_4] : memref<1x128xf32, #tpu.memory_space<vmem>>, vector<1x128xf32>
    %4 = vector.broadcast %3 : vector<1x128xf32> to vector<16x128xf32>
    %5 = arith.addf %2, %4 : vector<16x128xf32>
    %c0_5 = arith.constant 0 : index
    %c0_6 = arith.constant 0 : index
    %6 = vector.load %arg6[%c0_5, %c0_6] : memref<1x128xf32, #tpu.memory_space<vmem>>, vector<1x128xf32>
    %7 = vector.shape_cast %6 : vector<1x128xf32> to vector<1x128xf32>
    %8 = vector.broadcast %7 : vector<1x128xf32> to vector<2x128xf32>
    %c0_7 = arith.constant 0 : index
    %c0_8 = arith.constant 0 : index
    %9 = vector.load %arg8[%c0_7, %c0_8] : memref<1x128xf32, #tpu.memory_space<vmem>>, vector<1x128xf32>
    %10 = vector.shape_cast %9 : vector<1x128xf32> to vector<1x128xf32>
    %11 = vector.broadcast %10 : vector<1x128xf32> to vector<2x128xf32>
    %cst_9 = arith.constant 0.000000e+00 : f32
    %12 = vector.broadcast %cst_9 : f32 to vector<2x128xf32>
    %cst_10 = arith.constant 0.000000e+00 : f32
    %13 = vector.broadcast %cst_10 : f32 to vector<2x128xf32>
    %c0_11 = arith.constant 0 : index
    %c0_12 = arith.constant 0 : index
    %14 = vector.load %arg2[%c0_11, %c0_12] : memref<128x128xf32, #tpu.memory_space<vmem>>, vector<128x128xf32>
    %cst_13 = arith.constant dense<0.000000e+00> : vector<2x128xf32>
    %15 = tpu.matmul %12, %14, %cst_13 {dimension_numbers = #tpu.dot_dimension_numbers<[1], [0], [0], [1], [0, 0, 1, 1], [], []>} : vector<2x128xf32>, vector<128x128xf32>, vector<2x128xf32> -> vector<2x128xf32>
    %16 = vector.extract_strided_slice %5 {offsets = [0, 0], sizes = [2, 128], strides = [1, 1]} : vector<16x128xf32> to vector<2x128xf32>
    %17 = arith.addf %15, %16 : vector<2x128xf32>
    %18 = math.tanh %17 : vector<2x128xf32>
    %c0_14 = arith.constant 0 : index
    %c0_15 = arith.constant 0 : index
    %19 = vector.load %arg5[%c0_14, %c0_15] : memref<128x128xf32, #tpu.memory_space<vmem>>, vector<128x128xf32>
    %cst_16 = arith.constant dense<0.000000e+00> : vector<2x128xf32>
    %20 = tpu.matmul %13, %19, %cst_16 {dimension_numbers = #tpu.dot_dimension_numbers<[1], [0], [0], [1], [0, 0, 1, 1], [], []>} : vector<2x128xf32>, vector<128x128xf32>, vector<2x128xf32> -> vector<2x128xf32>
    %c0_17 = arith.constant 0 : index
    %c0_18 = arith.constant 0 : index
    %21 = vector.load %arg4[%c0_17, %c0_18] : memref<128x128xf32, #tpu.memory_space<vmem>>, vector<128x128xf32>
    %cst_19 = arith.constant dense<0.000000e+00> : vector<2x128xf32>
    %22 = tpu.matmul %18, %21, %cst_19 {dimension_numbers = #tpu.dot_dimension_numbers<[1], [0], [0], [1], [0, 0, 1, 1], [], []>} : vector<2x128xf32>, vector<128x128xf32>, vector<2x128xf32> -> vector<2x128xf32>
    %23 = arith.addf %20, %22 : vector<2x128xf32>
    %24 = arith.addf %23, %8 : vector<2x128xf32>
    %25 = math.tanh %24 : vector<2x128xf32>
    %c0_20 = arith.constant 0 : index
    %c0_21 = arith.constant 0 : index
    %c0_22 = arith.constant 0 : index
    %26 = vector.load %arg7[%c0_20, %c0_21, %c0_22] : memref<8x128x128xf32, #tpu.memory_space<vmem>>, vector<1x128x128xf32>
    %27 = vector.shape_cast %26 : vector<1x128x128xf32> to vector<128x128xf32>
    %cst_23 = arith.constant dense<0.000000e+00> : vector<2x128xf32>
    %28 = tpu.matmul %25, %27, %cst_23 {dimension_numbers = #tpu.dot_dimension_numbers<[1], [0], [0], [1], [0, 0, 1, 1], [], []>} : vector<2x128xf32>, vector<128x128xf32>, vector<2x128xf32> -> vector<2x128xf32>
    %29 = arith.addf %11, %28 : vector<2x128xf32>
    %c0_24 = arith.constant 0 : index
    %c0_25 = arith.constant 0 : index
    %30 = vector.load %arg2[%c0_24, %c0_25] : memref<128x128xf32, #tpu.memory_space<vmem>>, vector<128x128xf32>
    %cst_26 = arith.constant dense<0.000000e+00> : vector<2x128xf32>
    %31 = tpu.matmul %18, %30, %cst_26 {dimension_numbers = #tpu.dot_dimension_numbers<[1], [0], [0], [1], [0, 0, 1, 1], [], []>} : vector<2x128xf32>, vector<128x128xf32>, vector<2x128xf32> -> vector<2x128xf32>
    %32 = vector.extract_strided_slice %5 {offsets = [2, 0], sizes = [2, 128], strides = [1, 1]} : vector<16x128xf32> to vector<2x128xf32>
    %33 = arith.addf %31, %32 : vector<2x128xf32>
    %34 = math.tanh %33 : vector<2x128xf32>
    %c0_27 = arith.constant 0 : index
    %c0_28 = arith.constant 0 : index
    %35 = vector.load %arg5[%c0_27, %c0_28] : memref<128x128xf32, #tpu.memory_space<vmem>>, vector<128x128xf32>
    %cst_29 = arith.constant dense<0.000000e+00> : vector<2x128xf32>
    %36 = tpu.matmul %25, %35, %cst_29 {dimension_numbers = #tpu.dot_dimension_numbers<[1], [0], [0], [1], [0, 0, 1, 1], [], []>} : vector<2x128xf32>, vector<128x128xf32>, vector<2x128xf32> -> vector<2x128xf32>
    %c0_30 = arith.constant 0 : index
    %c0_31 = arith.constant 0 : index
    %37 = vector.load %arg4[%c0_30, %c0_31] : memref<128x128xf32, #tpu.memory_space<vmem>>, vector<128x128xf32>
    %cst_32 = arith.constant dense<0.000000e+00> : vector<2x128xf32>
    %38 = tpu.matmul %34, %37, %cst_32 {dimension_numbers = #tpu.dot_dimension_numbers<[1], [0], [0], [1], [0, 0, 1, 1], [], []>} : vector<2x128xf32>, vector<128x128xf32>, vector<2x128xf32> -> vector<2x128xf32>
    %39 = arith.addf %36, %38 : vector<2x128xf32>
    %40 = arith.addf %39, %8 : vector<2x128xf32>
    %41 = math.tanh %40 : vector<2x128xf32>
    %c1 = arith.constant 1 : index
    %c0_33 = arith.constant 0 : index
    %c0_34 = arith.constant 0 : index
    %42 = vector.load %arg7[%c1, %c0_33, %c0_34] : memref<8x128x128xf32, #tpu.memory_space<vmem>>, vector<1x128x128xf32>
    %43 = vector.shape_cast %42 : vector<1x128x128xf32> to vector<128x128xf32>
    %cst_35 = arith.constant dense<0.000000e+00> : vector<2x128xf32>
    %44 = tpu.matmul %41, %43, %cst_35 {dimension_numbers = #tpu.dot_dimension_numbers<[1], [0], [0], [1], [0, 0, 1, 1], [], []>} : vector<2x128xf32>, vector<128x128xf32>, vector<2x128xf32> -> vector<2x128xf32>
    %45 = arith.addf %29, %44 : vector<2x128xf32>
    %c0_36 = arith.constant 0 : index
    %c0_37 = arith.constant 0 : index
    %46 = vector.load %arg2[%c0_36, %c0_37] : memref<128x128xf32, #tpu.memory_space<vmem>>, vector<128x128xf32>
    %cst_38 = arith.constant dense<0.000000e+00> : vector<2x128xf32>
    %47 = tpu.matmul %34, %46, %cst_38 {dimension_numbers = #tpu.dot_dimension_numbers<[1], [0], [0], [1], [0, 0, 1, 1], [], []>} : vector<2x128xf32>, vector<128x128xf32>, vector<2x128xf32> -> vector<2x128xf32>
    %48 = vector.extract_strided_slice %5 {offsets = [4, 0], sizes = [2, 128], strides = [1, 1]} : vector<16x128xf32> to vector<2x128xf32>
    %49 = arith.addf %47, %48 : vector<2x128xf32>
    %50 = math.tanh %49 : vector<2x128xf32>
    %c0_39 = arith.constant 0 : index
    %c0_40 = arith.constant 0 : index
    %51 = vector.load %arg5[%c0_39, %c0_40] : memref<128x128xf32, #tpu.memory_space<vmem>>, vector<128x128xf32>
    %cst_41 = arith.constant dense<0.000000e+00> : vector<2x128xf32>
    %52 = tpu.matmul %41, %51, %cst_41 {dimension_numbers = #tpu.dot_dimension_numbers<[1], [0], [0], [1], [0, 0, 1, 1], [], []>} : vector<2x128xf32>, vector<128x128xf32>, vector<2x128xf32> -> vector<2x128xf32>
    %c0_42 = arith.constant 0 : index
    %c0_43 = arith.constant 0 : index
    %53 = vector.load %arg4[%c0_42, %c0_43] : memref<128x128xf32, #tpu.memory_space<vmem>>, vector<128x128xf32>
    %cst_44 = arith.constant dense<0.000000e+00> : vector<2x128xf32>
    %54 = tpu.matmul %50, %53, %cst_44 {dimension_numbers = #tpu.dot_dimension_numbers<[1], [0], [0], [1], [0, 0, 1, 1], [], []>} : vector<2x128xf32>, vector<128x128xf32>, vector<2x128xf32> -> vector<2x128xf32>
    %55 = arith.addf %52, %54 : vector<2x128xf32>
    %56 = arith.addf %55, %8 : vector<2x128xf32>
    %57 = math.tanh %56 : vector<2x128xf32>
    %c2 = arith.constant 2 : index
    %c0_45 = arith.constant 0 : index
    %c0_46 = arith.constant 0 : index
    %58 = vector.load %arg7[%c2, %c0_45, %c0_46] : memref<8x128x128xf32, #tpu.memory_space<vmem>>, vector<1x128x128xf32>
    %59 = vector.shape_cast %58 : vector<1x128x128xf32> to vector<128x128xf32>
    %cst_47 = arith.constant dense<0.000000e+00> : vector<2x128xf32>
    %60 = tpu.matmul %57, %59, %cst_47 {dimension_numbers = #tpu.dot_dimension_numbers<[1], [0], [0], [1], [0, 0, 1, 1], [], []>} : vector<2x128xf32>, vector<128x128xf32>, vector<2x128xf32> -> vector<2x128xf32>
    %61 = arith.addf %45, %60 : vector<2x128xf32>
    %c0_48 = arith.constant 0 : index
    %c0_49 = arith.constant 0 : index
    %62 = vector.load %arg2[%c0_48, %c0_49] : memref<128x128xf32, #tpu.memory_space<vmem>>, vector<128x128xf32>
    %cst_50 = arith.constant dense<0.000000e+00> : vector<2x128xf32>
    %63 = tpu.matmul %50, %62, %cst_50 {dimension_numbers = #tpu.dot_dimension_numbers<[1], [0], [0], [1], [0, 0, 1, 1], [], []>} : vector<2x128xf32>, vector<128x128xf32>, vector<2x128xf32> -> vector<2x128xf32>
    %64 = vector.extract_strided_slice %5 {offsets = [6, 0], sizes = [2, 128], strides = [1, 1]} : vector<16x128xf32> to vector<2x128xf32>
    %65 = arith.addf %63, %64 : vector<2x128xf32>
    %66 = math.tanh %65 : vector<2x128xf32>
    %c0_51 = arith.constant 0 : index
    %c0_52 = arith.constant 0 : index
    %67 = vector.load %arg5[%c0_51, %c0_52] : memref<128x128xf32, #tpu.memory_space<vmem>>, vector<128x128xf32>
    %cst_53 = arith.constant dense<0.000000e+00> : vector<2x128xf32>
    %68 = tpu.matmul %57, %67, %cst_53 {dimension_numbers = #tpu.dot_dimension_numbers<[1], [0], [0], [1], [0, 0, 1, 1], [], []>} : vector<2x128xf32>, vector<128x128xf32>, vector<2x128xf32> -> vector<2x128xf32>
    %c0_54 = arith.constant 0 : index
    %c0_55 = arith.constant 0 : index
    %69 = vector.load %arg4[%c0_54, %c0_55] : memref<128x128xf32, #tpu.memory_space<vmem>>, vector<128x128xf32>
    %cst_56 = arith.constant dense<0.000000e+00> : vector<2x128xf32>
    %70 = tpu.matmul %66, %69, %cst_56 {dimension_numbers = #tpu.dot_dimension_numbers<[1], [0], [0], [1], [0, 0, 1, 1], [], []>} : vector<2x128xf32>, vector<128x128xf32>, vector<2x128xf32> -> vector<2x128xf32>
    %71 = arith.addf %68, %70 : vector<2x128xf32>
    %72 = arith.addf %71, %8 : vector<2x128xf32>
    %73 = math.tanh %72 : vector<2x128xf32>
    %c3 = arith.constant 3 : index
    %c0_57 = arith.constant 0 : index
    %c0_58 = arith.constant 0 : index
    %74 = vector.load %arg7[%c3, %c0_57, %c0_58] : memref<8x128x128xf32, #tpu.memory_space<vmem>>, vector<1x128x128xf32>
    %75 = vector.shape_cast %74 : vector<1x128x128xf32> to vector<128x128xf32>
    %cst_59 = arith.constant dense<0.000000e+00> : vector<2x128xf32>
    %76 = tpu.matmul %73, %75, %cst_59 {dimension_numbers = #tpu.dot_dimension_numbers<[1], [0], [0], [1], [0, 0, 1, 1], [], []>} : vector<2x128xf32>, vector<128x128xf32>, vector<2x128xf32> -> vector<2x128xf32>
    %77 = arith.addf %61, %76 : vector<2x128xf32>
    %c0_60 = arith.constant 0 : index
    %c0_61 = arith.constant 0 : index
    %78 = vector.load %arg2[%c0_60, %c0_61] : memref<128x128xf32, #tpu.memory_space<vmem>>, vector<128x128xf32>
    %cst_62 = arith.constant dense<0.000000e+00> : vector<2x128xf32>
    %79 = tpu.matmul %66, %78, %cst_62 {dimension_numbers = #tpu.dot_dimension_numbers<[1], [0], [0], [1], [0, 0, 1, 1], [], []>} : vector<2x128xf32>, vector<128x128xf32>, vector<2x128xf32> -> vector<2x128xf32>
    %80 = vector.extract_strided_slice %5 {offsets = [8, 0], sizes = [2, 128], strides = [1, 1]} : vector<16x128xf32> to vector<2x128xf32>
    %81 = arith.addf %79, %80 : vector<2x128xf32>
    %82 = math.tanh %81 : vector<2x128xf32>
    %c0_63 = arith.constant 0 : index
    %c0_64 = arith.constant 0 : index
    %83 = vector.load %arg5[%c0_63, %c0_64] : memref<128x128xf32, #tpu.memory_space<vmem>>, vector<128x128xf32>
    %cst_65 = arith.constant dense<0.000000e+00> : vector<2x128xf32>
    %84 = tpu.matmul %73, %83, %cst_65 {dimension_numbers = #tpu.dot_dimension_numbers<[1], [0], [0], [1], [0, 0, 1, 1], [], []>} : vector<2x128xf32>, vector<128x128xf32>, vector<2x128xf32> -> vector<2x128xf32>
    %c0_66 = arith.constant 0 : index
    %c0_67 = arith.constant 0 : index
    %85 = vector.load %arg4[%c0_66, %c0_67] : memref<128x128xf32, #tpu.memory_space<vmem>>, vector<128x128xf32>
    %cst_68 = arith.constant dense<0.000000e+00> : vector<2x128xf32>
    %86 = tpu.matmul %82, %85, %cst_68 {dimension_numbers = #tpu.dot_dimension_numbers<[1], [0], [0], [1], [0, 0, 1, 1], [], []>} : vector<2x128xf32>, vector<128x128xf32>, vector<2x128xf32> -> vector<2x128xf32>
    %87 = arith.addf %84, %86 : vector<2x128xf32>
    %88 = arith.addf %87, %8 : vector<2x128xf32>
    %89 = math.tanh %88 : vector<2x128xf32>
    %c4 = arith.constant 4 : index
    %c0_69 = arith.constant 0 : index
    %c0_70 = arith.constant 0 : index
    %90 = vector.load %arg7[%c4, %c0_69, %c0_70] : memref<8x128x128xf32, #tpu.memory_space<vmem>>, vector<1x128x128xf32>
    %91 = vector.shape_cast %90 : vector<1x128x128xf32> to vector<128x128xf32>
    %cst_71 = arith.constant dense<0.000000e+00> : vector<2x128xf32>
    %92 = tpu.matmul %89, %91, %cst_71 {dimension_numbers = #tpu.dot_dimension_numbers<[1], [0], [0], [1], [0, 0, 1, 1], [], []>} : vector<2x128xf32>, vector<128x128xf32>, vector<2x128xf32> -> vector<2x128xf32>
    %93 = arith.addf %77, %92 : vector<2x128xf32>
    %c0_72 = arith.constant 0 : index
    %c0_73 = arith.constant 0 : index
    %94 = vector.load %arg2[%c0_72, %c0_73] : memref<128x128xf32, #tpu.memory_space<vmem>>, vector<128x128xf32>
    %cst_74 = arith.constant dense<0.000000e+00> : vector<2x128xf32>
    %95 = tpu.matmul %82, %94, %cst_74 {dimension_numbers = #tpu.dot_dimension_numbers<[1], [0], [0], [1], [0, 0, 1, 1], [], []>} : vector<2x128xf32>, vector<128x128xf32>, vector<2x128xf32> -> vector<2x128xf32>
    %96 = vector.extract_strided_slice %5 {offsets = [10, 0], sizes = [2, 128], strides = [1, 1]} : vector<16x128xf32> to vector<2x128xf32>
    %97 = arith.addf %95, %96 : vector<2x128xf32>
    %98 = math.tanh %97 : vector<2x128xf32>
    %c0_75 = arith.constant 0 : index
    %c0_76 = arith.constant 0 : index
    %99 = vector.load %arg5[%c0_75, %c0_76] : memref<128x128xf32, #tpu.memory_space<vmem>>, vector<128x128xf32>
    %cst_77 = arith.constant dense<0.000000e+00> : vector<2x128xf32>
    %100 = tpu.matmul %89, %99, %cst_77 {dimension_numbers = #tpu.dot_dimension_numbers<[1], [0], [0], [1], [0, 0, 1, 1], [], []>} : vector<2x128xf32>, vector<128x128xf32>, vector<2x128xf32> -> vector<2x128xf32>
    %c0_78 = arith.constant 0 : index
    %c0_79 = arith.constant 0 : index
    %101 = vector.load %arg4[%c0_78, %c0_79] : memref<128x128xf32, #tpu.memory_space<vmem>>, vector<128x128xf32>
    %cst_80 = arith.constant dense<0.000000e+00> : vector<2x128xf32>
    %102 = tpu.matmul %98, %101, %cst_80 {dimension_numbers = #tpu.dot_dimension_numbers<[1], [0], [0], [1], [0, 0, 1, 1], [], []>} : vector<2x128xf32>, vector<128x128xf32>, vector<2x128xf32> -> vector<2x128xf32>
    %103 = arith.addf %100, %102 : vector<2x128xf32>
    %104 = arith.addf %103, %8 : vector<2x128xf32>
    %105 = math.tanh %104 : vector<2x128xf32>
    %c5 = arith.constant 5 : index
    %c0_81 = arith.constant 0 : index
    %c0_82 = arith.constant 0 : index
    %106 = vector.load %arg7[%c5, %c0_81, %c0_82] : memref<8x128x128xf32, #tpu.memory_space<vmem>>, vector<1x128x128xf32>
    %107 = vector.shape_cast %106 : vector<1x128x128xf32> to vector<128x128xf32>
    %cst_83 = arith.constant dense<0.000000e+00> : vector<2x128xf32>
    %108 = tpu.matmul %105, %107, %cst_83 {dimension_numbers = #tpu.dot_dimension_numbers<[1], [0], [0], [1], [0, 0, 1, 1], [], []>} : vector<2x128xf32>, vector<128x128xf32>, vector<2x128xf32> -> vector<2x128xf32>
    %109 = arith.addf %93, %108 : vector<2x128xf32>
    %c0_84 = arith.constant 0 : index
    %c0_85 = arith.constant 0 : index
    %110 = vector.load %arg2[%c0_84, %c0_85] : memref<128x128xf32, #tpu.memory_space<vmem>>, vector<128x128xf32>
    %cst_86 = arith.constant dense<0.000000e+00> : vector<2x128xf32>
    %111 = tpu.matmul %98, %110, %cst_86 {dimension_numbers = #tpu.dot_dimension_numbers<[1], [0], [0], [1], [0, 0, 1, 1], [], []>} : vector<2x128xf32>, vector<128x128xf32>, vector<2x128xf32> -> vector<2x128xf32>
    %112 = vector.extract_strided_slice %5 {offsets = [12, 0], sizes = [2, 128], strides = [1, 1]} : vector<16x128xf32> to vector<2x128xf32>
    %113 = arith.addf %111, %112 : vector<2x128xf32>
    %114 = math.tanh %113 : vector<2x128xf32>
    %c0_87 = arith.constant 0 : index
    %c0_88 = arith.constant 0 : index
    %115 = vector.load %arg5[%c0_87, %c0_88] : memref<128x128xf32, #tpu.memory_space<vmem>>, vector<128x128xf32>
    %cst_89 = arith.constant dense<0.000000e+00> : vector<2x128xf32>
    %116 = tpu.matmul %105, %115, %cst_89 {dimension_numbers = #tpu.dot_dimension_numbers<[1], [0], [0], [1], [0, 0, 1, 1], [], []>} : vector<2x128xf32>, vector<128x128xf32>, vector<2x128xf32> -> vector<2x128xf32>
    %c0_90 = arith.constant 0 : index
    %c0_91 = arith.constant 0 : index
    %117 = vector.load %arg4[%c0_90, %c0_91] : memref<128x128xf32, #tpu.memory_space<vmem>>, vector<128x128xf32>
    %cst_92 = arith.constant dense<0.000000e+00> : vector<2x128xf32>
    %118 = tpu.matmul %114, %117, %cst_92 {dimension_numbers = #tpu.dot_dimension_numbers<[1], [0], [0], [1], [0, 0, 1, 1], [], []>} : vector<2x128xf32>, vector<128x128xf32>, vector<2x128xf32> -> vector<2x128xf32>
    %119 = arith.addf %116, %118 : vector<2x128xf32>
    %120 = arith.addf %119, %8 : vector<2x128xf32>
    %121 = math.tanh %120 : vector<2x128xf32>
    %c6 = arith.constant 6 : index
    %c0_93 = arith.constant 0 : index
    %c0_94 = arith.constant 0 : index
    %122 = vector.load %arg7[%c6, %c0_93, %c0_94] : memref<8x128x128xf32, #tpu.memory_space<vmem>>, vector<1x128x128xf32>
    %123 = vector.shape_cast %122 : vector<1x128x128xf32> to vector<128x128xf32>
    %cst_95 = arith.constant dense<0.000000e+00> : vector<2x128xf32>
    %124 = tpu.matmul %121, %123, %cst_95 {dimension_numbers = #tpu.dot_dimension_numbers<[1], [0], [0], [1], [0, 0, 1, 1], [], []>} : vector<2x128xf32>, vector<128x128xf32>, vector<2x128xf32> -> vector<2x128xf32>
    %125 = arith.addf %109, %124 : vector<2x128xf32>
    %c0_96 = arith.constant 0 : index
    %c0_97 = arith.constant 0 : index
    %126 = vector.load %arg2[%c0_96, %c0_97] : memref<128x128xf32, #tpu.memory_space<vmem>>, vector<128x128xf32>
    %cst_98 = arith.constant dense<0.000000e+00> : vector<2x128xf32>
    %127 = tpu.matmul %114, %126, %cst_98 {dimension_numbers = #tpu.dot_dimension_numbers<[1], [0], [0], [1], [0, 0, 1, 1], [], []>} : vector<2x128xf32>, vector<128x128xf32>, vector<2x128xf32> -> vector<2x128xf32>
    %128 = vector.extract_strided_slice %5 {offsets = [14, 0], sizes = [2, 128], strides = [1, 1]} : vector<16x128xf32> to vector<2x128xf32>
    %129 = arith.addf %127, %128 : vector<2x128xf32>
    %130 = math.tanh %129 : vector<2x128xf32>
    %c0_99 = arith.constant 0 : index
    %c0_100 = arith.constant 0 : index
    %131 = vector.load %arg5[%c0_99, %c0_100] : memref<128x128xf32, #tpu.memory_space<vmem>>, vector<128x128xf32>
    %cst_101 = arith.constant dense<0.000000e+00> : vector<2x128xf32>
    %132 = tpu.matmul %121, %131, %cst_101 {dimension_numbers = #tpu.dot_dimension_numbers<[1], [0], [0], [1], [0, 0, 1, 1], [], []>} : vector<2x128xf32>, vector<128x128xf32>, vector<2x128xf32> -> vector<2x128xf32>
    %c0_102 = arith.constant 0 : index
    %c0_103 = arith.constant 0 : index
    %133 = vector.load %arg4[%c0_102, %c0_103] : memref<128x128xf32, #tpu.memory_space<vmem>>, vector<128x128xf32>
    %cst_104 = arith.constant dense<0.000000e+00> : vector<2x128xf32>
    %134 = tpu.matmul %130, %133, %cst_104 {dimension_numbers = #tpu.dot_dimension_numbers<[1], [0], [0], [1], [0, 0, 1, 1], [], []>} : vector<2x128xf32>, vector<128x128xf32>, vector<2x128xf32> -> vector<2x128xf32>
    %135 = arith.addf %132, %134 : vector<2x128xf32>
    %136 = arith.addf %135, %8 : vector<2x128xf32>
    %137 = math.tanh %136 : vector<2x128xf32>
    %c7 = arith.constant 7 : index
    %c0_105 = arith.constant 0 : index
    %c0_106 = arith.constant 0 : index
    %138 = vector.load %arg7[%c7, %c0_105, %c0_106] : memref<8x128x128xf32, #tpu.memory_space<vmem>>, vector<1x128x128xf32>
    %139 = vector.shape_cast %138 : vector<1x128x128xf32> to vector<128x128xf32>
    %cst_107 = arith.constant dense<0.000000e+00> : vector<2x128xf32>
    %140 = tpu.matmul %137, %139, %cst_107 {dimension_numbers = #tpu.dot_dimension_numbers<[1], [0], [0], [1], [0, 0, 1, 1], [], []>} : vector<2x128xf32>, vector<128x128xf32>, vector<2x128xf32> -> vector<2x128xf32>
    %141 = arith.addf %125, %140 : vector<2x128xf32>
    %c0_108 = arith.constant 0 : index
    %c0_109 = arith.constant 0 : index
    %142 = vector.load %arg9[%c0_108, %c0_109] : memref<2x128xf32, #tpu.memory_space<vmem>>, vector<2x128xf32>
    tpu.vector_store %arg9[%c0_108, %c0_109], %141 {strides = array<i32>} : memref<2x128xf32, #tpu.memory_space<vmem>>, vector<2x128xf32>,
    return
  }
}

</mosaic_0001>

<llo_original>
// kernel: tpu_custom_call.1
$region0: #{tpu_custom_call.1}
  #allocation0 [shape = 'u32[]', space=smem, size = 0x4, offset = 0x4, fixed_abs, tag = 'smem constant byte address 0x4 - core index']
  #allocation1 [shape = 'u32[144,128]{1,0:T(1,128)}', space=vmem, size = 0x12000, scoped, tag = 'internal scratch']
  %s0 = inlined_call_operand.hbm [shape: f32[16,28], index: 0, kind: input, shape index: {}]
  %s1 = inlined_call_operand.hbm [shape: f32[28,128], index: 1, kind: input, shape index: {}]
  %s2 = inlined_call_operand.hbm [shape: f32[128,128], index: 2, kind: input, shape index: {}]
  %s3 = inlined_call_operand.vmem [shape: f32[1,128], index: 3, kind: input, shape index: {}]
  %s4 = inlined_call_operand.hbm [shape: f32[128,128], index: 4, kind: input, shape index: {}]
  %s5 = inlined_call_operand.hbm [shape: f32[128,128], index: 5, kind: input, shape index: {}]
  %s6 = inlined_call_operand.vmem [shape: f32[1,128], index: 6, kind: input, shape index: {}]
  %s7 = inlined_call_operand.hbm [shape: f32[8,128,128], index: 7, kind: input, shape index: {}]
  %s8 = inlined_call_operand.vmem [shape: f32[1,128], index: 8, kind: input, shape index: {}]
  %s9 = inlined_call_operand.hbm [shape: f32[2,128], index: 9, kind: output, shape index: {}]
  %s10 = sld [smem:[#allocation0]]
  $region70: #{tpu_custom_call.1} parent=0
    _
  %s12 = ssub.s32 1, %s10
  %s13 = scalar_select 0, %s12, %s10
  $region1: #{tpu_custom_call.1} parent=0
    #allocation2 [shape = 'u8[8192]{0}', space=vmem, size = 0x2000, scoped, tag = 'input window, operand 0, single buffered']
    #allocation3 [shape = 's32[1]{0}', space=sflag, size = 0x4, scoped, tag = 'scoped memory for tpu_custom_call.1']
    #allocation4 [shape = 's32[1]{0}', space=sflag, size = 0x4, scoped, tag = 'scoped memory for tpu_custom_call.1']
    #allocation5 [shape = 'u8[16384]{0}', space=vmem, size = 0x4000, scoped, tag = 'input window, operand 1, single buffered']
    #allocation6 [shape = 's32[1]{0}', space=sflag, size = 0x4, scoped, tag = 'scoped memory for tpu_custom_call.1']
    #allocation7 [shape = 'u8[65536]{0}', space=vmem, size = 0x10000, scoped, tag = 'input window, operand 2, single buffered']
    #allocation8 [shape = 'u8[65536]{0}', space=vmem, size = 0x10000, scoped, tag = 'input window, operand 4, single buffered']
    #allocation9 [shape = 's32[1]{0}', space=sflag, size = 0x4, scoped, tag = 'scoped memory for tpu_custom_call.1']
    #allocation10 [shape = 'u8[65536]{0}', space=vmem, size = 0x10000, scoped, tag = 'input window, operand 5, single buffered']
    #allocation11 [shape = 'u8[524288]{0}', space=vmem, size = 0x80000, scoped, tag = 'input window, operand 7, single buffered']
    #allocation12 [shape = 's32[1]{0}', space=sflag, size = 0x4, scoped, tag = 'scoped memory for tpu_custom_call.1']
    #allocation13 [shape = 'u8[1024]{0}', space=vmem, size = 0x400, scoped, tag = 'output window, operand 0, single buffered']
    %14 = vsyncpa [#allocation3], 0
    %15 = vsyncpa [#allocation6], 0
    %16 = vsyncpa [#allocation9], 0
    %17 = vsyncpa [#allocation12], 0
    %18 = vsyncpa [#allocation4], 0
    // Predicated region
    $region2: #{tpu_custom_call.1} parent=1 // pred_check
      _
    $region3: #{tpu_custom_call.1} parent=1 // pred_check_branch
      %20 = sbr.rel (0) target = $region5
    $region4: #{tpu_custom_call.1} parent=1 // pred_region
      %s22 = ssub.s32 256, 256
      %23 = vsyncadd [#allocation3], %s22
      %s24 = sshll.u32 [#allocation2], 4
      %s25 = int_to_ptr.vmem [resolvable:$true] %s24
      %30 = dma.hbm_to_vmem [thread:$0]  %s0, 256, %s25, [#allocation3], 128, 128, 8
    $region5: #{tpu_custom_call.1} parent=1 // pred_fallthru
      _
    // Predicated region
    $region6: #{tpu_custom_call.1} parent=1 // pred_check
      _
    $region7: #{tpu_custom_call.1} parent=1 // pred_check_branch
      %32 = sbr.rel (0) target = $region9
    $region8: #{tpu_custom_call.1} parent=1 // pred_region
      %s34 = ssub.s32 512, 512
      %35 = vsyncadd [#allocation6], %s34
      %s36 = sshll.u32 [#allocation5], 4
      %s37 = int_to_ptr.vmem [resolvable:$true] %s36
      %42 = dma.hbm_to_vmem [thread:$0]  %s1, 512, %s37, [#allocation6], 128, 128, 8
    $region9: #{tpu_custom_call.1} parent=1 // pred_fallthru
      _
    // Predicated region
    $region10: #{tpu_custom_call.1} parent=1 // pred_check
      _
    $region11: #{tpu_custom_call.1} parent=1 // pred_check_branch
      %44 = sbr.rel (0) target = $region13
    $region12: #{tpu_custom_call.1} parent=1 // pred_region
      %s46 = ssub.s32 2048, 2048
      %47 = vsyncadd [#allocation6], %s46
      %s48 = sshll.u32 [#allocation7], 4
      %s49 = int_to_ptr.vmem [resolvable:$true] %s48
      %54 = dma.hbm_to_vmem [thread:$0]  %s2, 2048, %s49, [#allocation6], 128, 128, 8
    $region13: #{tpu_custom_call.1} parent=1 // pred_fallthru
      _
    // Predicated region
    $region14: #{tpu_custom_call.1} parent=1 // pred_check
      _
    $region15: #{tpu_custom_call.1} parent=1 // pred_check_branch
      %56 = sbr.rel (0) target = $region17
    $region16: #{tpu_custom_call.1} parent=1 // pred_region
      _
    $region17: #{tpu_custom_call.1} parent=1 // pred_fallthru
      _
    // Predicated region
    $region18: #{tpu_custom_call.1} parent=1 // pred_check
      _
    $region19: #{tpu_custom_call.1} parent=1 // pred_check_branch
      %58 = sbr.rel (0) target = $region21
    $region20: #{tpu_custom_call.1} parent=1 // pred_region
      %s60 = ssub.s32 2048, 2048
      %61 = vsyncadd [#allocation9], %s60
      %s62 = sshll.u32 [#allocation8], 4
      %s63 = int_to_ptr.vmem [resolvable:$true] %s62
      %68 = dma.hbm_to_vmem [thread:$0]  %s4, 2048, %s63, [#allocation9], 128, 128, 8
    $region21: #{tpu_custom_call.1} parent=1 // pred_fallthru
      _
    // Predicated region
    $region22: #{tpu_custom_call.1} parent=1 // pred_check
      _
    $region23: #{tpu_custom_call.1} parent=1 // pred_check_branch
      %70 = sbr.rel (0) target = $region25
    $region24: #{tpu_custom_call.1} parent=1 // pred_region
      %s72 = ssub.s32 2048, 2048
      %73 = vsyncadd [#allocation9], %s72
      %s74 = sshll.u32 [#allocation10], 4
      %s75 = int_to_ptr.vmem [resolvable:$true] %s74
      %80 = dma.hbm_to_vmem [thread:$0]  %s5, 2048, %s75, [#allocation9], 128, 128, 8
    $region25: #{tpu_custom_call.1} parent=1 // pred_fallthru
      _
    // Predicated region
    $region26: #{tpu_custom_call.1} parent=1 // pred_check
      _
    $region27: #{tpu_custom_call.1} parent=1 // pred_check_branch
      %82 = sbr.rel (0) target = $region29
    $region28: #{tpu_custom_call.1} parent=1 // pred_region
      _
    $region29: #{tpu_custom_call.1} parent=1 // pred_fallthru
      _
    // Predicated region
    $region30: #{tpu_custom_call.1} parent=1 // pred_check
      _
    $region31: #{tpu_custom_call.1} parent=1 // pred_check_branch
      %84 = sbr.rel (0) target = $region33
    $region32: #{tpu_custom_call.1} parent=1 // pred_region
      %s86 = ssub.s32 16384, 16384
      %87 = vsyncadd [#allocation12], %s86
      %s88 = sshll.u32 [#allocation11], 4
      %s89 = int_to_ptr.vmem [resolvable:$true] %s88
      %94 = dma.hbm_to_vmem [thread:$0]  %s7, 16384, %s89, [#allocation12], 128, 128, 8
    $region33: #{tpu_custom_call.1} parent=1 // pred_fallthru
      _
    // Predicated region
    $region34: #{tpu_custom_call.1} parent=1 // pred_check
      _
    $region35: #{tpu_custom_call.1} parent=1 // pred_check_branch
      %96 = sbr.rel (0) target = $region37
    $region36: #{tpu_custom_call.1} parent=1 // pred_region
      _
    $region37: #{tpu_custom_call.1} parent=1 // pred_fallthru
      _
    // Predicated region
    $region38: #{tpu_custom_call.1} parent=1 // pred_check
      _
    $region39: #{tpu_custom_call.1} parent=1 // pred_check_branch
      %98 = sbr.rel (0) target = $region41
    $region40: #{tpu_custom_call.1} parent=1 // pred_region
      %99 = dma.done [#allocation3], 256
    $region41: #{tpu_custom_call.1} parent=1 // pred_fallthru
      _
    // Predicated region
    $region42: #{tpu_custom_call.1} parent=1 // pred_check
      _
    $region43: #{tpu_custom_call.1} parent=1 // pred_check_branch
      %101 = sbr.rel (0) target = $region45
    $region44: #{tpu_custom_call.1} parent=1 // pred_region
      %102 = dma.done [#allocation6], 512
    $region45: #{tpu_custom_call.1} parent=1 // pred_fallthru
      _
    // Predicated region
    $region46: #{tpu_custom_call.1} parent=1 // pred_check
      _
    $region47: #{tpu_custom_call.1} parent=1 // pred_check_branch
      %104 = sbr.rel (0) target = $region49
    $region48: #{tpu_custom_call.1} parent=1 // pred_region
      %105 = dma.done [#allocation6], 2048
    $region49: #{tpu_custom_call.1} parent=1 // pred_fallthru
      _
    // Predicated region
    $region50: #{tpu_custom_call.1} parent=1 // pred_check
      _
    $region51: #{tpu_custom_call.1} parent=1 // pred_check_branch
      %107 = sbr.rel (0) target = $region53
    $region52: #{tpu_custom_call.1} parent=1 // pred_region
      %108 = dma.done [#allocation9], 2048
    $region53: #{tpu_custom_call.1} parent=1 // pred_fallthru
      _
    // Predicated region
    $region54: #{tpu_custom_call.1} parent=1 // pred_check
      _
    $region55: #{tpu_custom_call.1} parent=1 // pred_check_branch
      %110 = sbr.rel (0) target = $region57
    $region56: #{tpu_custom_call.1} parent=1 // pred_region
      %111 = dma.done [#allocation9], 2048
    $region57: #{tpu_custom_call.1} parent=1 // pred_fallthru
      _
    // Predicated region
    $region58: #{tpu_custom_call.1} parent=1 // pred_check
      _
    $region59: #{tpu_custom_call.1} parent=1 // pred_check_branch
      %113 = sbr.rel (0) target = $region61
    $region60: #{tpu_custom_call.1} parent=1 // pred_region
      %114 = dma.done [#allocation12], 16384
    $region61: #{tpu_custom_call.1} parent=1 // pred_fallthru
      _
    %v115 = vld [vmem:[#allocation2] sm:$0xff]
    %v116 = vld [vmem:[#allocation2 + $0x8] sm:$0xff]
    %v117 = vld [vmem:[#allocation5] sm:$0xff]
    %v118 = vld [vmem:[#allocation5 + $0x8] sm:$0xff]
    %v119 = vld [vmem:[#allocation5 + $0x10] sm:$0xff]
    %v120 = vld [vmem:[#allocation5 + $0x18] sm:$0xf]
    %v121 = vld [vmem:[%s3] sm:$0x1]
    %v123 = vlaneseq
    %v124 = vshrl.u32 %v123, 7
    %v125 = vsub.s32 0, %v124
    %v126 = vrot.slane %v121, %v125
    %vm128 = vcmask 228352
    %v130 = vsel %vm128, %v115, 0
    %v133 = vsel %vm128, %v116, 0
    %vm135 = vcmask 1043456
    %v137 = vsel %vm135, %v120, 0
    %139 = vmatprep.subr.mxu0 0.0
    %140 = vmatpush1.msra.mxu0 0.0
    %141 = vmatprep.subr.mxu0 0.0
    %142 = vmatpush1.msra.mxu0 0.0
    %143 = vmatprep.subr.mxu0 0.0
    %144 = vmatpush1.msra.mxu0 0.0
    %145 = vmatprep.subr.mxu0 0.0
    %146 = vmatpush1.msra.mxu0 0.0
    %147 = vmatprep.subr.mxu0 0.0
    %148 = vmatpush1.msra.mxu0 0.0
    %149 = vmatprep.subr.mxu0 0.0
    %150 = vmatpush1.msra.mxu0 0.0
    %151 = vmatprep.subr.mxu0 0.0
    %152 = vmatpush1.msra.mxu0 0.0
    %153 = vmatprep.subr.mxu0 0.0
    %154 = vmatpush1.msra.mxu0 0.0
    %155 = vmatprep.subr.mxu0 0.0
    %156 = vmatpush1.msra.mxu0 0.0
    %157 = vmatprep.subr.mxu0 0.0
    %158 = vmatpush1.msra.mxu0 0.0
    %159 = vmatprep.subr.mxu0 0.0
    %160 = vmatpush1.msra.mxu0 0.0
    %161 = vmatprep.subr.mxu0 0.0
    %162 = vmatpush1.msra.mxu0 0.0
    %163 = vmatprep.subr.mxu0 0.0
    %164 = vmatpush1.msra.mxu0 %v137
    %165 = vmatprep.subr.mxu0 0.0
    %166 = vmatpush1.msra.mxu0 %v119
    %167 = vmatprep.subr.mxu0 0.0
    %168 = vmatpush1.msra.mxu0 %v118
    %169 = vmatprep.subr.mxu0 0.0
    %170 = vmatpush1.msra.mxu0 %v117
    %171 = vmatprep.subr.mxu0 0.0
    %172 = vmatpush2.msra.mxu0 0.0
    %173 = vmatprep.subr.mxu0 0.0
    %174 = vmatpush2.msra.mxu0 0.0
    %175 = vmatprep.subr.mxu0 0.0
    %176 = vmatpush2.msra.mxu0 0.0
    %177 = vmatprep.subr.mxu0 0.0
    %178 = vmatpush2.msra.mxu0 0.0
    %179 = vmatprep.subr.mxu0 0.0
    %180 = vmatpush2.msra.mxu0 0.0
    %181 = vmatprep.subr.mxu0 0.0
    %182 = vmatpush2.msra.mxu0 0.0
    %183 = vmatprep.subr.mxu0 0.0
    %184 = vmatpush2.msra.mxu0 0.0
    %185 = vmatprep.subr.mxu0 0.0
    %186 = vmatpush2.msra.mxu0 0.0
    %187 = vmatprep.subr.mxu0 0.0
    %188 = vmatpush2.msra.mxu0 0.0
    %189 = vmatprep.subr.mxu0 0.0
    %190 = vmatpush2.msra.mxu0 0.0
    %191 = vmatprep.subr.mxu0 0.0
    %192 = vmatpush2.msra.mxu0 0.0
    %193 = vmatprep.subr.mxu0 0.0
    %194 = vmatpush2.msra.mxu0 0.0
    %195 = vmatprep.subr.mxu0 0.0
    %196 = vmatpush2.msra.mxu0 0.0
    %197 = vmatprep.subr.mxu0 0.0
    %198 = vmatpush2.msra.mxu0 0.0
    %199 = vmatprep.subr.mxu0 0.0
    %200 = vmatpush2.msra.mxu0 0.0
    %201 = vmatprep.subr.mxu0 0.0
    %202 = vmatpush2.msra.mxu0 0.0
    %203 = vmatprep.mubr.f32.mxu0 0.0
    %204 = vmatmul.mubr.f32.gmra.mxu0 %v130
    %v205 = vpop.f32.mrf.mxu0
    %v206 = vadd.f32 %v126, %v205
    %v207 = vpop.f32.mrf.mxu0
    %208 = vmatprep.mubr.f32.mxu0 0.0
    %209 = vmatmul.mubr.f32.gmra.mxu0 %v133
    %v210 = vpop.f32.mrf.mxu0
    %v211 = vadd.f32 %v126, %v210
    %v212 = vpop.f32.mrf.mxu0
    %213 = vdwg.mxu0
    %v214 = vld [vmem:[%s6] sm:$0x1]
    %v216 = vlaneseq
    %v217 = vshrl.u32 %v216, 7
    %v218 = vsub.s32 0, %v217
    %v219 = vrot.slane %v214, %v218
    %v221 = vld [vmem:[%s8] sm:$0x1]
    %v223 = vlaneseq
    %v224 = vshrl.u32 %v223, 7
    %v225 = vsub.s32 0, %v224
    %v226 = vrot.slane %v221, %v225
    %v228 = vld [vmem:[#allocation7] sm:$0xff]
    %v229 = vld [vmem:[#allocation7 + $0x8] sm:$0xff]
    %v230 = vld [vmem:[#allocation7 + $0x10] sm:$0xff]
    %v231 = vld [vmem:[#allocation7 + $0x18] sm:$0xff]
    %v232 = vld [vmem:[#allocation7 + $0x20] sm:$0xff]
    %v233 = vld [vmem:[#allocation7 + $0x28] sm:$0xff]
    %v234 = vld [vmem:[#allocation7 + $0x30] sm:$0xff]
    %v235 = vld [vmem:[#allocation7 + $0x38] sm:$0xff]
    %v236 = vld [vmem:[#allocation7 + $0x40] sm:$0xff]
    %v237 = vld [vmem:[#allocation7 + $0x48] sm:$0xff]
    %v238 = vld [vmem:[#allocation7 + $0x50] sm:$0xff]
    %v239 = vld [vmem:[#allocation7 + $0x58] sm:$0xff]
    %v240 = vld [vmem:[#allocation7 + $0x60] sm:$0xff]
    %v241 = vld [vmem:[#allocation7 + $0x68] sm:$0xff]
    %v242 = vld [vmem:[#allocation7 + $0x70] sm:$0xff]
    %v243 = vld [vmem:[#allocation7 + $0x78] sm:$0xff]
    %244 = vmatprep.subr.mxu0 0.0
    %245 = vmatpush1.msra.mxu0 %v243
    %246 = vmatprep.subr.mxu0 0.0
    %247 = vmatpush1.msra.mxu0 %v242
    %248 = vmatprep.subr.mxu0 0.0
    %249 = vmatpush1.msra.mxu0 %v241
    %250 = vmatprep.subr.mxu0 0.0
    %251 = vmatpush1.msra.mxu0 %v240
    %252 = vmatprep.subr.mxu0 0.0
    %253 = vmatpush1.msra.mxu0 %v239
    %254 = vmatprep.subr.mxu0 0.0
    %255 = vmatpush1.msra.mxu0 %v238
    %256 = vmatprep.subr.mxu0 0.0
    %257 = vmatpush1.msra.mxu0 %v237
    %258 = vmatprep.subr.mxu0 0.0
    %259 = vmatpush1.msra.mxu0 %v236
    %260 = vmatprep.subr.mxu0 0.0
    %261 = vmatpush1.msra.mxu0 %v235
    %262 = vmatprep.subr.mxu0 0.0
    %263 = vmatpush1.msra.mxu0 %v234
    %264 = vmatprep.subr.mxu0 0.0
    %265 = vmatpush1.msra.mxu0 %v233
    %266 = vmatprep.subr.mxu0 0.0
    %267 = vmatpush1.msra.mxu0 %v232
    %268 = vmatprep.subr.mxu0 0.0
    %269 = vmatpush1.msra.mxu0 %v231
    %270 = vmatprep.subr.mxu0 0.0
    %271 = vmatpush1.msra.mxu0 %v230
    %272 = vmatprep.subr.mxu0 0.0
    %273 = vmatpush1.msra.mxu0 %v229
    %274 = vmatprep.subr.mxu0 0.0
    %275 = vmatpush1.msra.mxu0 %v228
    %276 = vmatprep.subr.mxu0 0.0
    %277 = vmatpush2.msra.mxu0 0.0
    %278 = vmatprep.subr.mxu0 0.0
    %279 = vmatpush2.msra.mxu0 0.0
    %280 = vmatprep.subr.mxu0 0.0
    %281 = vmatpush2.msra.mxu0 0.0
    %282 = vmatprep.subr.mxu0 0.0
    %283 = vmatpush2.msra.mxu0 0.0
    %284 = vmatprep.subr.mxu0 0.0
    %285 = vmatpush2.msra.mxu0 0.0
    %286 = vmatprep.subr.mxu0 0.0
    %287 = vmatpush2.msra.mxu0 0.0
    %288 = vmatprep.subr.mxu0 0.0
    %289 = vmatpush2.msra.mxu0 0.0
    %290 = vmatprep.subr.mxu0 0.0
    %291 = vmatpush2.msra.mxu0 0.0
    %292 = vmatprep.subr.mxu0 0.0
    %293 = vmatpush2.msra.mxu0 0.0
    %294 = vmatprep.subr.mxu0 0.0
    %295 = vmatpush2.msra.mxu0 0.0
    %296 = vmatprep.subr.mxu0 0.0
    %297 = vmatpush2.msra.mxu0 0.0
    %298 = vmatprep.subr.mxu0 0.0
    %299 = vmatpush2.msra.mxu0 0.0
    %300 = vmatprep.subr.mxu0 0.0
    %301 = vmatpush2.msra.mxu0 0.0
    %302 = vmatprep.subr.mxu0 0.0
    %303 = vmatpush2.msra.mxu0 0.0
    %304 = vmatprep.subr.mxu0 0.0
    %305 = vmatpush2.msra.mxu0 0.0
    %306 = vmatprep.subr.mxu0 0.0
    %307 = vmatpush2.msra.mxu0 0.0
    %308 = vmatprep.mubr.f32.mxu0 0.0
    %309 = vmatmul.mubr.f32.gmra.mxu0 0.0
    %v310 = vpop.f32.mrf.mxu0
    %v311 = vadd.f32 %v206, %v310
    %v312 = vpop.f32.mrf.mxu0
    %313 = vdwg.mxu0
    %v314 = vtanh.pop %v311
    %v315 = vld [vmem:[#allocation10] sm:$0xff]
    %v316 = vld [vmem:[#allocation10 + $0x8] sm:$0xff]
    %v317 = vld [vmem:[#allocation10 + $0x10] sm:$0xff]
    %v318 = vld [vmem:[#allocation10 + $0x18] sm:$0xff]
    %v319 = vld [vmem:[#allocation10 + $0x20] sm:$0xff]
    %v320 = vld [vmem:[#allocation10 + $0x28] sm:$0xff]
    %v321 = vld [vmem:[#allocation10 + $0x30] sm:$0xff]
    %v322 = vld [vmem:[#allocation10 + $0x38] sm:$0xff]
    %v323 = vld [vmem:[#allocation10 + $0x40] sm:$0xff]
    %v324 = vld [vmem:[#allocation10 + $0x48] sm:$0xff]
    %v325 = vld [vmem:[#allocation10 + $0x50] sm:$0xff]
    %v326 = vld [vmem:[#allocation10 + $0x58] sm:$0xff]
    %v327 = vld [vmem:[#allocation10 + $0x60] sm:$0xff]
    %v328 = vld [vmem:[#allocation10 + $0x68] sm:$0xff]
    %v329 = vld [vmem:[#allocation10 + $0x70] sm:$0xff]
    %v330 = vld [vmem:[#allocation10 + $0x78] sm:$0xff]
    %v331 = vld [vmem:[#allocation8] sm:$0xff]
    %v332 = vld [vmem:[#allocation8 + $0x8] sm:$0xff]
    %v333 = vld [vmem:[#allocation8 + $0x10] sm:$0xff]
    %v334 = vld [vmem:[#allocation8 + $0x18] sm:$0xff]
    %v335 = vld [vmem:[#allocation8 + $0x20] sm:$0xff]
    %v336 = vld [vmem:[#allocation8 + $0x28] sm:$0xff]
    %v337 = vld [vmem:[#allocation8 + $0x30] sm:$0xff]
    %v338 = vld [vmem:[#allocation8 + $0x38] sm:$0xff]
    %v339 = vld [vmem:[#allocation8 + $0x40] sm:$0xff]
    %v340 = vld [vmem:[#allocation8 + $0x48] sm:$0xff]
    %v341 = vld [vmem:[#allocation8 + $0x50] sm:$0xff]
    %v342 = vld [vmem:[#allocation8 + $0x58] sm:$0xff]
    %v343 = vld [vmem:[#allocation8 + $0x60] sm:$0xff]
    %v344 = vld [vmem:[#allocation8 + $0x68] sm:$0xff]
    %v345 = vld [vmem:[#allocation8 + $0x70] sm:$0xff]
    %v346 = vld [vmem:[#allocation8 + $0x78] sm:$0xff]
    %347 = vmatprep.subr.mxu0 0.0
    %348 = vmatpush1.msra.mxu0 %v346
    %349 = vmatprep.subr.mxu0 0.0
    %350 = vmatpush1.msra.mxu0 %v345
    %351 = vmatprep.subr.mxu0 0.0
    %352 = vmatpush1.msra.mxu0 %v344
    %353 = vmatprep.subr.mxu0 0.0
    %354 = vmatpush1.msra.mxu0 %v343
    %355 = vmatprep.subr.mxu0 0.0
    %356 = vmatpush1.msra.mxu0 %v342
    %357 = vmatprep.subr.mxu0 0.0
    %358 = vmatpush1.msra.mxu0 %v341
    %359 = vmatprep.subr.mxu0 0.0
    %360 = vmatpush1.msra.mxu0 %v340
    %361 = vmatprep.subr.mxu0 0.0
    %362 = vmatpush1.msra.mxu0 %v339
    %363 = vmatprep.subr.mxu0 0.0
    %364 = vmatpush1.msra.mxu0 %v338
    %365 = vmatprep.subr.mxu0 0.0
    %366 = vmatpush1.msra.mxu0 %v337
    %367 = vmatprep.subr.mxu0 0.0
    %368 = vmatpush1.msra.mxu0 %v336
    %369 = vmatprep.subr.mxu0 0.0
    %370 = vmatpush1.msra.mxu0 %v335
    %371 = vmatprep.subr.mxu0 0.0
    %372 = vmatpush1.msra.mxu0 %v334
    %373 = vmatprep.subr.mxu0 0.0
    %374 = vmatpush1.msra.mxu0 %v333
    %375 = vmatprep.subr.mxu0 0.0
    %376 = vmatpush1.msra.mxu0 %v332
    %377 = vmatprep.subr.mxu0 0.0
    %378 = vmatpush1.msra.mxu0 %v331
    %379 = vmatprep.subr.mxu0 0.0
    %380 = vmatpush2.msra.mxu0 0.0
    %381 = vmatprep.subr.mxu0 0.0
    %382 = vmatpush2.msra.mxu0 0.0
    %383 = vmatprep.subr.mxu0 0.0
    %384 = vmatpush2.msra.mxu0 0.0
    %385 = vmatprep.subr.mxu0 0.0
    %386 = vmatpush2.msra.mxu0 0.0
    %387 = vmatprep.subr.mxu0 0.0
    %388 = vmatpush2.msra.mxu0 0.0
    %389 = vmatprep.subr.mxu0 0.0
    %390 = vmatpush2.msra.mxu0 0.0
    %391 = vmatprep.subr.mxu0 0.0
    %392 = vmatpush2.msra.mxu0 0.0
    %393 = vmatprep.subr.mxu0 0.0
    %394 = vmatpush2.msra.mxu0 0.0
    %395 = vmatprep.subr.mxu0 0.0
    %396 = vmatpush2.msra.mxu0 0.0
    %397 = vmatprep.subr.mxu0 0.0
    %398 = vmatpush2.msra.mxu0 0.0
    %399 = vmatprep.subr.mxu0 0.0
    %400 = vmatpush2.msra.mxu0 0.0
    %401 = vmatprep.subr.mxu0 0.0
    %402 = vmatpush2.msra.mxu0 0.0
    %403 = vmatprep.subr.mxu0 0.0
    %404 = vmatpush2.msra.mxu0 0.0
    %405 = vmatprep.subr.mxu0 0.0
    %406 = vmatpush2.msra.mxu0 0.0
    %407 = vmatprep.subr.mxu0 0.0
    %408 = vmatpush2.msra.mxu0 0.0
    %409 = vmatprep.subr.mxu0 0.0
    %410 = vmatpush2.msra.mxu0 0.0
    %411 = vmatprep.mubr.f32.mxu0 0.0
    %412 = vmatmul.mubr.f32.gmra.mxu0 %v314
    %v413 = vpop.f32.mrf.mxu0
    %v414 = vadd.f32 0.0, %v413
    %v415 = vpop.f32.mrf.mxu0
    %416 = vdwg.mxu0
    %417 = vmatprep.subr.mxu0 0.0
    %418 = vmatpush1.msra.mxu0 %v330
    %419 = vmatprep.subr.mxu0 0.0
    %420 = vmatpush1.msra.mxu0 %v329
    %421 = vmatprep.subr.mxu0 0.0
    %422 = vmatpush1.msra.mxu0 %v328
    %423 = vmatprep.subr.mxu0 0.0
    %424 = vmatpush1.msra.mxu0 %v327
    %425 = vmatprep.subr.mxu0 0.0
    %426 = vmatpush1.msra.mxu0 %v326
    %427 = vmatprep.subr.mxu0 0.0
    %428 = vmatpush1.msra.mxu0 %v325
    %429 = vmatprep.subr.mxu0 0.0
    %430 = vmatpush1.msra.mxu0 %v324
    %431 = vmatprep.subr.mxu0 0.0
    %432 = vmatpush1.msra.mxu0 %v323
    %433 = vmatprep.subr.mxu0 0.0
    %434 = vmatpush1.msra.mxu0 %v322
    %435 = vmatprep.subr.mxu0 0.0
    %436 = vmatpush1.msra.mxu0 %v321
    %437 = vmatprep.subr.mxu0 0.0
    %438 = vmatpush1.msra.mxu0 %v320
    %439 = vmatprep.subr.mxu0 0.0
    %440 = vmatpush1.msra.mxu0 %v319
    %441 = vmatprep.subr.mxu0 0.0
    %442 = vmatpush1.msra.mxu0 %v318
    %443 = vmatprep.subr.mxu0 0.0
    %444 = vmatpush1.msra.mxu0 %v317
    %445 = vmatprep.subr.mxu0 0.0
    %446 = vmatpush1.msra.mxu0 %v316
    %447 = vmatprep.subr.mxu0 0.0
    %448 = vmatpush1.msra.mxu0 %v315
    %449 = vmatprep.subr.mxu0 0.0
    %450 = vmatpush2.msra.mxu0 0.0
    %451 = vmatprep.subr.mxu0 0.0
    %452 = vmatpush2.msra.mxu0 0.0
    %453 = vmatprep.subr.mxu0 0.0
    %454 = vmatpush2.msra.mxu0 0.0
    %455 = vmatprep.subr.mxu0 0.0
    %456 = vmatpush2.msra.mxu0 0.0
    %457 = vmatprep.subr.mxu0 0.0
    %458 = vmatpush2.msra.mxu0 0.0
    %459 = vmatprep.subr.mxu0 0.0
    %460 = vmatpush2.msra.mxu0 0.0
    %461 = vmatprep.subr.mxu0 0.0
    %462 = vmatpush2.msra.mxu0 0.0
    %463 = vmatprep.subr.mxu0 0.0
    %464 = vmatpush2.msra.mxu0 0.0
    %465 = vmatprep.subr.mxu0 0.0
    %466 = vmatpush2.msra.mxu0 0.0
    %467 = vmatprep.subr.mxu0 0.0
    %468 = vmatpush2.msra.mxu0 0.0
    %469 = vmatprep.subr.mxu0 0.0
    %470 = vmatpush2.msra.mxu0 0.0
    %471 = vmatprep.subr.mxu0 0.0
    %472 = vmatpush2.msra.mxu0 0.0
    %473 = vmatprep.subr.mxu0 0.0
    %474 = vmatpush2.msra.mxu0 0.0
    %475 = vmatprep.subr.mxu0 0.0
    %476 = vmatpush2.msra.mxu0 0.0
    %477 = vmatprep.subr.mxu0 0.0
    %478 = vmatpush2.msra.mxu0 0.0
    %479 = vmatprep.subr.mxu0 0.0
    %480 = vmatpush2.msra.mxu0 0.0
    %481 = vmatprep.mubr.f32.mxu0 0.0
    %482 = vmatmul.mubr.f32.gmra.mxu0 0.0
    %v483 = vpop.f32.mrf.mxu0
    %v484 = vadd.f32 %v414, %v483
    %v485 = vpop.f32.mrf.mxu0
    %486 = vdwg.mxu0
    %v487 = vadd.f32 %v484, %v219
    %v488 = vtanh.pop %v487
    %v489 = vld [vmem:[#allocation11] sm:$0xff]
    %v490 = vld [vmem:[#allocation11 + $0x8] sm:$0xff]
    %v491 = vld [vmem:[#allocation11 + $0x10] sm:$0xff]
    %v492 = vld [vmem:[#allocation11 + $0x18] sm:$0xff]
    %v493 = vld [vmem:[#allocation11 + $0x20] sm:$0xff]
    %v494 = vld [vmem:[#allocation11 + $0x28] sm:$0xff]
    %v495 = vld [vmem:[#allocation11 + $0x30] sm:$0xff]
    %v496 = vld [vmem:[#allocation11 + $0x38] sm:$0xff]
    %v497 = vld [vmem:[#allocation11 + $0x40] sm:$0xff]
    %v498 = vld [vmem:[#allocation11 + $0x48] sm:$0xff]
    %v499 = vld [vmem:[#allocation11 + $0x50] sm:$0xff]
    %v500 = vld [vmem:[#allocation11 + $0x58] sm:$0xff]
    %v501 = vld [vmem:[#allocation11 + $0x60] sm:$0xff]
    %v502 = vld [vmem:[#allocation11 + $0x68] sm:$0xff]
    %v503 = vld [vmem:[#allocation11 + $0x70] sm:$0xff]
    %v504 = vld [vmem:[#allocation11 + $0x78] sm:$0xff]
    %505 = vmatprep.subr.mxu0 0.0
    %506 = vmatpush1.msra.mxu0 %v504
    %507 = vmatprep.subr.mxu0 0.0
    %508 = vmatpush1.msra.mxu0 %v503
    %509 = vmatprep.subr.mxu0 0.0
    %510 = vmatpush1.msra.mxu0 %v502
    %511 = vmatprep.subr.mxu0 0.0
    %512 = vmatpush1.msra.mxu0 %v501
    %513 = vmatprep.subr.mxu0 0.0
    %514 = vmatpush1.msra.mxu0 %v500
    %515 = vmatprep.subr.mxu0 0.0
    %516 = vmatpush1.msra.mxu0 %v499
    %517 = vmatprep.subr.mxu0 0.0
    %518 = vmatpush1.msra.mxu0 %v498
    %519 = vmatprep.subr.mxu0 0.0
    %520 = vmatpush1.msra.mxu0 %v497
    %521 = vmatprep.subr.mxu0 0.0
    %522 = vmatpush1.msra.mxu0 %v496
    %523 = vmatprep.subr.mxu0 0.0
    %524 = vmatpush1.msra.mxu0 %v495
    %525 = vmatprep.subr.mxu0 0.0
    %526 = vmatpush1.msra.mxu0 %v494
    %527 = vmatprep.subr.mxu0 0.0
    %528 = vmatpush1.msra.mxu0 %v493
    %529 = vmatprep.subr.mxu0 0.0
    %530 = vmatpush1.msra.mxu0 %v492
    %531 = vmatprep.subr.mxu0 0.0
    %532 = vmatpush1.msra.mxu0 %v491
    %533 = vmatprep.subr.mxu0 0.0
    %534 = vmatpush1.msra.mxu0 %v490
    %535 = vmatprep.subr.mxu0 0.0
    %536 = vmatpush1.msra.mxu0 %v489
    %537 = vmatprep.subr.mxu0 0.0
    %538 = vmatpush2.msra.mxu0 0.0
    %539 = vmatprep.subr.mxu0 0.0
    %540 = vmatpush2.msra.mxu0 0.0
    %541 = vmatprep.subr.mxu0 0.0
    %542 = vmatpush2.msra.mxu0 0.0
    %543 = vmatprep.subr.mxu0 0.0
    %544 = vmatpush2.msra.mxu0 0.0
    %545 = vmatprep.subr.mxu0 0.0
    %546 = vmatpush2.msra.mxu0 0.0
    %547 = vmatprep.subr.mxu0 0.0
    %548 = vmatpush2.msra.mxu0 0.0
    %549 = vmatprep.subr.mxu0 0.0
    %550 = vmatpush2.msra.mxu0 0.0
    %551 = vmatprep.subr.mxu0 0.0
    %552 = vmatpush2.msra.mxu0 0.0
    %553 = vmatprep.subr.mxu0 0.0
    %554 = vmatpush2.msra.mxu0 0.0
    %555 = vmatprep.subr.mxu0 0.0
    %556 = vmatpush2.msra.mxu0 0.0
    %557 = vmatprep.subr.mxu0 0.0
    %558 = vmatpush2.msra.mxu0 0.0
    %559 = vmatprep.subr.mxu0 0.0
    %560 = vmatpush2.msra.mxu0 0.0
    %561 = vmatprep.subr.mxu0 0.0
    %562 = vmatpush2.msra.mxu0 0.0
    %563 = vmatprep.subr.mxu0 0.0
    %564 = vmatpush2.msra.mxu0 0.0
    %565 = vmatprep.subr.mxu0 0.0
    %566 = vmatpush2.msra.mxu0 0.0
    %567 = vmatprep.subr.mxu0 0.0
    %568 = vmatpush2.msra.mxu0 0.0
    %569 = vmatprep.mubr.f32.mxu0 0.0
    %570 = vmatmul.mubr.f32.gmra.mxu0 %v488
    %v571 = vpop.f32.mrf.mxu0
    %v572 = vadd.f32 0.0, %v571
    %v573 = vpop.f32.mrf.mxu0
    %574 = vdwg.mxu0
    %v575 = vadd.f32 %v226, %v572
    %v577 = vrot.slane %v206, 2
    %579 = vmatprep.subr.mxu0 0.0
    %580 = vmatpush1.msra.mxu0 %v243
    %581 = vmatprep.subr.mxu0 0.0
    %582 = vmatpush1.msra.mxu0 %v242
    %583 = vmatprep.subr.mxu0 0.0
    %584 = vmatpush1.msra.mxu0 %v241
    %585 = vmatprep.subr.mxu0 0.0
    %586 = vmatpush1.msra.mxu0 %v240
    %587 = vmatprep.subr.mxu0 0.0
    %588 = vmatpush1.msra.mxu0 %v239
    %589 = vmatprep.subr.mxu0 0.0
    %590 = vmatpush1.msra.mxu0 %v238
    %591 = vmatprep.subr.mxu0 0.0
    %592 = vmatpush1.msra.mxu0 %v237
    %593 = vmatprep.subr.mxu0 0.0
    %594 = vmatpush1.msra.mxu0 %v236
    %595 = vmatprep.subr.mxu0 0.0
    %596 = vmatpush1.msra.mxu0 %v235
    %597 = vmatprep.subr.mxu0 0.0
    %598 = vmatpush1.msra.mxu0 %v234
    %599 = vmatprep.subr.mxu0 0.0
    %600 = vmatpush1.msra.mxu0 %v233
    %601 = vmatprep.subr.mxu0 0.0
    %602 = vmatpush1.msra.mxu0 %v232
    %603 = vmatprep.subr.mxu0 0.0
    %604 = vmatpush1.msra.mxu0 %v231
    %605 = vmatprep.subr.mxu0 0.0
    %606 = vmatpush1.msra.mxu0 %v230
    %607 = vmatprep.subr.mxu0 0.0
    %608 = vmatpush1.msra.mxu0 %v229
    %609 = vmatprep.subr.mxu0 0.0
    %610 = vmatpush1.msra.mxu0 %v228
    %611 = vmatprep.subr.mxu0 0.0
    %612 = vmatpush2.msra.mxu0 0.0
    %613 = vmatprep.subr.mxu0 0.0
    %614 = vmatpush2.msra.mxu0 0.0
    %615 = vmatprep.subr.mxu0 0.0
    %616 = vmatpush2.msra.mxu0 0.0
    %617 = vmatprep.subr.mxu0 0.0
    %618 = vmatpush2.msra.mxu0 0.0
    %619 = vmatprep.subr.mxu0 0.0
    %620 = vmatpush2.msra.mxu0 0.0
    %621 = vmatprep.subr.mxu0 0.0
    %622 = vmatpush2.msra.mxu0 0.0
    %623 = vmatprep.subr.mxu0 0.0
    %624 = vmatpush2.msra.mxu0 0.0
    %625 = vmatprep.subr.mxu0 0.0
    %626 = vmatpush2.msra.mxu0 0.0
    %627 = vmatprep.subr.mxu0 0.0
    %628 = vmatpush2.msra.mxu0 0.0
    %629 = vmatprep.subr.mxu0 0.0
    %630 = vmatpush2.msra.mxu0 0.0
    %631 = vmatprep.subr.mxu0 0.0
    %632 = vmatpush2.msra.mxu0 0.0
    %633 = vmatprep.subr.mxu0 0.0
    %634 = vmatpush2.msra.mxu0 0.0
    %635 = vmatprep.subr.mxu0 0.0
    %636 = vmatpush2.msra.mxu0 0.0
    %637 = vmatprep.subr.mxu0 0.0
    %638 = vmatpush2.msra.mxu0 0.0
    %639 = vmatprep.subr.mxu0 0.0
    %640 = vmatpush2.msra.mxu0 0.0
    %641 = vmatprep.subr.mxu0 0.0
    %642 = vmatpush2.msra.mxu0 0.0
    %643 = vmatprep.mubr.f32.mxu0 0.0
    %644 = vmatmul.mubr.f32.gmra.mxu0 %v314
    %v645 = vpop.f32.mrf.mxu0
    %v646 = vadd.f32 %v577, %v645
    %v647 = vpop.f32.mrf.mxu0
    %648 = vdwg.mxu0
    %v649 = vtanh.pop %v646
    %650 = vmatprep.subr.mxu0 0.0
    %651 = vmatpush1.msra.mxu0 %v346
    %652 = vmatprep.subr.mxu0 0.0
    %653 = vmatpush1.msra.mxu0 %v345
    %654 = vmatprep.subr.mxu0 0.0
    %655 = vmatpush1.msra.mxu0 %v344
    %656 = vmatprep.subr.mxu0 0.0
    %657 = vmatpush1.msra.mxu0 %v343
    %658 = vmatprep.subr.mxu0 0.0
    %659 = vmatpush1.msra.mxu0 %v342
    %660 = vmatprep.subr.mxu0 0.0
    %661 = vmatpush1.msra.mxu0 %v341
    %662 = vmatprep.subr.mxu0 0.0
    %663 = vmatpush1.msra.mxu0 %v340
    %664 = vmatprep.subr.mxu0 0.0
    %665 = vmatpush1.msra.mxu0 %v339
    %666 = vmatprep.subr.mxu0 0.0
    %667 = vmatpush1.msra.mxu0 %v338
    %668 = vmatprep.subr.mxu0 0.0
    %669 = vmatpush1.msra.mxu0 %v337
    %670 = vmatprep.subr.mxu0 0.0
    %671 = vmatpush1.msra.mxu0 %v336
    %672 = vmatprep.subr.mxu0 0.0
    %673 = vmatpush1.msra.mxu0 %v335
    %674 = vmatprep.subr.mxu0 0.0
    %675 = vmatpush1.msra.mxu0 %v334
    %676 = vmatprep.subr.mxu0 0.0
    %677 = vmatpush1.msra.mxu0 %v333
    %678 = vmatprep.subr.mxu0 0.0
    %679 = vmatpush1.msra.mxu0 %v332
    %680 = vmatprep.subr.mxu0 0.0
    %681 = vmatpush1.msra.mxu0 %v331
    %682 = vmatprep.subr.mxu0 0.0
    %683 = vmatpush2.msra.mxu0 0.0
    %684 = vmatprep.subr.mxu0 0.0
    %685 = vmatpush2.msra.mxu0 0.0
    %686 = vmatprep.subr.mxu0 0.0
    %687 = vmatpush2.msra.mxu0 0.0
    %688 = vmatprep.subr.mxu0 0.0
    %689 = vmatpush2.msra.mxu0 0.0
    %690 = vmatprep.subr.mxu0 0.0
    %691 = vmatpush2.msra.mxu0 0.0
    %692 = vmatprep.subr.mxu0 0.0
    %693 = vmatpush2.msra.mxu0 0.0
    %694 = vmatprep.subr.mxu0 0.0
    %695 = vmatpush2.msra.mxu0 0.0
    %696 = vmatprep.subr.mxu0 0.0
    %697 = vmatpush2.msra.mxu0 0.0
    %698 = vmatprep.subr.mxu0 0.0
    %699 = vmatpush2.msra.mxu0 0.0
    %700 = vmatprep.subr.mxu0 0.0
    %701 = vmatpush2.msra.mxu0 0.0
    %702 = vmatprep.subr.mxu0 0.0
    %703 = vmatpush2.msra.mxu0 0.0
    %704 = vmatprep.subr.mxu0 0.0
    %705 = vmatpush2.msra.mxu0 0.0
    %706 = vmatprep.subr.mxu0 0.0
    %707 = vmatpush2.msra.mxu0 0.0
    %708 = vmatprep.subr.mxu0 0.0
    %709 = vmatpush2.msra.mxu0 0.0
    %710 = vmatprep.subr.mxu0 0.0
    %711 = vmatpush2.msra.mxu0 0.0
    %712 = vmatprep.subr.mxu0 0.0
    %713 = vmatpush2.msra.mxu0 0.0
    %714 = vmatprep.mubr.f32.mxu0 0.0
    %715 = vmatmul.mubr.f32.gmra.mxu0 %v649
    %v716 = vpop.f32.mrf.mxu0
    %v717 = vadd.f32 0.0, %v716
    %v718 = vpop.f32.mrf.mxu0
    %719 = vdwg.mxu0
    %720 = vmatprep.subr.mxu0 0.0
    %721 = vmatpush1.msra.mxu0 %v330
    %722 = vmatprep.subr.mxu0 0.0
    %723 = vmatpush1.msra.mxu0 %v329
    %724 = vmatprep.subr.mxu0 0.0
    %725 = vmatpush1.msra.mxu0 %v328
    %726 = vmatprep.subr.mxu0 0.0
    %727 = vmatpush1.msra.mxu0 %v327
    %728 = vmatprep.subr.mxu0 0.0
    %729 = vmatpush1.msra.mxu0 %v326
    %730 = vmatprep.subr.mxu0 0.0
    %731 = vmatpush1.msra.mxu0 %v325
    %732 = vmatprep.subr.mxu0 0.0
    %733 = vmatpush1.msra.mxu0 %v324
    %734 = vmatprep.subr.mxu0 0.0
    %735 = vmatpush1.msra.mxu0 %v323
    %736 = vmatprep.subr.mxu0 0.0
    %737 = vmatpush1.msra.mxu0 %v322
    %738 = vmatprep.subr.mxu0 0.0
    %739 = vmatpush1.msra.mxu0 %v321
    %740 = vmatprep.subr.mxu0 0.0
    %741 = vmatpush1.msra.mxu0 %v320
    %742 = vmatprep.subr.mxu0 0.0
    %743 = vmatpush1.msra.mxu0 %v319
    %744 = vmatprep.subr.mxu0 0.0
    %745 = vmatpush1.msra.mxu0 %v318
    %746 = vmatprep.subr.mxu0 0.0
    %747 = vmatpush1.msra.mxu0 %v317
    %748 = vmatprep.subr.mxu0 0.0
    %749 = vmatpush1.msra.mxu0 %v316
    %750 = vmatprep.subr.mxu0 0.0
    %751 = vmatpush1.msra.mxu0 %v315
    %752 = vmatprep.subr.mxu0 0.0
    %753 = vmatpush2.msra.mxu0 0.0
    %754 = vmatprep.subr.mxu0 0.0
    %755 = vmatpush2.msra.mxu0 0.0
    %756 = vmatprep.subr.mxu0 0.0
    %757 = vmatpush2.msra.mxu0 0.0
    %758 = vmatprep.subr.mxu0 0.0
    %759 = vmatpush2.msra.mxu0 0.0
    %760 = vmatprep.subr.mxu0 0.0
    %761 = vmatpush2.msra.mxu0 0.0
    %762 = vmatprep.subr.mxu0 0.0
    %763 = vmatpush2.msra.mxu0 0.0
    %764 = vmatprep.subr.mxu0 0.0
    %765 = vmatpush2.msra.mxu0 0.0
    %766 = vmatprep.subr.mxu0 0.0
    %767 = vmatpush2.msra.mxu0 0.0
    %768 = vmatprep.subr.mxu0 0.0
    %769 = vmatpush2.msra.mxu0 0.0
    %770 = vmatprep.subr.mxu0 0.0
    %771 = vmatpush2.msra.mxu0 0.0
    %772 = vmatprep.subr.mxu0 0.0
    %773 = vmatpush2.msra.mxu0 0.0
    %774 = vmatprep.subr.mxu0 0.0
    %775 = vmatpush2.msra.mxu0 0.0
    %776 = vmatprep.subr.mxu0 0.0
    %777 = vmatpush2.msra.mxu0 0.0
    %778 = vmatprep.subr.mxu0 0.0
    %779 = vmatpush2.msra.mxu0 0.0
    %780 = vmatprep.subr.mxu0 0.0
    %781 = vmatpush2.msra.mxu0 0.0
    %782 = vmatprep.subr.mxu0 0.0
    %783 = vmatpush2.msra.mxu0 0.0
    %784 = vmatprep.mubr.f32.mxu0 0.0
    %785 = vmatmul.mubr.f32.gmra.mxu0 %v488
    %v786 = vpop.f32.mrf.mxu0
    %v787 = vadd.f32 %v717, %v786
    %v788 = vpop.f32.mrf.mxu0
    %789 = vdwg.mxu0
    %v790 = vadd.f32 %v787, %v219
    %v791 = vtanh.pop %v790
    %s792 = scalar_lea.vmem [#allocation11], 128
    %v793 = vld [vmem:[%s792] sm:$0xff]
    %v794 = vld [vmem:[%s792 + $0x8] sm:$0xff]
    %v795 = vld [vmem:[%s792 + $0x10] sm:$0xff]
    %v796 = vld [vmem:[%s792 + $0x18] sm:$0xff]
    %v797 = vld [vmem:[%s792 + $0x20] sm:$0xff]
    %v798 = vld [vmem:[%s792 + $0x28] sm:$0xff]
    %v799 = vld [vmem:[%s792 + $0x30] sm:$0xff]
    %v800 = vld [vmem:[%s792 + $0x38] sm:$0xff]
    %v801 = vld [vmem:[%s792 + $0x40] sm:$0xff]
    %v802 = vld [vmem:[%s792 + $0x48] sm:$0xff]
    %v803 = vld [vmem:[%s792 + $0x50] sm:$0xff]
    %v804 = vld [vmem:[%s792 + $0x58] sm:$0xff]
    %v805 = vld [vmem:[%s792 + $0x60] sm:$0xff]
    %v806 = vld [vmem:[%s792 + $0x68] sm:$0xff]
    %v807 = vld [vmem:[%s792 + $0x70] sm:$0xff]
    %v808 = vld [vmem:[%s792 + $0x78] sm:$0xff]
    %809 = vmatprep.subr.mxu0 0.0
    %810 = vmatpush1.msra.mxu0 %v808
    %811 = vmatprep.subr.mxu0 0.0
    %812 = vmatpush1.msra.mxu0 %v807
    %813 = vmatprep.subr.mxu0 0.0
    %814 = vmatpush1.msra.mxu0 %v806
    %815 = vmatprep.subr.mxu0 0.0
    %816 = vmatpush1.msra.mxu0 %v805
    %817 = vmatprep.subr.mxu0 0.0
    %818 = vmatpush1.msra.mxu0 %v804
    %819 = vmatprep.subr.mxu0 0.0
    %820 = vmatpush1.msra.mxu0 %v803
    %821 = vmatprep.subr.mxu0 0.0
    %822 = vmatpush1.msra.mxu0 %v802
    %823 = vmatprep.subr.mxu0 0.0
    %824 = vmatpush1.msra.mxu0 %v801
    %825 = vmatprep.subr.mxu0 0.0
    %826 = vmatpush1.msra.mxu0 %v800
    %827 = vmatprep.subr.mxu0 0.0
    %828 = vmatpush1.msra.mxu0 %v799
    %829 = vmatprep.subr.mxu0 0.0
    %830 = vmatpush1.msra.mxu0 %v798
    %831 = vmatprep.subr.mxu0 0.0
    %832 = vmatpush1.msra.mxu0 %v797
    %833 = vmatprep.subr.mxu0 0.0
    %834 = vmatpush1.msra.mxu0 %v796
    %835 = vmatprep.subr.mxu0 0.0
    %836 = vmatpush1.msra.mxu0 %v795
    %837 = vmatprep.subr.mxu0 0.0
    %838 = vmatpush1.msra.mxu0 %v794
    %839 = vmatprep.subr.mxu0 0.0
    %840 = vmatpush1.msra.mxu0 %v793
    %841 = vmatprep.subr.mxu0 0.0
    %842 = vmatpush2.msra.mxu0 0.0
    %843 = vmatprep.subr.mxu0 0.0
    %844 = vmatpush2.msra.mxu0 0.0
    %845 = vmatprep.subr.mxu0 0.0
    %846 = vmatpush2.msra.mxu0 0.0
    %847 = vmatprep.subr.mxu0 0.0
    %848 = vmatpush2.msra.mxu0 0.0
    %849 = vmatprep.subr.mxu0 0.0
    %850 = vmatpush2.msra.mxu0 0.0
    %851 = vmatprep.subr.mxu0 0.0
    %852 = vmatpush2.msra.mxu0 0.0
    %853 = vmatprep.subr.mxu0 0.0
    %854 = vmatpush2.msra.mxu0 0.0
    %855 = vmatprep.subr.mxu0 0.0
    %856 = vmatpush2.msra.mxu0 0.0
    %857 = vmatprep.subr.mxu0 0.0
    %858 = vmatpush2.msra.mxu0 0.0
    %859 = vmatprep.subr.mxu0 0.0
    %860 = vmatpush2.msra.mxu0 0.0
    %861 = vmatprep.subr.mxu0 0.0
    %862 = vmatpush2.msra.mxu0 0.0
    %863 = vmatprep.subr.mxu0 0.0
    %864 = vmatpush2.msra.mxu0 0.0
    %865 = vmatprep.subr.mxu0 0.0
    %866 = vmatpush2.msra.mxu0 0.0
    %867 = vmatprep.subr.mxu0 0.0
    %868 = vmatpush2.msra.mxu0 0.0
    %869 = vmatprep.subr.mxu0 0.0
    %870 = vmatpush2.msra.mxu0 0.0
    %871 = vmatprep.subr.mxu0 0.0
    %872 = vmatpush2.msra.mxu0 0.0
    %873 = vmatprep.mubr.f32.mxu0 0.0
    %874 = vmatmul.mubr.f32.gmra.mxu0 %v791
    %v875 = vpop.f32.mrf.mxu0
    %v876 = vadd.f32 0.0, %v875
    %v877 = vpop.f32.mrf.mxu0
    %878 = vdwg.mxu0
    %v879 = vadd.f32 %v575, %v876
    %v880 = vrot.slane %v206, 4
    %882 = vmatprep.subr.mxu0 0.0
    %883 = vmatpush1.msra.mxu0 %v243
    %884 = vmatprep.subr.mxu0 0.0
    %885 = vmatpush1.msra.mxu0 %v242
    %886 = vmatprep.subr.mxu0 0.0
    %887 = vmatpush1.msra.mxu0 %v241
    %888 = vmatprep.subr.mxu0 0.0
    %889 = vmatpush1.msra.mxu0 %v240
    %890 = vmatprep.subr.mxu0 0.0
    %891 = vmatpush1.msra.mxu0 %v239
    %892 = vmatprep.subr.mxu0 0.0
    %893 = vmatpush1.msra.mxu0 %v238
    %894 = vmatprep.subr.mxu0 0.0
    %895 = vmatpush1.msra.mxu0 %v237
    %896 = vmatprep.subr.mxu0 0.0
    %897 = vmatpush1.msra.mxu0 %v236
    %898 = vmatprep.subr.mxu0 0.0
    %899 = vmatpush1.msra.mxu0 %v235
    %900 = vmatprep.subr.mxu0 0.0
    %901 = vmatpush1.msra.mxu0 %v234
    %902 = vmatprep.subr.mxu0 0.0
    %903 = vmatpush1.msra.mxu0 %v233
    %904 = vmatprep.subr.mxu0 0.0
    %905 = vmatpush1.msra.mxu0 %v232
    %906 = vmatprep.subr.mxu0 0.0
    %907 = vmatpush1.msra.mxu0 %v231
    %908 = vmatprep.subr.mxu0 0.0
    %909 = vmatpush1.msra.mxu0 %v230
    %910 = vmatprep.subr.mxu0 0.0
    %911 = vmatpush1.msra.mxu0 %v229
    %912 = vmatprep.subr.mxu0 0.0
    %913 = vmatpush1.msra.mxu0 %v228
    %914 = vmatprep.subr.mxu0 0.0
    %915 = vmatpush2.msra.mxu0 0.0
    %916 = vmatprep.subr.mxu0 0.0
    %917 = vmatpush2.msra.mxu0 0.0
    %918 = vmatprep.subr.mxu0 0.0
    %919 = vmatpush2.msra.mxu0 0.0
    %920 = vmatprep.subr.mxu0 0.0
    %921 = vmatpush2.msra.mxu0 0.0
    %922 = vmatprep.subr.mxu0 0.0
    %923 = vmatpush2.msra.mxu0 0.0
    %924 = vmatprep.subr.mxu0 0.0
    %925 = vmatpush2.msra.mxu0 0.0
    %926 = vmatprep.subr.mxu0 0.0
    %927 = vmatpush2.msra.mxu0 0.0
    %928 = vmatprep.subr.mxu0 0.0
    %929 = vmatpush2.msra.mxu0 0.0
    %930 = vmatprep.subr.mxu0 0.0
    %931 = vmatpush2.msra.mxu0 0.0
    %932 = vmatprep.subr.mxu0 0.0
    %933 = vmatpush2.msra.mxu0 0.0
    %934 = vmatprep.subr.mxu0 0.0
    %935 = vmatpush2.msra.mxu0 0.0
    %936 = vmatprep.subr.mxu0 0.0
    %937 = vmatpush2.msra.mxu0 0.0
    %938 = vmatprep.subr.mxu0 0.0
    %939 = vmatpush2.msra.mxu0 0.0
    %940 = vmatprep.subr.mxu0 0.0
    %941 = vmatpush2.msra.mxu0 0.0
    %942 = vmatprep.subr.mxu0 0.0
    %943 = vmatpush2.msra.mxu0 0.0
    %944 = vmatprep.subr.mxu0 0.0
    %945 = vmatpush2.msra.mxu0 0.0
    %946 = vmatprep.mubr.f32.mxu0 0.0
    %947 = vmatmul.mubr.f32.gmra.mxu0 %v649
    %v948 = vpop.f32.mrf.mxu0
    %v949 = vadd.f32 %v880, %v948
    %v950 = vpop.f32.mrf.mxu0
    %951 = vdwg.mxu0
    %v952 = vtanh.pop %v949
    %953 = vmatprep.subr.mxu0 0.0
    %954 = vmatpush1.msra.mxu0 %v346
    %955 = vmatprep.subr.mxu0 0.0
    %956 = vmatpush1.msra.mxu0 %v345
    %957 = vmatprep.subr.mxu0 0.0
    %958 = vmatpush1.msra.mxu0 %v344
    %959 = vmatprep.subr.mxu0 0.0
    %960 = vmatpush1.msra.mxu0 %v343
    %961 = vmatprep.subr.mxu0 0.0
    %962 = vmatpush1.msra.mxu0 %v342
    %963 = vmatprep.subr.mxu0 0.0
    %964 = vmatpush1.msra.mxu0 %v341
    %965 = vmatprep.subr.mxu0 0.0
    %966 = vmatpush1.msra.mxu0 %v340
    %967 = vmatprep.subr.mxu0 0.0
    %968 = vmatpush1.msra.mxu0 %v339
    %969 = vmatprep.subr.mxu0 0.0
    %970 = vmatpush1.msra.mxu0 %v338
    %971 = vmatprep.subr.mxu0 0.0
    %972 = vmatpush1.msra.mxu0 %v337
    %973 = vmatprep.subr.mxu0 0.0
    %974 = vmatpush1.msra.mxu0 %v336
    %975 = vmatprep.subr.mxu0 0.0
    %976 = vmatpush1.msra.mxu0 %v335
    %977 = vmatprep.subr.mxu0 0.0
    %978 = vmatpush1.msra.mxu0 %v334
    %979 = vmatprep.subr.mxu0 0.0
    %980 = vmatpush1.msra.mxu0 %v333
    %981 = vmatprep.subr.mxu0 0.0
    %982 = vmatpush1.msra.mxu0 %v332
    %983 = vmatprep.subr.mxu0 0.0
    %984 = vmatpush1.msra.mxu0 %v331
    %985 = vmatprep.subr.mxu0 0.0
    %986 = vmatpush2.msra.mxu0 0.0
    %987 = vmatprep.subr.mxu0 0.0
    %988 = vmatpush2.msra.mxu0 0.0
    %989 = vmatprep.subr.mxu0 0.0
    %990 = vmatpush2.msra.mxu0 0.0
    %991 = vmatprep.subr.mxu0 0.0
    %992 = vmatpush2.msra.mxu0 0.0
    %993 = vmatprep.subr.mxu0 0.0
    %994 = vmatpush2.msra.mxu0 0.0
    %995 = vmatprep.subr.mxu0 0.0
    %996 = vmatpush2.msra.mxu0 0.0
    %997 = vmatprep.subr.mxu0 0.0
    %998 = vmatpush2.msra.mxu0 0.0
    %999 = vmatprep.subr.mxu0 0.0
    %1000 = vmatpush2.msra.mxu0 0.0
    %1001 = vmatprep.subr.mxu0 0.0
    %1002 = vmatpush2.msra.mxu0 0.0
    %1003 = vmatprep.subr.mxu0 0.0
    %1004 = vmatpush2.msra.mxu0 0.0
    %1005 = vmatprep.subr.mxu0 0.0
    %1006 = vmatpush2.msra.mxu0 0.0
    %1007 = vmatprep.subr.mxu0 0.0
    %1008 = vmatpush2.msra.mxu0 0.0
    %1009 = vmatprep.subr.mxu0 0.0
    %1010 = vmatpush2.msra.mxu0 0.0
    %1011 = vmatprep.subr.mxu0 0.0
    %1012 = vmatpush2.msra.mxu0 0.0
    %1013 = vmatprep.subr.mxu0 0.0
    %1014 = vmatpush2.msra.mxu0 0.0
    %1015 = vmatprep.subr.mxu0 0.0
    %1016 = vmatpush2.msra.mxu0 0.0
    %1017 = vmatprep.mubr.f32.mxu0 0.0
    %1018 = vmatmul.mubr.f32.gmra.mxu0 %v952
    %v1019 = vpop.f32.mrf.mxu0
    %v1020 = vadd.f32 0.0, %v1019
    %v1021 = vpop.f32.mrf.mxu0
    %1022 = vdwg.mxu0
    %1023 = vmatprep.subr.mxu0 0.0
    %1024 = vmatpush1.msra.mxu0 %v330
    %1025 = vmatprep.subr.mxu0 0.0
    %1026 = vmatpush1.msra.mxu0 %v329
    %1027 = vmatprep.subr.mxu0 0.0
    %1028 = vmatpush1.msra.mxu0 %v328
    %1029 = vmatprep.subr.mxu0 0.0
    %1030 = vmatpush1.msra.mxu0 %v327
    %1031 = vmatprep.subr.mxu0 0.0
    %1032 = vmatpush1.msra.mxu0 %v326
    %1033 = vmatprep.subr.mxu0 0.0
    %1034 = vmatpush1.msra.mxu0 %v325
    %1035 = vmatprep.subr.mxu0 0.0
    %1036 = vmatpush1.msra.mxu0 %v324
    %1037 = vmatprep.subr.mxu0 0.0
    %1038 = vmatpush1.msra.mxu0 %v323
    %1039 = vmatprep.subr.mxu0 0.0
    %1040 = vmatpush1.msra.mxu0 %v322
    %1041 = vmatprep.subr.mxu0 0.0
    %1042 = vmatpush1.msra.mxu0 %v321
    %1043 = vmatprep.subr.mxu0 0.0
    %1044 = vmatpush1.msra.mxu0 %v320
    %1045 = vmatprep.subr.mxu0 0.0
    %1046 = vmatpush1.msra.mxu0 %v319
    %1047 = vmatprep.subr.mxu0 0.0
    %1048 = vmatpush1.msra.mxu0 %v318
    %1049 = vmatprep.subr.mxu0 0.0
    %1050 = vmatpush1.msra.mxu0 %v317
    %1051 = vmatprep.subr.mxu0 0.0
    %1052 = vmatpush1.msra.mxu0 %v316
    %1053 = vmatprep.subr.mxu0 0.0
    %1054 = vmatpush1.msra.mxu0 %v315
    %1055 = vmatprep.subr.mxu0 0.0
    %1056 = vmatpush2.msra.mxu0 0.0
    %1057 = vmatprep.subr.mxu0 0.0
    %1058 = vmatpush2.msra.mxu0 0.0
    %1059 = vmatprep.subr.mxu0 0.0
    %1060 = vmatpush2.msra.mxu0 0.0
    %1061 = vmatprep.subr.mxu0 0.0
    %1062 = vmatpush2.msra.mxu0 0.0
    %1063 = vmatprep.subr.mxu0 0.0
    %1064 = vmatpush2.msra.mxu0 0.0
    %1065 = vmatprep.subr.mxu0 0.0
    %1066 = vmatpush2.msra.mxu0 0.0
    %1067 = vmatprep.subr.mxu0 0.0
    %1068 = vmatpush2.msra.mxu0 0.0
    %1069 = vmatprep.subr.mxu0 0.0
    %1070 = vmatpush2.msra.mxu0 0.0
    %1071 = vmatprep.subr.mxu0 0.0
    %1072 = vmatpush2.msra.mxu0 0.0
    %1073 = vmatprep.subr.mxu0 0.0
    %1074 = vmatpush2.msra.mxu0 0.0
    %1075 = vmatprep.subr.mxu0 0.0
    %1076 = vmatpush2.msra.mxu0 0.0
    %1077 = vmatprep.subr.mxu0 0.0
    %1078 = vmatpush2.msra.mxu0 0.0
    %1079 = vmatprep.subr.mxu0 0.0
    %1080 = vmatpush2.msra.mxu0 0.0
    %1081 = vmatprep.subr.mxu0 0.0
    %1082 = vmatpush2.msra.mxu0 0.0
    %1083 = vmatprep.subr.mxu0 0.0
    %1084 = vmatpush2.msra.mxu0 0.0
    %1085 = vmatprep.subr.mxu0 0.0
    %1086 = vmatpush2.msra.mxu0 0.0
    %1087 = vmatprep.mubr.f32.mxu0 0.0
    %1088 = vmatmul.mubr.f32.gmra.mxu0 %v791
    %v1089 = vpop.f32.mrf.mxu0
    %v1090 = vadd.f32 %v1020, %v1089
    %v1091 = vpop.f32.mrf.mxu0
    %1092 = vdwg.mxu0
    %v1093 = vadd.f32 %v1090, %v219
    %v1094 = vtanh.pop %v1093
    %s1095 = scalar_lea.vmem [#allocation11], 256
    %v1096 = vld [vmem:[%s1095] sm:$0xff]
    %v1097 = vld [vmem:[%s1095 + $0x8] sm:$0xff]
    %v1098 = vld [vmem:[%s1095 + $0x10] sm:$0xff]
    %v1099 = vld [vmem:[%s1095 + $0x18] sm:$0xff]
    %v1100 = vld [vmem:[%s1095 + $0x20] sm:$0xff]
    %v1101 = vld [vmem:[%s1095 + $0x28] sm:$0xff]
    %v1102 = vld [vmem:[%s1095 + $0x30] sm:$0xff]
    %v1103 = vld [vmem:[%s1095 + $0x38] sm:$0xff]
    %v1104 = vld [vmem:[%s1095 + $0x40] sm:$0xff]
    %v1105 = vld [vmem:[%s1095 + $0x48] sm:$0xff]
    %v1106 = vld [vmem:[%s1095 + $0x50] sm:$0xff]
    %v1107 = vld [vmem:[%s1095 + $0x58] sm:$0xff]
    %v1108 = vld [vmem:[%s1095 + $0x60] sm:$0xff]
    %v1109 = vld [vmem:[%s1095 + $0x68] sm:$0xff]
    %v1110 = vld [vmem:[%s1095 + $0x70] sm:$0xff]
    %v1111 = vld [vmem:[%s1095 + $0x78] sm:$0xff]
    %1112 = vmatprep.subr.mxu0 0.0
    %1113 = vmatpush1.msra.mxu0 %v1111
    %1114 = vmatprep.subr.mxu0 0.0
    %1115 = vmatpush1.msra.mxu0 %v1110
    %1116 = vmatprep.subr.mxu0 0.0
    %1117 = vmatpush1.msra.mxu0 %v1109
    %1118 = vmatprep.subr.mxu0 0.0
    %1119 = vmatpush1.msra.mxu0 %v1108
    %1120 = vmatprep.subr.mxu0 0.0
    %1121 = vmatpush1.msra.mxu0 %v1107
    %1122 = vmatprep.subr.mxu0 0.0
    %1123 = vmatpush1.msra.mxu0 %v1106
    %1124 = vmatprep.subr.mxu0 0.0
    %1125 = vmatpush1.msra.mxu0 %v1105
    %1126 = vmatprep.subr.mxu0 0.0
    %1127 = vmatpush1.msra.mxu0 %v1104
    %1128 = vmatprep.subr.mxu0 0.0
    %1129 = vmatpush1.msra.mxu0 %v1103
    %1130 = vmatprep.subr.mxu0 0.0
    %1131 = vmatpush1.msra.mxu0 %v1102
    %1132 = vmatprep.subr.mxu0 0.0
    %1133 = vmatpush1.msra.mxu0 %v1101
    %1134 = vmatprep.subr.mxu0 0.0
    %1135 = vmatpush1.msra.mxu0 %v1100
    %1136 = vmatprep.subr.mxu0 0.0
    %1137 = vmatpush1.msra.mxu0 %v1099
    %1138 = vmatprep.subr.mxu0 0.0
    %1139 = vmatpush1.msra.mxu0 %v1098
    %1140 = vmatprep.subr.mxu0 0.0
    %1141 = vmatpush1.msra.mxu0 %v1097
    %1142 = vmatprep.subr.mxu0 0.0
    %1143 = vmatpush1.msra.mxu0 %v1096
    %1144 = vmatprep.subr.mxu0 0.0
    %1145 = vmatpush2.msra.mxu0 0.0
    %1146 = vmatprep.subr.mxu0 0.0
    %1147 = vmatpush2.msra.mxu0 0.0
    %1148 = vmatprep.subr.mxu0 0.0
    %1149 = vmatpush2.msra.mxu0 0.0
    %1150 = vmatprep.subr.mxu0 0.0
    %1151 = vmatpush2.msra.mxu0 0.0
    %1152 = vmatprep.subr.mxu0 0.0
    %1153 = vmatpush2.msra.mxu0 0.0
    %1154 = vmatprep.subr.mxu0 0.0
    %1155 = vmatpush2.msra.mxu0 0.0
    %1156 = vmatprep.subr.mxu0 0.0
    %1157 = vmatpush2.msra.mxu0 0.0
    %1158 = vmatprep.subr.mxu0 0.0
    %1159 = vmatpush2.msra.mxu0 0.0
    %1160 = vmatprep.subr.mxu0 0.0
    %1161 = vmatpush2.msra.mxu0 0.0
    %1162 = vmatprep.subr.mxu0 0.0
    %1163 = vmatpush2.msra.mxu0 0.0
    %1164 = vmatprep.subr.mxu0 0.0
    %1165 = vmatpush2.msra.mxu0 0.0
    %1166 = vmatprep.subr.mxu0 0.0
    %1167 = vmatpush2.msra.mxu0 0.0
    %1168 = vmatprep.subr.mxu0 0.0
    %1169 = vmatpush2.msra.mxu0 0.0
    %1170 = vmatprep.subr.mxu0 0.0
    %1171 = vmatpush2.msra.mxu0 0.0
    %1172 = vmatprep.subr.mxu0 0.0
    %1173 = vmatpush2.msra.mxu0 0.0
    %1174 = vmatprep.subr.mxu0 0.0
    %1175 = vmatpush2.msra.mxu0 0.0
    %1176 = vmatprep.mubr.f32.mxu0 0.0
    %1177 = vmatmul.mubr.f32.gmra.mxu0 %v1094
    %v1178 = vpop.f32.mrf.mxu0
    %v1179 = vadd.f32 0.0, %v1178
    %v1180 = vpop.f32.mrf.mxu0
    %1181 = vdwg.mxu0
    %v1182 = vadd.f32 %v879, %v1179
    %v1183 = vrot.slane %v206, 6
    %1185 = vmatprep.subr.mxu0 0.0
    %1186 = vmatpush1.msra.mxu0 %v243
    %1187 = vmatprep.subr.mxu0 0.0
    %1188 = vmatpush1.msra.mxu0 %v242
    %1189 = vmatprep.subr.mxu0 0.0
    %1190 = vmatpush1.msra.mxu0 %v241
    %1191 = vmatprep.subr.mxu0 0.0
    %1192 = vmatpush1.msra.mxu0 %v240
    %1193 = vmatprep.subr.mxu0 0.0
    %1194 = vmatpush1.msra.mxu0 %v239
    %1195 = vmatprep.subr.mxu0 0.0
    %1196 = vmatpush1.msra.mxu0 %v238
    %1197 = vmatprep.subr.mxu0 0.0
    %1198 = vmatpush1.msra.mxu0 %v237
    %1199 = vmatprep.subr.mxu0 0.0
    %1200 = vmatpush1.msra.mxu0 %v236
    %1201 = vmatprep.subr.mxu0 0.0
    %1202 = vmatpush1.msra.mxu0 %v235
    %1203 = vmatprep.subr.mxu0 0.0
    %1204 = vmatpush1.msra.mxu0 %v234
    %1205 = vmatprep.subr.mxu0 0.0
    %1206 = vmatpush1.msra.mxu0 %v233
    %1207 = vmatprep.subr.mxu0 0.0
    %1208 = vmatpush1.msra.mxu0 %v232
    %1209 = vmatprep.subr.mxu0 0.0
    %1210 = vmatpush1.msra.mxu0 %v231
    %1211 = vmatprep.subr.mxu0 0.0
    %1212 = vmatpush1.msra.mxu0 %v230
    %1213 = vmatprep.subr.mxu0 0.0
    %1214 = vmatpush1.msra.mxu0 %v229
    %1215 = vmatprep.subr.mxu0 0.0
    %1216 = vmatpush1.msra.mxu0 %v228
    %1217 = vmatprep.subr.mxu0 0.0
    %1218 = vmatpush2.msra.mxu0 0.0
    %1219 = vmatprep.subr.mxu0 0.0
    %1220 = vmatpush2.msra.mxu0 0.0
    %1221 = vmatprep.subr.mxu0 0.0
    %1222 = vmatpush2.msra.mxu0 0.0
    %1223 = vmatprep.subr.mxu0 0.0
    %1224 = vmatpush2.msra.mxu0 0.0
    %1225 = vmatprep.subr.mxu0 0.0
    %1226 = vmatpush2.msra.mxu0 0.0
    %1227 = vmatprep.subr.mxu0 0.0
    %1228 = vmatpush2.msra.mxu0 0.0
    %1229 = vmatprep.subr.mxu0 0.0
    %1230 = vmatpush2.msra.mxu0 0.0
    %1231 = vmatprep.subr.mxu0 0.0
    %1232 = vmatpush2.msra.mxu0 0.0
    %1233 = vmatprep.subr.mxu0 0.0
    %1234 = vmatpush2.msra.mxu0 0.0
    %1235 = vmatprep.subr.mxu0 0.0
    %1236 = vmatpush2.msra.mxu0 0.0
    %1237 = vmatprep.subr.mxu0 0.0
    %1238 = vmatpush2.msra.mxu0 0.0
    %1239 = vmatprep.subr.mxu0 0.0
    %1240 = vmatpush2.msra.mxu0 0.0
    %1241 = vmatprep.subr.mxu0 0.0
    %1242 = vmatpush2.msra.mxu0 0.0
    %1243 = vmatprep.subr.mxu0 0.0
    %1244 = vmatpush2.msra.mxu0 0.0
    %1245 = vmatprep.subr.mxu0 0.0
    %1246 = vmatpush2.msra.mxu0 0.0
    %1247 = vmatprep.subr.mxu0 0.0
    %1248 = vmatpush2.msra.mxu0 0.0
    %1249 = vmatprep.mubr.f32.mxu0 0.0
    %1250 = vmatmul.mubr.f32.gmra.mxu0 %v952
    %v1251 = vpop.f32.mrf.mxu0
    %v1252 = vadd.f32 %v1183, %v1251
    %v1253 = vpop.f32.mrf.mxu0
    %1254 = vdwg.mxu0
    %v1255 = vtanh.pop %v1252
    %1256 = vmatprep.subr.mxu0 0.0
    %1257 = vmatpush1.msra.mxu0 %v346
    %1258 = vmatprep.subr.mxu0 0.0
    %1259 = vmatpush1.msra.mxu0 %v345
    %1260 = vmatprep.subr.mxu0 0.0
    %1261 = vmatpush1.msra.mxu0 %v344
    %1262 = vmatprep.subr.mxu0 0.0
    %1263 = vmatpush1.msra.mxu0 %v343
    %1264 = vmatprep.subr.mxu0 0.0
    %1265 = vmatpush1.msra.mxu0 %v342
    %1266 = vmatprep.subr.mxu0 0.0
    %1267 = vmatpush1.msra.mxu0 %v341
    %1268 = vmatprep.subr.mxu0 0.0
    %1269 = vmatpush1.msra.mxu0 %v340
    %1270 = vmatprep.subr.mxu0 0.0
    %1271 = vmatpush1.msra.mxu0 %v339
    %1272 = vmatprep.subr.mxu0 0.0
    %1273 = vmatpush1.msra.mxu0 %v338
    %1274 = vmatprep.subr.mxu0 0.0
    %1275 = vmatpush1.msra.mxu0 %v337
    %1276 = vmatprep.subr.mxu0 0.0
    %1277 = vmatpush1.msra.mxu0 %v336
    %1278 = vmatprep.subr.mxu0 0.0
    %1279 = vmatpush1.msra.mxu0 %v335
    %1280 = vmatprep.subr.mxu0 0.0
    %1281 = vmatpush1.msra.mxu0 %v334
    %1282 = vmatprep.subr.mxu0 0.0
    %1283 = vmatpush1.msra.mxu0 %v333
    %1284 = vmatprep.subr.mxu0 0.0
    %1285 = vmatpush1.msra.mxu0 %v332
    %1286 = vmatprep.subr.mxu0 0.0
    %1287 = vmatpush1.msra.mxu0 %v331
    %1288 = vmatprep.subr.mxu0 0.0
    %1289 = vmatpush2.msra.mxu0 0.0
    %1290 = vmatprep.subr.mxu0 0.0
    %1291 = vmatpush2.msra.mxu0 0.0
    %1292 = vmatprep.subr.mxu0 0.0
    %1293 = vmatpush2.msra.mxu0 0.0
    %1294 = vmatprep.subr.mxu0 0.0
    %1295 = vmatpush2.msra.mxu0 0.0
    %1296 = vmatprep.subr.mxu0 0.0
    %1297 = vmatpush2.msra.mxu0 0.0
    %1298 = vmatprep.subr.mxu0 0.0
    %1299 = vmatpush2.msra.mxu0 0.0
    %1300 = vmatprep.subr.mxu0 0.0
    %1301 = vmatpush2.msra.mxu0 0.0
    %1302 = vmatprep.subr.mxu0 0.0
    %1303 = vmatpush2.msra.mxu0 0.0
    %1304 = vmatprep.subr.mxu0 0.0
    %1305 = vmatpush2.msra.mxu0 0.0
    %1306 = vmatprep.subr.mxu0 0.0
    %1307 = vmatpush2.msra.mxu0 0.0
    %1308 = vmatprep.subr.mxu0 0.0
    %1309 = vmatpush2.msra.mxu0 0.0
    %1310 = vmatprep.subr.mxu0 0.0
    %1311 = vmatpush2.msra.mxu0 0.0
    %1312 = vmatprep.subr.mxu0 0.0
    %1313 = vmatpush2.msra.mxu0 0.0
    %1314 = vmatprep.subr.mxu0 0.0
    %1315 = vmatpush2.msra.mxu0 0.0
    %1316 = vmatprep.subr.mxu0 0.0
    %1317 = vmatpush2.msra.mxu0 0.0
    %1318 = vmatprep.subr.mxu0 0.0
    %1319 = vmatpush2.msra.mxu0 0.0
    %1320 = vmatprep.mubr.f32.mxu0 0.0
    %1321 = vmatmul.mubr.f32.gmra.mxu0 %v1255
    %v1322 = vpop.f32.mrf.mxu0
    %v1323 = vadd.f32 0.0, %v1322
    %v1324 = vpop.f32.mrf.mxu0
    %1325 = vdwg.mxu0
    %1326 = vmatprep.subr.mxu0 0.0
    %1327 = vmatpush1.msra.mxu0 %v330
    %1328 = vmatprep.subr.mxu0 0.0
    %1329 = vmatpush1.msra.mxu0 %v329
    %1330 = vmatprep.subr.mxu0 0.0
    %1331 = vmatpush1.msra.mxu0 %v328
    %1332 = vmatprep.subr.mxu0 0.0
    %1333 = vmatpush1.msra.mxu0 %v327
    %1334 = vmatprep.subr.mxu0 0.0
    %1335 = vmatpush1.msra.mxu0 %v326
    %1336 = vmatprep.subr.mxu0 0.0
    %1337 = vmatpush1.msra.mxu0 %v325
    %1338 = vmatprep.subr.mxu0 0.0
    %1339 = vmatpush1.msra.mxu0 %v324
    %1340 = vmatprep.subr.mxu0 0.0
    %1341 = vmatpush1.msra.mxu0 %v323
    %1342 = vmatprep.subr.mxu0 0.0
    %1343 = vmatpush1.msra.mxu0 %v322
    %1344 = vmatprep.subr.mxu0 0.0
    %1345 = vmatpush1.msra.mxu0 %v321
    %1346 = vmatprep.subr.mxu0 0.0
    %1347 = vmatpush1.msra.mxu0 %v320
    %1348 = vmatprep.subr.mxu0 0.0
    %1349 = vmatpush1.msra.mxu0 %v319
    %1350 = vmatprep.subr.mxu0 0.0
    %1351 = vmatpush1.msra.mxu0 %v318
    %1352 = vmatprep.subr.mxu0 0.0
    %1353 = vmatpush1.msra.mxu0 %v317
    %1354 = vmatprep.subr.mxu0 0.0
    %1355 = vmatpush1.msra.mxu0 %v316
    %1356 = vmatprep.subr.mxu0 0.0
    %1357 = vmatpush1.msra.mxu0 %v315
    %1358 = vmatprep.subr.mxu0 0.0
    %1359 = vmatpush2.msra.mxu0 0.0
    %1360 = vmatprep.subr.mxu0 0.0
    %1361 = vmatpush2.msra.mxu0 0.0
    %1362 = vmatprep.subr.mxu0 0.0
    %1363 = vmatpush2.msra.mxu0 0.0
    %1364 = vmatprep.subr.mxu0 0.0
    %1365 = vmatpush2.msra.mxu0 0.0
    %1366 = vmatprep.subr.mxu0 0.0
    %1367 = vmatpush2.msra.mxu0 0.0
    %1368 = vmatprep.subr.mxu0 0.0
    %1369 = vmatpush2.msra.mxu0 0.0
    %1370 = vmatprep.subr.mxu0 0.0
    %1371 = vmatpush2.msra.mxu0 0.0
    %1372 = vmatprep.subr.mxu0 0.0
    %1373 = vmatpush2.msra.mxu0 0.0
    %1374 = vmatprep.subr.mxu0 0.0
    %1375 = vmatpush2.msra.mxu0 0.0
    %1376 = vmatprep.subr.mxu0 0.0
    %1377 = vmatpush2.msra.mxu0 0.0
    %1378 = vmatprep.subr.mxu0 0.0
    %1379 = vmatpush2.msra.mxu0 0.0
    %1380 = vmatprep.subr.mxu0 0.0
    %1381 = vmatpush2.msra.mxu0 0.0
    %1382 = vmatprep.subr.mxu0 0.0
    %1383 = vmatpush2.msra.mxu0 0.0
    %1384 = vmatprep.subr.mxu0 0.0
    %1385 = vmatpush2.msra.mxu0 0.0
    %1386 = vmatprep.subr.mxu0 0.0
    %1387 = vmatpush2.msra.mxu0 0.0
    %1388 = vmatprep.subr.mxu0 0.0
    %1389 = vmatpush2.msra.mxu0 0.0
    %1390 = vmatprep.mubr.f32.mxu0 0.0
    %1391 = vmatmul.mubr.f32.gmra.mxu0 %v1094
    %v1392 = vpop.f32.mrf.mxu0
    %v1393 = vadd.f32 %v1323, %v1392
    %v1394 = vpop.f32.mrf.mxu0
    %1395 = vdwg.mxu0
    %v1396 = vadd.f32 %v1393, %v219
    %v1397 = vtanh.pop %v1396
    %s1398 = scalar_lea.vmem [#allocation11], 384
    %v1399 = vld [vmem:[%s1398] sm:$0xff]
    %v1400 = vld [vmem:[%s1398 + $0x8] sm:$0xff]
    %v1401 = vld [vmem:[%s1398 + $0x10] sm:$0xff]
    %v1402 = vld [vmem:[%s1398 + $0x18] sm:$0xff]
    %v1403 = vld [vmem:[%s1398 + $0x20] sm:$0xff]
    %v1404 = vld [vmem:[%s1398 + $0x28] sm:$0xff]
    %v1405 = vld [vmem:[%s1398 + $0x30] sm:$0xff]
    %v1406 = vld [vmem:[%s1398 + $0x38] sm:$0xff]
    %v1407 = vld [vmem:[%s1398 + $0x40] sm:$0xff]
    %v1408 = vld [vmem:[%s1398 + $0x48] sm:$0xff]
    %v1409 = vld [vmem:[%s1398 + $0x50] sm:$0xff]
    %v1410 = vld [vmem:[%s1398 + $0x58] sm:$0xff]
    %v1411 = vld [vmem:[%s1398 + $0x60] sm:$0xff]
    %v1412 = vld [vmem:[%s1398 + $0x68] sm:$0xff]
    %v1413 = vld [vmem:[%s1398 + $0x70] sm:$0xff]
    %v1414 = vld [vmem:[%s1398 + $0x78] sm:$0xff]
    %1415 = vmatprep.subr.mxu0 0.0
    %1416 = vmatpush1.msra.mxu0 %v1414
    %1417 = vmatprep.subr.mxu0 0.0
    %1418 = vmatpush1.msra.mxu0 %v1413
    %1419 = vmatprep.subr.mxu0 0.0
    %1420 = vmatpush1.msra.mxu0 %v1412
    %1421 = vmatprep.subr.mxu0 0.0
    %1422 = vmatpush1.msra.mxu0 %v1411
    %1423 = vmatprep.subr.mxu0 0.0
    %1424 = vmatpush1.msra.mxu0 %v1410
    %1425 = vmatprep.subr.mxu0 0.0
    %1426 = vmatpush1.msra.mxu0 %v1409
    %1427 = vmatprep.subr.mxu0 0.0
    %1428 = vmatpush1.msra.mxu0 %v1408
    %1429 = vmatprep.subr.mxu0 0.0
    %1430 = vmatpush1.msra.mxu0 %v1407
    %1431 = vmatprep.subr.mxu0 0.0
    %1432 = vmatpush1.msra.mxu0 %v1406
    %1433 = vmatprep.subr.mxu0 0.0
    %1434 = vmatpush1.msra.mxu0 %v1405
    %1435 = vmatprep.subr.mxu0 0.0
    %1436 = vmatpush1.msra.mxu0 %v1404
    %1437 = vmatprep.subr.mxu0 0.0
    %1438 = vmatpush1.msra.mxu0 %v1403
    %1439 = vmatprep.subr.mxu0 0.0
    %1440 = vmatpush1.msra.mxu0 %v1402
    %1441 = vmatprep.subr.mxu0 0.0
    %1442 = vmatpush1.msra.mxu0 %v1401
    %1443 = vmatprep.subr.mxu0 0.0
    %1444 = vmatpush1.msra.mxu0 %v1400
    %1445 = vmatprep.subr.mxu0 0.0
    %1446 = vmatpush1.msra.mxu0 %v1399
    %1447 = vmatprep.subr.mxu0 0.0
    %1448 = vmatpush2.msra.mxu0 0.0
    %1449 = vmatprep.subr.mxu0 0.0
    %1450 = vmatpush2.msra.mxu0 0.0
    %1451 = vmatprep.subr.mxu0 0.0
    %1452 = vmatpush2.msra.mxu0 0.0
    %1453 = vmatprep.subr.mxu0 0.0
    %1454 = vmatpush2.msra.mxu0 0.0
    %1455 = vmatprep.subr.mxu0 0.0
    %1456 = vmatpush2.msra.mxu0 0.0
    %1457 = vmatprep.subr.mxu0 0.0
    %1458 = vmatpush2.msra.mxu0 0.0
    %1459 = vmatprep.subr.mxu0 0.0
    %1460 = vmatpush2.msra.mxu0 0.0
    %1461 = vmatprep.subr.mxu0 0.0
    %1462 = vmatpush2.msra.mxu0 0.0
    %1463 = vmatprep.subr.mxu0 0.0
    %1464 = vmatpush2.msra.mxu0 0.0
    %1465 = vmatprep.subr.mxu0 0.0
    %1466 = vmatpush2.msra.mxu0 0.0
    %1467 = vmatprep.subr.mxu0 0.0
    %1468 = vmatpush2.msra.mxu0 0.0
    %1469 = vmatprep.subr.mxu0 0.0
    %1470 = vmatpush2.msra.mxu0 0.0
    %1471 = vmatprep.subr.mxu0 0.0
    %1472 = vmatpush2.msra.mxu0 0.0
    %1473 = vmatprep.subr.mxu0 0.0
    %1474 = vmatpush2.msra.mxu0 0.0
    %1475 = vmatprep.subr.mxu0 0.0
    %1476 = vmatpush2.msra.mxu0 0.0
    %1477 = vmatprep.subr.mxu0 0.0
    %1478 = vmatpush2.msra.mxu0 0.0
    %1479 = vmatprep.mubr.f32.mxu0 0.0
    %1480 = vmatmul.mubr.f32.gmra.mxu0 %v1397
    %v1481 = vpop.f32.mrf.mxu0
    %v1482 = vadd.f32 0.0, %v1481
    %v1483 = vpop.f32.mrf.mxu0
    %1484 = vdwg.mxu0
    %v1485 = vadd.f32 %v1182, %v1482
    %1486 = vmatprep.subr.mxu0 0.0
    %1487 = vmatpush1.msra.mxu0 %v243
    %1488 = vmatprep.subr.mxu0 0.0
    %1489 = vmatpush1.msra.mxu0 %v242
    %1490 = vmatprep.subr.mxu0 0.0
    %1491 = vmatpush1.msra.mxu0 %v241
    %1492 = vmatprep.subr.mxu0 0.0
    %1493 = vmatpush1.msra.mxu0 %v240
    %1494 = vmatprep.subr.mxu0 0.0
    %1495 = vmatpush1.msra.mxu0 %v239
    %1496 = vmatprep.subr.mxu0 0.0
    %1497 = vmatpush1.msra.mxu0 %v238
    %1498 = vmatprep.subr.mxu0 0.0
    %1499 = vmatpush1.msra.mxu0 %v237
    %1500 = vmatprep.subr.mxu0 0.0
    %1501 = vmatpush1.msra.mxu0 %v236
    %1502 = vmatprep.subr.mxu0 0.0
    %1503 = vmatpush1.msra.mxu0 %v235
    %1504 = vmatprep.subr.mxu0 0.0
    %1505 = vmatpush1.msra.mxu0 %v234
    %1506 = vmatprep.subr.mxu0 0.0
    %1507 = vmatpush1.msra.mxu0 %v233
    %1508 = vmatprep.subr.mxu0 0.0
    %1509 = vmatpush1.msra.mxu0 %v232
    %1510 = vmatprep.subr.mxu0 0.0
    %1511 = vmatpush1.msra.mxu0 %v231
    %1512 = vmatprep.subr.mxu0 0.0
    %1513 = vmatpush1.msra.mxu0 %v230
    %1514 = vmatprep.subr.mxu0 0.0
    %1515 = vmatpush1.msra.mxu0 %v229
    %1516 = vmatprep.subr.mxu0 0.0
    %1517 = vmatpush1.msra.mxu0 %v228
    %1518 = vmatprep.subr.mxu0 0.0
    %1519 = vmatpush2.msra.mxu0 0.0
    %1520 = vmatprep.subr.mxu0 0.0
    %1521 = vmatpush2.msra.mxu0 0.0
    %1522 = vmatprep.subr.mxu0 0.0
    %1523 = vmatpush2.msra.mxu0 0.0
    %1524 = vmatprep.subr.mxu0 0.0
    %1525 = vmatpush2.msra.mxu0 0.0
    %1526 = vmatprep.subr.mxu0 0.0
    %1527 = vmatpush2.msra.mxu0 0.0
    %1528 = vmatprep.subr.mxu0 0.0
    %1529 = vmatpush2.msra.mxu0 0.0
    %1530 = vmatprep.subr.mxu0 0.0
    %1531 = vmatpush2.msra.mxu0 0.0
    %1532 = vmatprep.subr.mxu0 0.0
    %1533 = vmatpush2.msra.mxu0 0.0
    %1534 = vmatprep.subr.mxu0 0.0
    %1535 = vmatpush2.msra.mxu0 0.0
    %1536 = vmatprep.subr.mxu0 0.0
    %1537 = vmatpush2.msra.mxu0 0.0
    %1538 = vmatprep.subr.mxu0 0.0
    %1539 = vmatpush2.msra.mxu0 0.0
    %1540 = vmatprep.subr.mxu0 0.0
    %1541 = vmatpush2.msra.mxu0 0.0
    %1542 = vmatprep.subr.mxu0 0.0
    %1543 = vmatpush2.msra.mxu0 0.0
    %1544 = vmatprep.subr.mxu0 0.0
    %1545 = vmatpush2.msra.mxu0 0.0
    %1546 = vmatprep.subr.mxu0 0.0
    %1547 = vmatpush2.msra.mxu0 0.0
    %1548 = vmatprep.subr.mxu0 0.0
    %1549 = vmatpush2.msra.mxu0 0.0
    %1550 = vmatprep.mubr.f32.mxu0 0.0
    %1551 = vmatmul.mubr.f32.gmra.mxu0 %v1255
    %v1552 = vpop.f32.mrf.mxu0
    %v1553 = vadd.f32 %v211, %v1552
    %v1554 = vpop.f32.mrf.mxu0
    %1555 = vdwg.mxu0
    %v1556 = vtanh.pop %v1553
    %1557 = vmatprep.subr.mxu0 0.0
    %1558 = vmatpush1.msra.mxu0 %v346
    %1559 = vmatprep.subr.mxu0 0.0
    %1560 = vmatpush1.msra.mxu0 %v345
    %1561 = vmatprep.subr.mxu0 0.0
    %1562 = vmatpush1.msra.mxu0 %v344
    %1563 = vmatprep.subr.mxu0 0.0
    %1564 = vmatpush1.msra.mxu0 %v343
    %1565 = vmatprep.subr.mxu0 0.0
    %1566 = vmatpush1.msra.mxu0 %v342
    %1567 = vmatprep.subr.mxu0 0.0
    %1568 = vmatpush1.msra.mxu0 %v341
    %1569 = vmatprep.subr.mxu0 0.0
    %1570 = vmatpush1.msra.mxu0 %v340
    %1571 = vmatprep.subr.mxu0 0.0
    %1572 = vmatpush1.msra.mxu0 %v339
    %1573 = vmatprep.subr.mxu0 0.0
    %1574 = vmatpush1.msra.mxu0 %v338
    %1575 = vmatprep.subr.mxu0 0.0
    %1576 = vmatpush1.msra.mxu0 %v337
    %1577 = vmatprep.subr.mxu0 0.0
    %1578 = vmatpush1.msra.mxu0 %v336
    %1579 = vmatprep.subr.mxu0 0.0
    %1580 = vmatpush1.msra.mxu0 %v335
    %1581 = vmatprep.subr.mxu0 0.0
    %1582 = vmatpush1.msra.mxu0 %v334
    %1583 = vmatprep.subr.mxu0 0.0
    %1584 = vmatpush1.msra.mxu0 %v333
    %1585 = vmatprep.subr.mxu0 0.0
    %1586 = vmatpush1.msra.mxu0 %v332
    %1587 = vmatprep.subr.mxu0 0.0
    %1588 = vmatpush1.msra.mxu0 %v331
    %1589 = vmatprep.subr.mxu0 0.0
    %1590 = vmatpush2.msra.mxu0 0.0
    %1591 = vmatprep.subr.mxu0 0.0
    %1592 = vmatpush2.msra.mxu0 0.0
    %1593 = vmatprep.subr.mxu0 0.0
    %1594 = vmatpush2.msra.mxu0 0.0
    %1595 = vmatprep.subr.mxu0 0.0
    %1596 = vmatpush2.msra.mxu0 0.0
    %1597 = vmatprep.subr.mxu0 0.0
    %1598 = vmatpush2.msra.mxu0 0.0
    %1599 = vmatprep.subr.mxu0 0.0
    %1600 = vmatpush2.msra.mxu0 0.0
    %1601 = vmatprep.subr.mxu0 0.0
    %1602 = vmatpush2.msra.mxu0 0.0
    %1603 = vmatprep.subr.mxu0 0.0
    %1604 = vmatpush2.msra.mxu0 0.0
    %1605 = vmatprep.subr.mxu0 0.0
    %1606 = vmatpush2.msra.mxu0 0.0
    %1607 = vmatprep.subr.mxu0 0.0
    %1608 = vmatpush2.msra.mxu0 0.0
    %1609 = vmatprep.subr.mxu0 0.0
    %1610 = vmatpush2.msra.mxu0 0.0
    %1611 = vmatprep.subr.mxu0 0.0
    %1612 = vmatpush2.msra.mxu0 0.0
    %1613 = vmatprep.subr.mxu0 0.0
    %1614 = vmatpush2.msra.mxu0 0.0
    %1615 = vmatprep.subr.mxu0 0.0
    %1616 = vmatpush2.msra.mxu0 0.0
    %1617 = vmatprep.subr.mxu0 0.0
    %1618 = vmatpush2.msra.mxu0 0.0
    %1619 = vmatprep.subr.mxu0 0.0
    %1620 = vmatpush2.msra.mxu0 0.0
    %1621 = vmatprep.mubr.f32.mxu0 0.0
    %1622 = vmatmul.mubr.f32.gmra.mxu0 %v1556
    %v1623 = vpop.f32.mrf.mxu0
    %v1624 = vadd.f32 0.0, %v1623
    %v1625 = vpop.f32.mrf.mxu0
    %1626 = vdwg.mxu0
    %1627 = vmatprep.subr.mxu0 0.0
    %1628 = vmatpush1.msra.mxu0 %v330
    %1629 = vmatprep.subr.mxu0 0.0
    %1630 = vmatpush1.msra.mxu0 %v329
    %1631 = vmatprep.subr.mxu0 0.0
    %1632 = vmatpush1.msra.mxu0 %v328
    %1633 = vmatprep.subr.mxu0 0.0
    %1634 = vmatpush1.msra.mxu0 %v327
    %1635 = vmatprep.subr.mxu0 0.0
    %1636 = vmatpush1.msra.mxu0 %v326
    %1637 = vmatprep.subr.mxu0 0.0
    %1638 = vmatpush1.msra.mxu0 %v325
    %1639 = vmatprep.subr.mxu0 0.0
    %1640 = vmatpush1.msra.mxu0 %v324
    %1641 = vmatprep.subr.mxu0 0.0
    %1642 = vmatpush1.msra.mxu0 %v323
    %1643 = vmatprep.subr.mxu0 0.0
    %1644 = vmatpush1.msra.mxu0 %v322
    %1645 = vmatprep.subr.mxu0 0.0
    %1646 = vmatpush1.msra.mxu0 %v321
    %1647 = vmatprep.subr.mxu0 0.0
    %1648 = vmatpush1.msra.mxu0 %v320
    %1649 = vmatprep.subr.mxu0 0.0
    %1650 = vmatpush1.msra.mxu0 %v319
    %1651 = vmatprep.subr.mxu0 0.0
    %1652 = vmatpush1.msra.mxu0 %v318
    %1653 = vmatprep.subr.mxu0 0.0
    %1654 = vmatpush1.msra.mxu0 %v317
    %1655 = vmatprep.subr.mxu0 0.0
    %1656 = vmatpush1.msra.mxu0 %v316
    %1657 = vmatprep.subr.mxu0 0.0
    %1658 = vmatpush1.msra.mxu0 %v315
    %1659 = vmatprep.subr.mxu0 0.0
    %1660 = vmatpush2.msra.mxu0 0.0
    %1661 = vmatprep.subr.mxu0 0.0
    %1662 = vmatpush2.msra.mxu0 0.0
    %1663 = vmatprep.subr.mxu0 0.0
    %1664 = vmatpush2.msra.mxu0 0.0
    %1665 = vmatprep.subr.mxu0 0.0
    %1666 = vmatpush2.msra.mxu0 0.0
    %1667 = vmatprep.subr.mxu0 0.0
    %1668 = vmatpush2.msra.mxu0 0.0
    %1669 = vmatprep.subr.mxu0 0.0
    %1670 = vmatpush2.msra.mxu0 0.0
    %1671 = vmatprep.subr.mxu0 0.0
    %1672 = vmatpush2.msra.mxu0 0.0
    %1673 = vmatprep.subr.mxu0 0.0
    %1674 = vmatpush2.msra.mxu0 0.0
    %1675 = vmatprep.subr.mxu0 0.0
    %1676 = vmatpush2.msra.mxu0 0.0
    %1677 = vmatprep.subr.mxu0 0.0
    %1678 = vmatpush2.msra.mxu0 0.0
    %1679 = vmatprep.subr.mxu0 0.0
    %1680 = vmatpush2.msra.mxu0 0.0
    %1681 = vmatprep.subr.mxu0 0.0
    %1682 = vmatpush2.msra.mxu0 0.0
    %1683 = vmatprep.subr.mxu0 0.0
    %1684 = vmatpush2.msra.mxu0 0.0
    %1685 = vmatprep.subr.mxu0 0.0
    %1686 = vmatpush2.msra.mxu0 0.0
    %1687 = vmatprep.subr.mxu0 0.0
    %1688 = vmatpush2.msra.mxu0 0.0
    %1689 = vmatprep.subr.mxu0 0.0
    %1690 = vmatpush2.msra.mxu0 0.0
    %1691 = vmatprep.mubr.f32.mxu0 0.0
    %1692 = vmatmul.mubr.f32.gmra.mxu0 %v1397
    %v1693 = vpop.f32.mrf.mxu0
    %v1694 = vadd.f32 %v1624, %v1693
    %v1695 = vpop.f32.mrf.mxu0
    %1696 = vdwg.mxu0
    %v1697 = vadd.f32 %v1694, %v219
    %v1698 = vtanh.pop %v1697
    %s1699 = scalar_lea.vmem [#allocation11], 512
    %v1700 = vld [vmem:[%s1699] sm:$0xff]
    %v1701 = vld [vmem:[%s1699 + $0x8] sm:$0xff]
    %v1702 = vld [vmem:[%s1699 + $0x10] sm:$0xff]
    %v1703 = vld [vmem:[%s1699 + $0x18] sm:$0xff]
    %v1704 = vld [vmem:[%s1699 + $0x20] sm:$0xff]
    %v1705 = vld [vmem:[%s1699 + $0x28] sm:$0xff]
    %v1706 = vld [vmem:[%s1699 + $0x30] sm:$0xff]
    %v1707 = vld [vmem:[%s1699 + $0x38] sm:$0xff]
    %v1708 = vld [vmem:[%s1699 + $0x40] sm:$0xff]
    %v1709 = vld [vmem:[%s1699 + $0x48] sm:$0xff]
    %v1710 = vld [vmem:[%s1699 + $0x50] sm:$0xff]
    %v1711 = vld [vmem:[%s1699 + $0x58] sm:$0xff]
    %v1712 = vld [vmem:[%s1699 + $0x60] sm:$0xff]
    %v1713 = vld [vmem:[%s1699 + $0x68] sm:$0xff]
    %v1714 = vld [vmem:[%s1699 + $0x70] sm:$0xff]
    %v1715 = vld [vmem:[%s1699 + $0x78] sm:$0xff]
    %1716 = vmatprep.subr.mxu0 0.0
    %1717 = vmatpush1.msra.mxu0 %v1715
    %1718 = vmatprep.subr.mxu0 0.0
    %1719 = vmatpush1.msra.mxu0 %v1714
    %1720 = vmatprep.subr.mxu0 0.0
    %1721 = vmatpush1.msra.mxu0 %v1713
    %1722 = vmatprep.subr.mxu0 0.0
    %1723 = vmatpush1.msra.mxu0 %v1712
    %1724 = vmatprep.subr.mxu0 0.0
    %1725 = vmatpush1.msra.mxu0 %v1711
    %1726 = vmatprep.subr.mxu0 0.0
    %1727 = vmatpush1.msra.mxu0 %v1710
    %1728 = vmatprep.subr.mxu0 0.0
    %1729 = vmatpush1.msra.mxu0 %v1709
    %1730 = vmatprep.subr.mxu0 0.0
    %1731 = vmatpush1.msra.mxu0 %v1708
    %1732 = vmatprep.subr.mxu0 0.0
    %1733 = vmatpush1.msra.mxu0 %v1707
    %1734 = vmatprep.subr.mxu0 0.0
    %1735 = vmatpush1.msra.mxu0 %v1706
    %1736 = vmatprep.subr.mxu0 0.0
    %1737 = vmatpush1.msra.mxu0 %v1705
    %1738 = vmatprep.subr.mxu0 0.0
    %1739 = vmatpush1.msra.mxu0 %v1704
    %1740 = vmatprep.subr.mxu0 0.0
    %1741 = vmatpush1.msra.mxu0 %v1703
    %1742 = vmatprep.subr.mxu0 0.0
    %1743 = vmatpush1.msra.mxu0 %v1702
    %1744 = vmatprep.subr.mxu0 0.0
    %1745 = vmatpush1.msra.mxu0 %v1701
    %1746 = vmatprep.subr.mxu0 0.0
    %1747 = vmatpush1.msra.mxu0 %v1700
    %1748 = vmatprep.subr.mxu0 0.0
    %1749 = vmatpush2.msra.mxu0 0.0
    %1750 = vmatprep.subr.mxu0 0.0
    %1751 = vmatpush2.msra.mxu0 0.0
    %1752 = vmatprep.subr.mxu0 0.0
    %1753 = vmatpush2.msra.mxu0 0.0
    %1754 = vmatprep.subr.mxu0 0.0
    %1755 = vmatpush2.msra.mxu0 0.0
    %1756 = vmatprep.subr.mxu0 0.0
    %1757 = vmatpush2.msra.mxu0 0.0
    %1758 = vmatprep.subr.mxu0 0.0
    %1759 = vmatpush2.msra.mxu0 0.0
    %1760 = vmatprep.subr.mxu0 0.0
    %1761 = vmatpush2.msra.mxu0 0.0
    %1762 = vmatprep.subr.mxu0 0.0
    %1763 = vmatpush2.msra.mxu0 0.0
    %1764 = vmatprep.subr.mxu0 0.0
    %1765 = vmatpush2.msra.mxu0 0.0
    %1766 = vmatprep.subr.mxu0 0.0
    %1767 = vmatpush2.msra.mxu0 0.0
    %1768 = vmatprep.subr.mxu0 0.0
    %1769 = vmatpush2.msra.mxu0 0.0
    %1770 = vmatprep.subr.mxu0 0.0
    %1771 = vmatpush2.msra.mxu0 0.0
    %1772 = vmatprep.subr.mxu0 0.0
    %1773 = vmatpush2.msra.mxu0 0.0
    %1774 = vmatprep.subr.mxu0 0.0
    %1775 = vmatpush2.msra.mxu0 0.0
    %1776 = vmatprep.subr.mxu0 0.0
    %1777 = vmatpush2.msra.mxu0 0.0
    %1778 = vmatprep.subr.mxu0 0.0
    %1779 = vmatpush2.msra.mxu0 0.0
    %1780 = vmatprep.mubr.f32.mxu0 0.0
    %1781 = vmatmul.mubr.f32.gmra.mxu0 %v1698
    %v1782 = vpop.f32.mrf.mxu0
    %v1783 = vadd.f32 0.0, %v1782
    %v1784 = vpop.f32.mrf.mxu0
    %1785 = vdwg.mxu0
    %v1786 = vadd.f32 %v1485, %v1783
    %v1788 = vrot.slane %v211, 2
    %1790 = vmatprep.subr.mxu0 0.0
    %1791 = vmatpush1.msra.mxu0 %v243
    %1792 = vmatprep.subr.mxu0 0.0
    %1793 = vmatpush1.msra.mxu0 %v242
    %1794 = vmatprep.subr.mxu0 0.0
    %1795 = vmatpush1.msra.mxu0 %v241
    %1796 = vmatprep.subr.mxu0 0.0
    %1797 = vmatpush1.msra.mxu0 %v240
    %1798 = vmatprep.subr.mxu0 0.0
    %1799 = vmatpush1.msra.mxu0 %v239
    %1800 = vmatprep.subr.mxu0 0.0
    %1801 = vmatpush1.msra.mxu0 %v238
    %1802 = vmatprep.subr.mxu0 0.0
    %1803 = vmatpush1.msra.mxu0 %v237
    %1804 = vmatprep.subr.mxu0 0.0
    %1805 = vmatpush1.msra.mxu0 %v236
    %1806 = vmatprep.subr.mxu0 0.0
    %1807 = vmatpush1.msra.mxu0 %v235
    %1808 = vmatprep.subr.mxu0 0.0
    %1809 = vmatpush1.msra.mxu0 %v234
    %1810 = vmatprep.subr.mxu0 0.0
    %1811 = vmatpush1.msra.mxu0 %v233
    %1812 = vmatprep.subr.mxu0 0.0
    %1813 = vmatpush1.msra.mxu0 %v232
    %1814 = vmatprep.subr.mxu0 0.0
    %1815 = vmatpush1.msra.mxu0 %v231
    %1816 = vmatprep.subr.mxu0 0.0
    %1817 = vmatpush1.msra.mxu0 %v230
    %1818 = vmatprep.subr.mxu0 0.0
    %1819 = vmatpush1.msra.mxu0 %v229
    %1820 = vmatprep.subr.mxu0 0.0
    %1821 = vmatpush1.msra.mxu0 %v228
    %1822 = vmatprep.subr.mxu0 0.0
    %1823 = vmatpush2.msra.mxu0 0.0
    %1824 = vmatprep.subr.mxu0 0.0
    %1825 = vmatpush2.msra.mxu0 0.0
    %1826 = vmatprep.subr.mxu0 0.0
    %1827 = vmatpush2.msra.mxu0 0.0
    %1828 = vmatprep.subr.mxu0 0.0
    %1829 = vmatpush2.msra.mxu0 0.0
    %1830 = vmatprep.subr.mxu0 0.0
    %1831 = vmatpush2.msra.mxu0 0.0
    %1832 = vmatprep.subr.mxu0 0.0
    %1833 = vmatpush2.msra.mxu0 0.0
    %1834 = vmatprep.subr.mxu0 0.0
    %1835 = vmatpush2.msra.mxu0 0.0
    %1836 = vmatprep.subr.mxu0 0.0
    %1837 = vmatpush2.msra.mxu0 0.0
    %1838 = vmatprep.subr.mxu0 0.0
    %1839 = vmatpush2.msra.mxu0 0.0
    %1840 = vmatprep.subr.mxu0 0.0
    %1841 = vmatpush2.msra.mxu0 0.0
    %1842 = vmatprep.subr.mxu0 0.0
    %1843 = vmatpush2.msra.mxu0 0.0
    %1844 = vmatprep.subr.mxu0 0.0
    %1845 = vmatpush2.msra.mxu0 0.0
    %1846 = vmatprep.subr.mxu0 0.0
    %1847 = vmatpush2.msra.mxu0 0.0
    %1848 = vmatprep.subr.mxu0 0.0
    %1849 = vmatpush2.msra.mxu0 0.0
    %1850 = vmatprep.subr.mxu0 0.0
    %1851 = vmatpush2.msra.mxu0 0.0
    %1852 = vmatprep.subr.mxu0 0.0
    %1853 = vmatpush2.msra.mxu0 0.0
    %1854 = vmatprep.mubr.f32.mxu0 0.0
    %1855 = vmatmul.mubr.f32.gmra.mxu0 %v1556
    %v1856 = vpop.f32.mrf.mxu0
    %v1857 = vadd.f32 %v1788, %v1856
    %v1858 = vpop.f32.mrf.mxu0
    %1859 = vdwg.mxu0
    %v1860 = vtanh.pop %v1857
    %1861 = vmatprep.subr.mxu0 0.0
    %1862 = vmatpush1.msra.mxu0 %v346
    %1863 = vmatprep.subr.mxu0 0.0
    %1864 = vmatpush1.msra.mxu0 %v345
    %1865 = vmatprep.subr.mxu0 0.0
    %1866 = vmatpush1.msra.mxu0 %v344
    %1867 = vmatprep.subr.mxu0 0.0
    %1868 = vmatpush1.msra.mxu0 %v343
    %1869 = vmatprep.subr.mxu0 0.0
    %1870 = vmatpush1.msra.mxu0 %v342
    %1871 = vmatprep.subr.mxu0 0.0
    %1872 = vmatpush1.msra.mxu0 %v341
    %1873 = vmatprep.subr.mxu0 0.0
    %1874 = vmatpush1.msra.mxu0 %v340
    %1875 = vmatprep.subr.mxu0 0.0
    %1876 = vmatpush1.msra.mxu0 %v339
    %1877 = vmatprep.subr.mxu0 0.0
    %1878 = vmatpush1.msra.mxu0 %v338
    %1879 = vmatprep.subr.mxu0 0.0
    %1880 = vmatpush1.msra.mxu0 %v337
    %1881 = vmatprep.subr.mxu0 0.0
    %1882 = vmatpush1.msra.mxu0 %v336
    %1883 = vmatprep.subr.mxu0 0.0
    %1884 = vmatpush1.msra.mxu0 %v335
    %1885 = vmatprep.subr.mxu0 0.0
    %1886 = vmatpush1.msra.mxu0 %v334
    %1887 = vmatprep.subr.mxu0 0.0
    %1888 = vmatpush1.msra.mxu0 %v333
    %1889 = vmatprep.subr.mxu0 0.0
    %1890 = vmatpush1.msra.mxu0 %v332
    %1891 = vmatprep.subr.mxu0 0.0
    %1892 = vmatpush1.msra.mxu0 %v331
    %1893 = vmatprep.subr.mxu0 0.0
    %1894 = vmatpush2.msra.mxu0 0.0
    %1895 = vmatprep.subr.mxu0 0.0
    %1896 = vmatpush2.msra.mxu0 0.0
    %1897 = vmatprep.subr.mxu0 0.0
    %1898 = vmatpush2.msra.mxu0 0.0
    %1899 = vmatprep.subr.mxu0 0.0
    %1900 = vmatpush2.msra.mxu0 0.0
    %1901 = vmatprep.subr.mxu0 0.0
    %1902 = vmatpush2.msra.mxu0 0.0
    %1903 = vmatprep.subr.mxu0 0.0
    %1904 = vmatpush2.msra.mxu0 0.0
    %1905 = vmatprep.subr.mxu0 0.0
    %1906 = vmatpush2.msra.mxu0 0.0
    %1907 = vmatprep.subr.mxu0 0.0
    %1908 = vmatpush2.msra.mxu0 0.0
    %1909 = vmatprep.subr.mxu0 0.0
    %1910 = vmatpush2.msra.mxu0 0.0
    %1911 = vmatprep.subr.mxu0 0.0
    %1912 = vmatpush2.msra.mxu0 0.0
    %1913 = vmatprep.subr.mxu0 0.0
    %1914 = vmatpush2.msra.mxu0 0.0
    %1915 = vmatprep.subr.mxu0 0.0
    %1916 = vmatpush2.msra.mxu0 0.0
    %1917 = vmatprep.subr.mxu0 0.0
    %1918 = vmatpush2.msra.mxu0 0.0
    %1919 = vmatprep.subr.mxu0 0.0
    %1920 = vmatpush2.msra.mxu0 0.0
    %1921 = vmatprep.subr.mxu0 0.0
    %1922 = vmatpush2.msra.mxu0 0.0
    %1923 = vmatprep.subr.mxu0 0.0
    %1924 = vmatpush2.msra.mxu0 0.0
    %1925 = vmatprep.mubr.f32.mxu0 0.0
    %1926 = vmatmul.mubr.f32.gmra.mxu0 %v1860
    %v1927 = vpop.f32.mrf.mxu0
    %v1928 = vadd.f32 0.0, %v1927
    %v1929 = vpop.f32.mrf.mxu0
    %1930 = vdwg.mxu0
    %1931 = vmatprep.subr.mxu0 0.0
    %1932 = vmatpush1.msra.mxu0 %v330
    %1933 = vmatprep.subr.mxu0 0.0
    %1934 = vmatpush1.msra.mxu0 %v329
    %1935 = vmatprep.subr.mxu0 0.0
    %1936 = vmatpush1.msra.mxu0 %v328
    %1937 = vmatprep.subr.mxu0 0.0
    %1938 = vmatpush1.msra.mxu0 %v327
    %1939 = vmatprep.subr.mxu0 0.0
    %1940 = vmatpush1.msra.mxu0 %v326
    %1941 = vmatprep.subr.mxu0 0.0
    %1942 = vmatpush1.msra.mxu0 %v325
    %1943 = vmatprep.subr.mxu0 0.0
    %1944 = vmatpush1.msra.mxu0 %v324
    %1945 = vmatprep.subr.mxu0 0.0
    %1946 = vmatpush1.msra.mxu0 %v323
    %1947 = vmatprep.subr.mxu0 0.0
    %1948 = vmatpush1.msra.mxu0 %v322
    %1949 = vmatprep.subr.mxu0 0.0
    %1950 = vmatpush1.msra.mxu0 %v321
    %1951 = vmatprep.subr.mxu0 0.0
    %1952 = vmatpush1.msra.mxu0 %v320
    %1953 = vmatprep.subr.mxu0 0.0
    %1954 = vmatpush1.msra.mxu0 %v319
    %1955 = vmatprep.subr.mxu0 0.0
    %1956 = vmatpush1.msra.mxu0 %v318
    %1957 = vmatprep.subr.mxu0 0.0
    %1958 = vmatpush1.msra.mxu0 %v317
    %1959 = vmatprep.subr.mxu0 0.0
    %1960 = vmatpush1.msra.mxu0 %v316
    %1961 = vmatprep.subr.mxu0 0.0
    %1962 = vmatpush1.msra.mxu0 %v315
    %1963 = vmatprep.subr.mxu0 0.0
    %1964 = vmatpush2.msra.mxu0 0.0
    %1965 = vmatprep.subr.mxu0 0.0
    %1966 = vmatpush2.msra.mxu0 0.0
    %1967 = vmatprep.subr.mxu0 0.0
    %1968 = vmatpush2.msra.mxu0 0.0
    %1969 = vmatprep.subr.mxu0 0.0
    %1970 = vmatpush2.msra.mxu0 0.0
    %1971 = vmatprep.subr.mxu0 0.0
    %1972 = vmatpush2.msra.mxu0 0.0
    %1973 = vmatprep.subr.mxu0 0.0
    %1974 = vmatpush2.msra.mxu0 0.0
    %1975 = vmatprep.subr.mxu0 0.0
    %1976 = vmatpush2.msra.mxu0 0.0
    %1977 = vmatprep.subr.mxu0 0.0
    %1978 = vmatpush2.msra.mxu0 0.0
    %1979 = vmatprep.subr.mxu0 0.0
    %1980 = vmatpush2.msra.mxu0 0.0
    %1981 = vmatprep.subr.mxu0 0.0
    %1982 = vmatpush2.msra.mxu0 0.0
    %1983 = vmatprep.subr.mxu0 0.0
    %1984 = vmatpush2.msra.mxu0 0.0
    %1985 = vmatprep.subr.mxu0 0.0
    %1986 = vmatpush2.msra.mxu0 0.0
    %1987 = vmatprep.subr.mxu0 0.0
    %1988 = vmatpush2.msra.mxu0 0.0
    %1989 = vmatprep.subr.mxu0 0.0
    %1990 = vmatpush2.msra.mxu0 0.0
    %1991 = vmatprep.subr.mxu0 0.0
    %1992 = vmatpush2.msra.mxu0 0.0
    %1993 = vmatprep.subr.mxu0 0.0
    %1994 = vmatpush2.msra.mxu0 0.0
    %1995 = vmatprep.mubr.f32.mxu0 0.0
    %1996 = vmatmul.mubr.f32.gmra.mxu0 %v1698
    %v1997 = vpop.f32.mrf.mxu0
    %v1998 = vadd.f32 %v1928, %v1997
    %v1999 = vpop.f32.mrf.mxu0
    %2000 = vdwg.mxu0
    %v2001 = vadd.f32 %v1998, %v219
    %v2002 = vtanh.pop %v2001
    %s2003 = scalar_lea.vmem [#allocation11], 640
    %v2004 = vld [vmem:[%s2003] sm:$0xff]
    %v2005 = vld [vmem:[%s2003 + $0x8] sm:$0xff]
    %v2006 = vld [vmem:[%s2003 + $0x10] sm:$0xff]
    %v2007 = vld [vmem:[%s2003 + $0x18] sm:$0xff]
    %v2008 = vld [vmem:[%s2003 + $0x20] sm:$0xff]
    %v2009 = vld [vmem:[%s2003 + $0x28] sm:$0xff]
    %v2010 = vld [vmem:[%s2003 + $0x30] sm:$0xff]
    %v2011 = vld [vmem:[%s2003 + $0x38] sm:$0xff]
    %v2012 = vld [vmem:[%s2003 + $0x40] sm:$0xff]
    %v2013 = vld [vmem:[%s2003 + $0x48] sm:$0xff]
    %v2014 = vld [vmem:[%s2003 + $0x50] sm:$0xff]
    %v2015 = vld [vmem:[%s2003 + $0x58] sm:$0xff]
    %v2016 = vld [vmem:[%s2003 + $0x60] sm:$0xff]
    %v2017 = vld [vmem:[%s2003 + $0x68] sm:$0xff]
    %v2018 = vld [vmem:[%s2003 + $0x70] sm:$0xff]
    %v2019 = vld [vmem:[%s2003 + $0x78] sm:$0xff]
    %2020 = vmatprep.subr.mxu0 0.0
    %2021 = vmatpush1.msra.mxu0 %v2019
    %2022 = vmatprep.subr.mxu0 0.0
    %2023 = vmatpush1.msra.mxu0 %v2018
    %2024 = vmatprep.subr.mxu0 0.0
    %2025 = vmatpush1.msra.mxu0 %v2017
    %2026 = vmatprep.subr.mxu0 0.0
    %2027 = vmatpush1.msra.mxu0 %v2016
    %2028 = vmatprep.subr.mxu0 0.0
    %2029 = vmatpush1.msra.mxu0 %v2015
    %2030 = vmatprep.subr.mxu0 0.0
    %2031 = vmatpush1.msra.mxu0 %v2014
    %2032 = vmatprep.subr.mxu0 0.0
    %2033 = vmatpush1.msra.mxu0 %v2013
    %2034 = vmatprep.subr.mxu0 0.0
    %2035 = vmatpush1.msra.mxu0 %v2012
    %2036 = vmatprep.subr.mxu0 0.0
    %2037 = vmatpush1.msra.mxu0 %v2011
    %2038 = vmatprep.subr.mxu0 0.0
    %2039 = vmatpush1.msra.mxu0 %v2010
    %2040 = vmatprep.subr.mxu0 0.0
    %2041 = vmatpush1.msra.mxu0 %v2009
    %2042 = vmatprep.subr.mxu0 0.0
    %2043 = vmatpush1.msra.mxu0 %v2008
    %2044 = vmatprep.subr.mxu0 0.0
    %2045 = vmatpush1.msra.mxu0 %v2007
    %2046 = vmatprep.subr.mxu0 0.0
    %2047 = vmatpush1.msra.mxu0 %v2006
    %2048 = vmatprep.subr.mxu0 0.0
    %2049 = vmatpush1.msra.mxu0 %v2005
    %2050 = vmatprep.subr.mxu0 0.0
    %2051 = vmatpush1.msra.mxu0 %v2004
    %2052 = vmatprep.subr.mxu0 0.0
    %2053 = vmatpush2.msra.mxu0 0.0
    %2054 = vmatprep.subr.mxu0 0.0
    %2055 = vmatpush2.msra.mxu0 0.0
    %2056 = vmatprep.subr.mxu0 0.0
    %2057 = vmatpush2.msra.mxu0 0.0
    %2058 = vmatprep.subr.mxu0 0.0
    %2059 = vmatpush2.msra.mxu0 0.0
    %2060 = vmatprep.subr.mxu0 0.0
    %2061 = vmatpush2.msra.mxu0 0.0
    %2062 = vmatprep.subr.mxu0 0.0
    %2063 = vmatpush2.msra.mxu0 0.0
    %2064 = vmatprep.subr.mxu0 0.0
    %2065 = vmatpush2.msra.mxu0 0.0
    %2066 = vmatprep.subr.mxu0 0.0
    %2067 = vmatpush2.msra.mxu0 0.0
    %2068 = vmatprep.subr.mxu0 0.0
    %2069 = vmatpush2.msra.mxu0 0.0
    %2070 = vmatprep.subr.mxu0 0.0
    %2071 = vmatpush2.msra.mxu0 0.0
    %2072 = vmatprep.subr.mxu0 0.0
    %2073 = vmatpush2.msra.mxu0 0.0
    %2074 = vmatprep.subr.mxu0 0.0
    %2075 = vmatpush2.msra.mxu0 0.0
    %2076 = vmatprep.subr.mxu0 0.0
    %2077 = vmatpush2.msra.mxu0 0.0
    %2078 = vmatprep.subr.mxu0 0.0
    %2079 = vmatpush2.msra.mxu0 0.0
    %2080 = vmatprep.subr.mxu0 0.0
    %2081 = vmatpush2.msra.mxu0 0.0
    %2082 = vmatprep.subr.mxu0 0.0
    %2083 = vmatpush2.msra.mxu0 0.0
    %2084 = vmatprep.mubr.f32.mxu0 0.0
    %2085 = vmatmul.mubr.f32.gmra.mxu0 %v2002
    %v2086 = vpop.f32.mrf.mxu0
    %v2087 = vadd.f32 0.0, %v2086
    %v2088 = vpop.f32.mrf.mxu0
    %2089 = vdwg.mxu0
    %v2090 = vadd.f32 %v1786, %v2087
    %v2091 = vrot.slane %v211, 4
    %2093 = vmatprep.subr.mxu0 0.0
    %2094 = vmatpush1.msra.mxu0 %v243
    %2095 = vmatprep.subr.mxu0 0.0
    %2096 = vmatpush1.msra.mxu0 %v242
    %2097 = vmatprep.subr.mxu0 0.0
    %2098 = vmatpush1.msra.mxu0 %v241
    %2099 = vmatprep.subr.mxu0 0.0
    %2100 = vmatpush1.msra.mxu0 %v240
    %2101 = vmatprep.subr.mxu0 0.0
    %2102 = vmatpush1.msra.mxu0 %v239
    %2103 = vmatprep.subr.mxu0 0.0
    %2104 = vmatpush1.msra.mxu0 %v238
    %2105 = vmatprep.subr.mxu0 0.0
    %2106 = vmatpush1.msra.mxu0 %v237
    %2107 = vmatprep.subr.mxu0 0.0
    %2108 = vmatpush1.msra.mxu0 %v236
    %2109 = vmatprep.subr.mxu0 0.0
    %2110 = vmatpush1.msra.mxu0 %v235
    %2111 = vmatprep.subr.mxu0 0.0
    %2112 = vmatpush1.msra.mxu0 %v234
    %2113 = vmatprep.subr.mxu0 0.0
    %2114 = vmatpush1.msra.mxu0 %v233
    %2115 = vmatprep.subr.mxu0 0.0
    %2116 = vmatpush1.msra.mxu0 %v232
    %2117 = vmatprep.subr.mxu0 0.0
    %2118 = vmatpush1.msra.mxu0 %v231
    %2119 = vmatprep.subr.mxu0 0.0
    %2120 = vmatpush1.msra.mxu0 %v230
    %2121 = vmatprep.subr.mxu0 0.0
    %2122 = vmatpush1.msra.mxu0 %v229
    %2123 = vmatprep.subr.mxu0 0.0
    %2124 = vmatpush1.msra.mxu0 %v228
    %2125 = vmatprep.subr.mxu0 0.0
    %2126 = vmatpush2.msra.mxu0 0.0
    %2127 = vmatprep.subr.mxu0 0.0
    %2128 = vmatpush2.msra.mxu0 0.0
    %2129 = vmatprep.subr.mxu0 0.0
    %2130 = vmatpush2.msra.mxu0 0.0
    %2131 = vmatprep.subr.mxu0 0.0
    %2132 = vmatpush2.msra.mxu0 0.0
    %2133 = vmatprep.subr.mxu0 0.0
    %2134 = vmatpush2.msra.mxu0 0.0
    %2135 = vmatprep.subr.mxu0 0.0
    %2136 = vmatpush2.msra.mxu0 0.0
    %2137 = vmatprep.subr.mxu0 0.0
    %2138 = vmatpush2.msra.mxu0 0.0
    %2139 = vmatprep.subr.mxu0 0.0
    %2140 = vmatpush2.msra.mxu0 0.0
    %2141 = vmatprep.subr.mxu0 0.0
    %2142 = vmatpush2.msra.mxu0 0.0
    %2143 = vmatprep.subr.mxu0 0.0
    %2144 = vmatpush2.msra.mxu0 0.0
    %2145 = vmatprep.subr.mxu0 0.0
    %2146 = vmatpush2.msra.mxu0 0.0
    %2147 = vmatprep.subr.mxu0 0.0
    %2148 = vmatpush2.msra.mxu0 0.0
    %2149 = vmatprep.subr.mxu0 0.0
    %2150 = vmatpush2.msra.mxu0 0.0
    %2151 = vmatprep.subr.mxu0 0.0
    %2152 = vmatpush2.msra.mxu0 0.0
    %2153 = vmatprep.subr.mxu0 0.0
    %2154 = vmatpush2.msra.mxu0 0.0
    %2155 = vmatprep.subr.mxu0 0.0
    %2156 = vmatpush2.msra.mxu0 0.0
    %2157 = vmatprep.mubr.f32.mxu0 0.0
    %2158 = vmatmul.mubr.f32.gmra.mxu0 %v1860
    %v2159 = vpop.f32.mrf.mxu0
    %v2160 = vadd.f32 %v2091, %v2159
    %v2161 = vpop.f32.mrf.mxu0
    %2162 = vdwg.mxu0
    %v2163 = vtanh.pop %v2160
    %2164 = vmatprep.subr.mxu0 0.0
    %2165 = vmatpush1.msra.mxu0 %v346
    %2166 = vmatprep.subr.mxu0 0.0
    %2167 = vmatpush1.msra.mxu0 %v345
    %2168 = vmatprep.subr.mxu0 0.0
    %2169 = vmatpush1.msra.mxu0 %v344
    %2170 = vmatprep.subr.mxu0 0.0
    %2171 = vmatpush1.msra.mxu0 %v343
    %2172 = vmatprep.subr.mxu0 0.0
    %2173 = vmatpush1.msra.mxu0 %v342
    %2174 = vmatprep.subr.mxu0 0.0
    %2175 = vmatpush1.msra.mxu0 %v341
    %2176 = vmatprep.subr.mxu0 0.0
    %2177 = vmatpush1.msra.mxu0 %v340
    %2178 = vmatprep.subr.mxu0 0.0
    %2179 = vmatpush1.msra.mxu0 %v339
    %2180 = vmatprep.subr.mxu0 0.0
    %2181 = vmatpush1.msra.mxu0 %v338
    %2182 = vmatprep.subr.mxu0 0.0
    %2183 = vmatpush1.msra.mxu0 %v337
    %2184 = vmatprep.subr.mxu0 0.0
    %2185 = vmatpush1.msra.mxu0 %v336
    %2186 = vmatprep.subr.mxu0 0.0
    %2187 = vmatpush1.msra.mxu0 %v335
    %2188 = vmatprep.subr.mxu0 0.0
    %2189 = vmatpush1.msra.mxu0 %v334
    %2190 = vmatprep.subr.mxu0 0.0
    %2191 = vmatpush1.msra.mxu0 %v333
    %2192 = vmatprep.subr.mxu0 0.0
    %2193 = vmatpush1.msra.mxu0 %v332
    %2194 = vmatprep.subr.mxu0 0.0
    %2195 = vmatpush1.msra.mxu0 %v331
    %2196 = vmatprep.subr.mxu0 0.0
    %2197 = vmatpush2.msra.mxu0 0.0
    %2198 = vmatprep.subr.mxu0 0.0
    %2199 = vmatpush2.msra.mxu0 0.0
    %2200 = vmatprep.subr.mxu0 0.0
    %2201 = vmatpush2.msra.mxu0 0.0
    %2202 = vmatprep.subr.mxu0 0.0
    %2203 = vmatpush2.msra.mxu0 0.0
    %2204 = vmatprep.subr.mxu0 0.0
    %2205 = vmatpush2.msra.mxu0 0.0
    %2206 = vmatprep.subr.mxu0 0.0
    %2207 = vmatpush2.msra.mxu0 0.0
    %2208 = vmatprep.subr.mxu0 0.0
    %2209 = vmatpush2.msra.mxu0 0.0
    %2210 = vmatprep.subr.mxu0 0.0
    %2211 = vmatpush2.msra.mxu0 0.0
    %2212 = vmatprep.subr.mxu0 0.0
    %2213 = vmatpush2.msra.mxu0 0.0
    %2214 = vmatprep.subr.mxu0 0.0
    %2215 = vmatpush2.msra.mxu0 0.0
    %2216 = vmatprep.subr.mxu0 0.0
    %2217 = vmatpush2.msra.mxu0 0.0
    %2218 = vmatprep.subr.mxu0 0.0
    %2219 = vmatpush2.msra.mxu0 0.0
    %2220 = vmatprep.subr.mxu0 0.0
    %2221 = vmatpush2.msra.mxu0 0.0
    %2222 = vmatprep.subr.mxu0 0.0
    %2223 = vmatpush2.msra.mxu0 0.0
    %2224 = vmatprep.subr.mxu0 0.0
    %2225 = vmatpush2.msra.mxu0 0.0
    %2226 = vmatprep.subr.mxu0 0.0
    %2227 = vmatpush2.msra.mxu0 0.0
    %2228 = vmatprep.mubr.f32.mxu0 0.0
    %2229 = vmatmul.mubr.f32.gmra.mxu0 %v2163
    %v2230 = vpop.f32.mrf.mxu0
    %v2231 = vadd.f32 0.0, %v2230
    %v2232 = vpop.f32.mrf.mxu0
    %2233 = vdwg.mxu0
    %2234 = vmatprep.subr.mxu0 0.0
    %2235 = vmatpush1.msra.mxu0 %v330
    %2236 = vmatprep.subr.mxu0 0.0
    %2237 = vmatpush1.msra.mxu0 %v329
    %2238 = vmatprep.subr.mxu0 0.0
    %2239 = vmatpush1.msra.mxu0 %v328
    %2240 = vmatprep.subr.mxu0 0.0
    %2241 = vmatpush1.msra.mxu0 %v327
    %2242 = vmatprep.subr.mxu0 0.0
    %2243 = vmatpush1.msra.mxu0 %v326
    %2244 = vmatprep.subr.mxu0 0.0
    %2245 = vmatpush1.msra.mxu0 %v325
    %2246 = vmatprep.subr.mxu0 0.0
    %2247 = vmatpush1.msra.mxu0 %v324
    %2248 = vmatprep.subr.mxu0 0.0
    %2249 = vmatpush1.msra.mxu0 %v323
    %2250 = vmatprep.subr.mxu0 0.0
    %2251 = vmatpush1.msra.mxu0 %v322
    %2252 = vmatprep.subr.mxu0 0.0
    %2253 = vmatpush1.msra.mxu0 %v321
    %2254 = vmatprep.subr.mxu0 0.0
    %2255 = vmatpush1.msra.mxu0 %v320
    %2256 = vmatprep.subr.mxu0 0.0
    %2257 = vmatpush1.msra.mxu0 %v319
    %2258 = vmatprep.subr.mxu0 0.0
    %2259 = vmatpush1.msra.mxu0 %v318
    %2260 = vmatprep.subr.mxu0 0.0
    %2261 = vmatpush1.msra.mxu0 %v317
    %2262 = vmatprep.subr.mxu0 0.0
    %2263 = vmatpush1.msra.mxu0 %v316
    %2264 = vmatprep.subr.mxu0 0.0
    %2265 = vmatpush1.msra.mxu0 %v315
    %2266 = vmatprep.subr.mxu0 0.0
    %2267 = vmatpush2.msra.mxu0 0.0
    %2268 = vmatprep.subr.mxu0 0.0
    %2269 = vmatpush2.msra.mxu0 0.0
    %2270 = vmatprep.subr.mxu0 0.0
    %2271 = vmatpush2.msra.mxu0 0.0
    %2272 = vmatprep.subr.mxu0 0.0
    %2273 = vmatpush2.msra.mxu0 0.0
    %2274 = vmatprep.subr.mxu0 0.0
    %2275 = vmatpush2.msra.mxu0 0.0
    %2276 = vmatprep.subr.mxu0 0.0
    %2277 = vmatpush2.msra.mxu0 0.0
    %2278 = vmatprep.subr.mxu0 0.0
    %2279 = vmatpush2.msra.mxu0 0.0
    %2280 = vmatprep.subr.mxu0 0.0
    %2281 = vmatpush2.msra.mxu0 0.0
    %2282 = vmatprep.subr.mxu0 0.0
    %2283 = vmatpush2.msra.mxu0 0.0
    %2284 = vmatprep.subr.mxu0 0.0
    %2285 = vmatpush2.msra.mxu0 0.0
    %2286 = vmatprep.subr.mxu0 0.0
    %2287 = vmatpush2.msra.mxu0 0.0
    %2288 = vmatprep.subr.mxu0 0.0
    %2289 = vmatpush2.msra.mxu0 0.0
    %2290 = vmatprep.subr.mxu0 0.0
    %2291 = vmatpush2.msra.mxu0 0.0
    %2292 = vmatprep.subr.mxu0 0.0
    %2293 = vmatpush2.msra.mxu0 0.0
    %2294 = vmatprep.subr.mxu0 0.0
    %2295 = vmatpush2.msra.mxu0 0.0
    %2296 = vmatprep.subr.mxu0 0.0
    %2297 = vmatpush2.msra.mxu0 0.0
    %2298 = vmatprep.mubr.f32.mxu0 0.0
    %2299 = vmatmul.mubr.f32.gmra.mxu0 %v2002
    %v2300 = vpop.f32.mrf.mxu0
    %v2301 = vadd.f32 %v2231, %v2300
    %v2302 = vpop.f32.mrf.mxu0
    %2303 = vdwg.mxu0
    %v2304 = vadd.f32 %v2301, %v219
    %v2305 = vtanh.pop %v2304
    %s2306 = scalar_lea.vmem [#allocation11], 768
    %v2307 = vld [vmem:[%s2306] sm:$0xff]
    %v2308 = vld [vmem:[%s2306 + $0x8] sm:$0xff]
    %v2309 = vld [vmem:[%s2306 + $0x10] sm:$0xff]
    %v2310 = vld [vmem:[%s2306 + $0x18] sm:$0xff]
    %v2311 = vld [vmem:[%s2306 + $0x20] sm:$0xff]
    %v2312 = vld [vmem:[%s2306 + $0x28] sm:$0xff]
    %v2313 = vld [vmem:[%s2306 + $0x30] sm:$0xff]
    %v2314 = vld [vmem:[%s2306 + $0x38] sm:$0xff]
    %v2315 = vld [vmem:[%s2306 + $0x40] sm:$0xff]
    %v2316 = vld [vmem:[%s2306 + $0x48] sm:$0xff]
    %v2317 = vld [vmem:[%s2306 + $0x50] sm:$0xff]
    %v2318 = vld [vmem:[%s2306 + $0x58] sm:$0xff]
    %v2319 = vld [vmem:[%s2306 + $0x60] sm:$0xff]
    %v2320 = vld [vmem:[%s2306 + $0x68] sm:$0xff]
    %v2321 = vld [vmem:[%s2306 + $0x70] sm:$0xff]
    %v2322 = vld [vmem:[%s2306 + $0x78] sm:$0xff]
    %2323 = vmatprep.subr.mxu0 0.0
    %2324 = vmatpush1.msra.mxu0 %v2322
    %2325 = vmatprep.subr.mxu0 0.0
    %2326 = vmatpush1.msra.mxu0 %v2321
    %2327 = vmatprep.subr.mxu0 0.0
    %2328 = vmatpush1.msra.mxu0 %v2320
    %2329 = vmatprep.subr.mxu0 0.0
    %2330 = vmatpush1.msra.mxu0 %v2319
    %2331 = vmatprep.subr.mxu0 0.0
    %2332 = vmatpush1.msra.mxu0 %v2318
    %2333 = vmatprep.subr.mxu0 0.0
    %2334 = vmatpush1.msra.mxu0 %v2317
    %2335 = vmatprep.subr.mxu0 0.0
    %2336 = vmatpush1.msra.mxu0 %v2316
    %2337 = vmatprep.subr.mxu0 0.0
    %2338 = vmatpush1.msra.mxu0 %v2315
    %2339 = vmatprep.subr.mxu0 0.0
    %2340 = vmatpush1.msra.mxu0 %v2314
    %2341 = vmatprep.subr.mxu0 0.0
    %2342 = vmatpush1.msra.mxu0 %v2313
    %2343 = vmatprep.subr.mxu0 0.0
    %2344 = vmatpush1.msra.mxu0 %v2312
    %2345 = vmatprep.subr.mxu0 0.0
    %2346 = vmatpush1.msra.mxu0 %v2311
    %2347 = vmatprep.subr.mxu0 0.0
    %2348 = vmatpush1.msra.mxu0 %v2310
    %2349 = vmatprep.subr.mxu0 0.0
    %2350 = vmatpush1.msra.mxu0 %v2309
    %2351 = vmatprep.subr.mxu0 0.0
    %2352 = vmatpush1.msra.mxu0 %v2308
    %2353 = vmatprep.subr.mxu0 0.0
    %2354 = vmatpush1.msra.mxu0 %v2307
    %2355 = vmatprep.subr.mxu0 0.0
    %2356 = vmatpush2.msra.mxu0 0.0
    %2357 = vmatprep.subr.mxu0 0.0
    %2358 = vmatpush2.msra.mxu0 0.0
    %2359 = vmatprep.subr.mxu0 0.0
    %2360 = vmatpush2.msra.mxu0 0.0
    %2361 = vmatprep.subr.mxu0 0.0
    %2362 = vmatpush2.msra.mxu0 0.0
    %2363 = vmatprep.subr.mxu0 0.0
    %2364 = vmatpush2.msra.mxu0 0.0
    %2365 = vmatprep.subr.mxu0 0.0
    %2366 = vmatpush2.msra.mxu0 0.0
    %2367 = vmatprep.subr.mxu0 0.0
    %2368 = vmatpush2.msra.mxu0 0.0
    %2369 = vmatprep.subr.mxu0 0.0
    %2370 = vmatpush2.msra.mxu0 0.0
    %2371 = vmatprep.subr.mxu0 0.0
    %2372 = vmatpush2.msra.mxu0 0.0
    %2373 = vmatprep.subr.mxu0 0.0
    %2374 = vmatpush2.msra.mxu0 0.0
    %2375 = vmatprep.subr.mxu0 0.0
    %2376 = vmatpush2.msra.mxu0 0.0
    %2377 = vmatprep.subr.mxu0 0.0
    %2378 = vmatpush2.msra.mxu0 0.0
    %2379 = vmatprep.subr.mxu0 0.0
    %2380 = vmatpush2.msra.mxu0 0.0
    %2381 = vmatprep.subr.mxu0 0.0
    %2382 = vmatpush2.msra.mxu0 0.0
    %2383 = vmatprep.subr.mxu0 0.0
    %2384 = vmatpush2.msra.mxu0 0.0
    %2385 = vmatprep.subr.mxu0 0.0
    %2386 = vmatpush2.msra.mxu0 0.0
    %2387 = vmatprep.mubr.f32.mxu0 0.0
    %2388 = vmatmul.mubr.f32.gmra.mxu0 %v2305
    %v2389 = vpop.f32.mrf.mxu0
    %v2390 = vadd.f32 0.0, %v2389
    %v2391 = vpop.f32.mrf.mxu0
    %2392 = vdwg.mxu0
    %v2393 = vadd.f32 %v2090, %v2390
    %v2394 = vrot.slane %v211, 6
    %2396 = vmatprep.subr.mxu0 0.0
    %2397 = vmatpush1.msra.mxu0 %v243
    %2398 = vmatprep.subr.mxu0 0.0
    %2399 = vmatpush1.msra.mxu0 %v242
    %2400 = vmatprep.subr.mxu0 0.0
    %2401 = vmatpush1.msra.mxu0 %v241
    %2402 = vmatprep.subr.mxu0 0.0
    %2403 = vmatpush1.msra.mxu0 %v240
    %2404 = vmatprep.subr.mxu0 0.0
    %2405 = vmatpush1.msra.mxu0 %v239
    %2406 = vmatprep.subr.mxu0 0.0
    %2407 = vmatpush1.msra.mxu0 %v238
    %2408 = vmatprep.subr.mxu0 0.0
    %2409 = vmatpush1.msra.mxu0 %v237
    %2410 = vmatprep.subr.mxu0 0.0
    %2411 = vmatpush1.msra.mxu0 %v236
    %2412 = vmatprep.subr.mxu0 0.0
    %2413 = vmatpush1.msra.mxu0 %v235
    %2414 = vmatprep.subr.mxu0 0.0
    %2415 = vmatpush1.msra.mxu0 %v234
    %2416 = vmatprep.subr.mxu0 0.0
    %2417 = vmatpush1.msra.mxu0 %v233
    %2418 = vmatprep.subr.mxu0 0.0
    %2419 = vmatpush1.msra.mxu0 %v232
    %2420 = vmatprep.subr.mxu0 0.0
    %2421 = vmatpush1.msra.mxu0 %v231
    %2422 = vmatprep.subr.mxu0 0.0
    %2423 = vmatpush1.msra.mxu0 %v230
    %2424 = vmatprep.subr.mxu0 0.0
    %2425 = vmatpush1.msra.mxu0 %v229
    %2426 = vmatprep.subr.mxu0 0.0
    %2427 = vmatpush1.msra.mxu0 %v228
    %2428 = vmatprep.subr.mxu0 0.0
    %2429 = vmatpush2.msra.mxu0 0.0
    %2430 = vmatprep.subr.mxu0 0.0
    %2431 = vmatpush2.msra.mxu0 0.0
    %2432 = vmatprep.subr.mxu0 0.0
    %2433 = vmatpush2.msra.mxu0 0.0
    %2434 = vmatprep.subr.mxu0 0.0
    %2435 = vmatpush2.msra.mxu0 0.0
    %2436 = vmatprep.subr.mxu0 0.0
    %2437 = vmatpush2.msra.mxu0 0.0
    %2438 = vmatprep.subr.mxu0 0.0
    %2439 = vmatpush2.msra.mxu0 0.0
    %2440 = vmatprep.subr.mxu0 0.0
    %2441 = vmatpush2.msra.mxu0 0.0
    %2442 = vmatprep.subr.mxu0 0.0
    %2443 = vmatpush2.msra.mxu0 0.0
    %2444 = vmatprep.subr.mxu0 0.0
    %2445 = vmatpush2.msra.mxu0 0.0
    %2446 = vmatprep.subr.mxu0 0.0
    %2447 = vmatpush2.msra.mxu0 0.0
    %2448 = vmatprep.subr.mxu0 0.0
    %2449 = vmatpush2.msra.mxu0 0.0
    %2450 = vmatprep.subr.mxu0 0.0
    %2451 = vmatpush2.msra.mxu0 0.0
    %2452 = vmatprep.subr.mxu0 0.0
    %2453 = vmatpush2.msra.mxu0 0.0
    %2454 = vmatprep.subr.mxu0 0.0
    %2455 = vmatpush2.msra.mxu0 0.0
    %2456 = vmatprep.subr.mxu0 0.0
    %2457 = vmatpush2.msra.mxu0 0.0
    %2458 = vmatprep.subr.mxu0 0.0
    %2459 = vmatpush2.msra.mxu0 0.0
    %2460 = vmatprep.mubr.f32.mxu0 0.0
    %2461 = vmatmul.mubr.f32.gmra.mxu0 %v2163
    %v2462 = vpop.f32.mrf.mxu0
    %v2463 = vadd.f32 %v2394, %v2462
    %v2464 = vpop.f32.mrf.mxu0
    %2465 = vdwg.mxu0
    %v2466 = vtanh.pop %v2463
    %2467 = vmatprep.subr.mxu0 0.0
    %2468 = vmatpush1.msra.mxu0 %v346
    %2469 = vmatprep.subr.mxu0 0.0
    %2470 = vmatpush1.msra.mxu0 %v345
    %2471 = vmatprep.subr.mxu0 0.0
    %2472 = vmatpush1.msra.mxu0 %v344
    %2473 = vmatprep.subr.mxu0 0.0
    %2474 = vmatpush1.msra.mxu0 %v343
    %2475 = vmatprep.subr.mxu0 0.0
    %2476 = vmatpush1.msra.mxu0 %v342
    %2477 = vmatprep.subr.mxu0 0.0
    %2478 = vmatpush1.msra.mxu0 %v341
    %2479 = vmatprep.subr.mxu0 0.0
    %2480 = vmatpush1.msra.mxu0 %v340
    %2481 = vmatprep.subr.mxu0 0.0
    %2482 = vmatpush1.msra.mxu0 %v339
    %2483 = vmatprep.subr.mxu0 0.0
    %2484 = vmatpush1.msra.mxu0 %v338
    %2485 = vmatprep.subr.mxu0 0.0
    %2486 = vmatpush1.msra.mxu0 %v337
    %2487 = vmatprep.subr.mxu0 0.0
    %2488 = vmatpush1.msra.mxu0 %v336
    %2489 = vmatprep.subr.mxu0 0.0
    %2490 = vmatpush1.msra.mxu0 %v335
    %2491 = vmatprep.subr.mxu0 0.0
    %2492 = vmatpush1.msra.mxu0 %v334
    %2493 = vmatprep.subr.mxu0 0.0
    %2494 = vmatpush1.msra.mxu0 %v333
    %2495 = vmatprep.subr.mxu0 0.0
    %2496 = vmatpush1.msra.mxu0 %v332
    %2497 = vmatprep.subr.mxu0 0.0
    %2498 = vmatpush1.msra.mxu0 %v331
    %2499 = vmatprep.subr.mxu0 0.0
    %2500 = vmatpush2.msra.mxu0 0.0
    %2501 = vmatprep.subr.mxu0 0.0
    %2502 = vmatpush2.msra.mxu0 0.0
    %2503 = vmatprep.subr.mxu0 0.0
    %2504 = vmatpush2.msra.mxu0 0.0
    %2505 = vmatprep.subr.mxu0 0.0
    %2506 = vmatpush2.msra.mxu0 0.0
    %2507 = vmatprep.subr.mxu0 0.0
    %2508 = vmatpush2.msra.mxu0 0.0
    %2509 = vmatprep.subr.mxu0 0.0
    %2510 = vmatpush2.msra.mxu0 0.0
    %2511 = vmatprep.subr.mxu0 0.0
    %2512 = vmatpush2.msra.mxu0 0.0
    %2513 = vmatprep.subr.mxu0 0.0
    %2514 = vmatpush2.msra.mxu0 0.0
    %2515 = vmatprep.subr.mxu0 0.0
    %2516 = vmatpush2.msra.mxu0 0.0
    %2517 = vmatprep.subr.mxu0 0.0
    %2518 = vmatpush2.msra.mxu0 0.0
    %2519 = vmatprep.subr.mxu0 0.0
    %2520 = vmatpush2.msra.mxu0 0.0
    %2521 = vmatprep.subr.mxu0 0.0
    %2522 = vmatpush2.msra.mxu0 0.0
    %2523 = vmatprep.subr.mxu0 0.0
    %2524 = vmatpush2.msra.mxu0 0.0
    %2525 = vmatprep.subr.mxu0 0.0
    %2526 = vmatpush2.msra.mxu0 0.0
    %2527 = vmatprep.subr.mxu0 0.0
    %2528 = vmatpush2.msra.mxu0 0.0
    %2529 = vmatprep.subr.mxu0 0.0
    %2530 = vmatpush2.msra.mxu0 0.0
    %2531 = vmatprep.mubr.f32.mxu0 0.0
    %2532 = vmatmul.mubr.f32.gmra.mxu0 %v2466
    %v2533 = vpop.f32.mrf.mxu0
    %v2534 = vadd.f32 0.0, %v2533
    %v2535 = vpop.f32.mrf.mxu0
    %2536 = vdwg.mxu0
    %2537 = vmatprep.subr.mxu0 0.0
    %2538 = vmatpush1.msra.mxu0 %v330
    %2539 = vmatprep.subr.mxu0 0.0
    %2540 = vmatpush1.msra.mxu0 %v329
    %2541 = vmatprep.subr.mxu0 0.0
    %2542 = vmatpush1.msra.mxu0 %v328
    %2543 = vmatprep.subr.mxu0 0.0
    %2544 = vmatpush1.msra.mxu0 %v327
    %2545 = vmatprep.subr.mxu0 0.0
    %2546 = vmatpush1.msra.mxu0 %v326
    %2547 = vmatprep.subr.mxu0 0.0
    %2548 = vmatpush1.msra.mxu0 %v325
    %2549 = vmatprep.subr.mxu0 0.0
    %2550 = vmatpush1.msra.mxu0 %v324
    %2551 = vmatprep.subr.mxu0 0.0
    %2552 = vmatpush1.msra.mxu0 %v323
    %2553 = vmatprep.subr.mxu0 0.0
    %2554 = vmatpush1.msra.mxu0 %v322
    %2555 = vmatprep.subr.mxu0 0.0
    %2556 = vmatpush1.msra.mxu0 %v321
    %2557 = vmatprep.subr.mxu0 0.0
    %2558 = vmatpush1.msra.mxu0 %v320
    %2559 = vmatprep.subr.mxu0 0.0
    %2560 = vmatpush1.msra.mxu0 %v319
    %2561 = vmatprep.subr.mxu0 0.0
    %2562 = vmatpush1.msra.mxu0 %v318
    %2563 = vmatprep.subr.mxu0 0.0
    %2564 = vmatpush1.msra.mxu0 %v317
    %2565 = vmatprep.subr.mxu0 0.0
    %2566 = vmatpush1.msra.mxu0 %v316
    %2567 = vmatprep.subr.mxu0 0.0
    %2568 = vmatpush1.msra.mxu0 %v315
    %2569 = vmatprep.subr.mxu0 0.0
    %2570 = vmatpush2.msra.mxu0 0.0
    %2571 = vmatprep.subr.mxu0 0.0
    %2572 = vmatpush2.msra.mxu0 0.0
    %2573 = vmatprep.subr.mxu0 0.0
    %2574 = vmatpush2.msra.mxu0 0.0
    %2575 = vmatprep.subr.mxu0 0.0
    %2576 = vmatpush2.msra.mxu0 0.0
    %2577 = vmatprep.subr.mxu0 0.0
    %2578 = vmatpush2.msra.mxu0 0.0
    %2579 = vmatprep.subr.mxu0 0.0
    %2580 = vmatpush2.msra.mxu0 0.0
    %2581 = vmatprep.subr.mxu0 0.0
    %2582 = vmatpush2.msra.mxu0 0.0
    %2583 = vmatprep.subr.mxu0 0.0
    %2584 = vmatpush2.msra.mxu0 0.0
    %2585 = vmatprep.subr.mxu0 0.0
    %2586 = vmatpush2.msra.mxu0 0.0
    %2587 = vmatprep.subr.mxu0 0.0
    %2588 = vmatpush2.msra.mxu0 0.0
    %2589 = vmatprep.subr.mxu0 0.0
    %2590 = vmatpush2.msra.mxu0 0.0
    %2591 = vmatprep.subr.mxu0 0.0
    %2592 = vmatpush2.msra.mxu0 0.0
    %2593 = vmatprep.subr.mxu0 0.0
    %2594 = vmatpush2.msra.mxu0 0.0
    %2595 = vmatprep.subr.mxu0 0.0
    %2596 = vmatpush2.msra.mxu0 0.0
    %2597 = vmatprep.subr.mxu0 0.0
    %2598 = vmatpush2.msra.mxu0 0.0
    %2599 = vmatprep.subr.mxu0 0.0
    %2600 = vmatpush2.msra.mxu0 0.0
    %2601 = vmatprep.mubr.f32.mxu0 0.0
    %2602 = vmatmul.mubr.f32.gmra.mxu0 %v2305
    %v2603 = vpop.f32.mrf.mxu0
    %v2604 = vadd.f32 %v2534, %v2603
    %v2605 = vpop.f32.mrf.mxu0
    %2606 = vdwg.mxu0
    %v2607 = vadd.f32 %v2604, %v219
    %v2608 = vtanh.pop %v2607
    %s2609 = scalar_lea.vmem [#allocation11], 896
    %v2610 = vld [vmem:[%s2609] sm:$0xff]
    %v2611 = vld [vmem:[%s2609 + $0x8] sm:$0xff]
    %v2612 = vld [vmem:[%s2609 + $0x10] sm:$0xff]
    %v2613 = vld [vmem:[%s2609 + $0x18] sm:$0xff]
    %v2614 = vld [vmem:[%s2609 + $0x20] sm:$0xff]
    %v2615 = vld [vmem:[%s2609 + $0x28] sm:$0xff]
    %v2616 = vld [vmem:[%s2609 + $0x30] sm:$0xff]
    %v2617 = vld [vmem:[%s2609 + $0x38] sm:$0xff]
    %v2618 = vld [vmem:[%s2609 + $0x40] sm:$0xff]
    %v2619 = vld [vmem:[%s2609 + $0x48] sm:$0xff]
    %v2620 = vld [vmem:[%s2609 + $0x50] sm:$0xff]
    %v2621 = vld [vmem:[%s2609 + $0x58] sm:$0xff]
    %v2622 = vld [vmem:[%s2609 + $0x60] sm:$0xff]
    %v2623 = vld [vmem:[%s2609 + $0x68] sm:$0xff]
    %v2624 = vld [vmem:[%s2609 + $0x70] sm:$0xff]
    %v2625 = vld [vmem:[%s2609 + $0x78] sm:$0xff]
    %2626 = vmatprep.subr.mxu0 0.0
    %2627 = vmatpush1.msra.mxu0 %v2625
    %2628 = vmatprep.subr.mxu0 0.0
    %2629 = vmatpush1.msra.mxu0 %v2624
    %2630 = vmatprep.subr.mxu0 0.0
    %2631 = vmatpush1.msra.mxu0 %v2623
    %2632 = vmatprep.subr.mxu0 0.0
    %2633 = vmatpush1.msra.mxu0 %v2622
    %2634 = vmatprep.subr.mxu0 0.0
    %2635 = vmatpush1.msra.mxu0 %v2621
    %2636 = vmatprep.subr.mxu0 0.0
    %2637 = vmatpush1.msra.mxu0 %v2620
    %2638 = vmatprep.subr.mxu0 0.0
    %2639 = vmatpush1.msra.mxu0 %v2619
    %2640 = vmatprep.subr.mxu0 0.0
    %2641 = vmatpush1.msra.mxu0 %v2618
    %2642 = vmatprep.subr.mxu0 0.0
    %2643 = vmatpush1.msra.mxu0 %v2617
    %2644 = vmatprep.subr.mxu0 0.0
    %2645 = vmatpush1.msra.mxu0 %v2616
    %2646 = vmatprep.subr.mxu0 0.0
    %2647 = vmatpush1.msra.mxu0 %v2615
    %2648 = vmatprep.subr.mxu0 0.0
    %2649 = vmatpush1.msra.mxu0 %v2614
    %2650 = vmatprep.subr.mxu0 0.0
    %2651 = vmatpush1.msra.mxu0 %v2613
    %2652 = vmatprep.subr.mxu0 0.0
    %2653 = vmatpush1.msra.mxu0 %v2612
    %2654 = vmatprep.subr.mxu0 0.0
    %2655 = vmatpush1.msra.mxu0 %v2611
    %2656 = vmatprep.subr.mxu0 0.0
    %2657 = vmatpush1.msra.mxu0 %v2610
    %2658 = vmatprep.subr.mxu0 0.0
    %2659 = vmatpush2.msra.mxu0 0.0
    %2660 = vmatprep.subr.mxu0 0.0
    %2661 = vmatpush2.msra.mxu0 0.0
    %2662 = vmatprep.subr.mxu0 0.0
    %2663 = vmatpush2.msra.mxu0 0.0
    %2664 = vmatprep.subr.mxu0 0.0
    %2665 = vmatpush2.msra.mxu0 0.0
    %2666 = vmatprep.subr.mxu0 0.0
    %2667 = vmatpush2.msra.mxu0 0.0
    %2668 = vmatprep.subr.mxu0 0.0
    %2669 = vmatpush2.msra.mxu0 0.0
    %2670 = vmatprep.subr.mxu0 0.0
    %2671 = vmatpush2.msra.mxu0 0.0
    %2672 = vmatprep.subr.mxu0 0.0
    %2673 = vmatpush2.msra.mxu0 0.0
    %2674 = vmatprep.subr.mxu0 0.0
    %2675 = vmatpush2.msra.mxu0 0.0
    %2676 = vmatprep.subr.mxu0 0.0
    %2677 = vmatpush2.msra.mxu0 0.0
    %2678 = vmatprep.subr.mxu0 0.0
    %2679 = vmatpush2.msra.mxu0 0.0
    %2680 = vmatprep.subr.mxu0 0.0
    %2681 = vmatpush2.msra.mxu0 0.0
    %2682 = vmatprep.subr.mxu0 0.0
    %2683 = vmatpush2.msra.mxu0 0.0
    %2684 = vmatprep.subr.mxu0 0.0
    %2685 = vmatpush2.msra.mxu0 0.0
    %2686 = vmatprep.subr.mxu0 0.0
    %2687 = vmatpush2.msra.mxu0 0.0
    %2688 = vmatprep.subr.mxu0 0.0
    %2689 = vmatpush2.msra.mxu0 0.0
    %2690 = vmatprep.mubr.f32.mxu0 0.0
    %2691 = vmatmul.mubr.f32.gmra.mxu0 %v2608
    %v2692 = vpop.f32.mrf.mxu0
    %v2693 = vadd.f32 0.0, %v2692
    %v2694 = vpop.f32.mrf.mxu0
    %2695 = vdwg.mxu0
    %v2696 = vadd.f32 %v2393, %v2693
    %2697 = vst [vmem:[#allocation13] sm:$0x3] %v2696
    // Predicated region
    $region62: #{tpu_custom_call.1} parent=1 // pred_check
      _
    $region63: #{tpu_custom_call.1} parent=1 // pred_check_branch
      %2699 = sbr.rel (0) target = $region65
    $region64: #{tpu_custom_call.1} parent=1 // pred_region
      %s2701 = ssub.s32 32, 32
      %2702 = vsyncadd [#allocation4], %s2701
      %s2704 = sshll.u32 [#allocation13], 4
      %s2705 = int_to_ptr.vmem [resolvable:$true] %s2704
      %2707 = dma.vmem_to_hbm [thread:$0]  %s2705, 32, %s9, [#allocation4]
    $region65: #{tpu_custom_call.1} parent=1 // pred_fallthru
      _
    // Predicated region
    $region66: #{tpu_custom_call.1} parent=1 // pred_check
      _
    $region67: #{tpu_custom_call.1} parent=1 // pred_check_branch
      %2709 = sbr.rel (0) target = $region69
    $region68: #{tpu_custom_call.1} parent=1 // pred_region
      %2710 = dma.done [#allocation4], 32
    $region69: #{tpu_custom_call.1} parent=1 // pred_fallthru
      _
    %2711 = vsyncpa [#allocation3], 1
    %2712 = vsyncpa [#allocation6], 1
    %2713 = vsyncpa [#allocation9], 1
    %2714 = vsyncpa [#allocation12], 1
    %2715 = vsyncpa [#allocation4], 1

</llo_original>
